<compile_context>
chip_gen: v6e
topology: v6e:2x2x1
jax: 0.10.0
libtpu: 0.0.40
codegen_flags: <defaults>
</compile_context>

<pallas_src>
import functools
import math

import jax
import jax.numpy as jnp
from jax.experimental import pallas as pl
from jax.experimental.pallas import tpu as pltpu


def _round_up(x, m):
    return (x + m - 1) // m * m


# ----------------------------------------------------------------------------
# Fused Pallas kernel
# ----------------------------------------------------------------------------
def _ppmil_fused_kernel(
        # inputs ------------------------------------------------------------
        x_ref, c_ref,
        pw1_ref, pb1_ref, pwab_ref, pbab_ref, pwc_ref, pbc_ref,
        cw1_ref, cb1_ref, cwab_ref, cbab_ref, cwc_ref, cbc_ref,
        hw1a_ref, hw1b_ref, hb1_ref, hw2_ref, hb2_ref,
        # outputs -----------------------------------------------------------
        out_ref, fusion_ref,
        # scratch -----------------------------------------------------------
        m_sc, l_sc, acc_sc,
        *, n_valid, tile_n, cluster_scale):
    """Online-softmax gated-attention pooling over patch tiles + cluster branch
    + fc head, in one kernel.  MXU operands bf16, accumulation f32."""
    i = pl.program_id(0)

    @pl.when(i == 0)
    def _init():
        m_sc[...] = jnp.full_like(m_sc, -jnp.inf)
        l_sc[...] = jnp.zeros_like(l_sc)
        acc_sc[...] = jnp.zeros_like(acc_sc)

    # validity mask for the (possibly ragged) boundary tile
    row = i * tile_n + jax.lax.broadcasted_iota(jnp.int32, (tile_n, 1), 0)
    valid = row < n_valid

    # ---- patch branch: embed + fused gated-attention scores for this tile --
    x = x_ref[...].astype(jnp.bfloat16)                              # (T, F)
    h = jnp.maximum(
        jnp.dot(x, pw1_ref[...], preferred_element_type=jnp.float32)
        + pb1_ref[...], 0.0)                                         # (T, L) f32
    h = jnp.where(valid, h, 0.0)         # zero garbage rows of the ragged tile
    h_bf = h.astype(jnp.bfloat16)
    # one fused (T,L)@(L,2D) gating matmul, then split columns
    g = (jnp.dot(h_bf, pwab_ref[...], preferred_element_type=jnp.float32)
         + pbab_ref[...])                                            # (T, 2D)
    d = pwc_ref.shape[1]
    a = jnp.tanh(g[:, :d])
    b = jax.nn.sigmoid(g[:, d:])
    # (T,D)@(D,1) as a VPU multiply + lane reduction (MXU is the binding unit)
    s = jnp.sum((a * b) * pwc_ref[...], axis=-1, keepdims=True) + pbc_ref[...]
    s = jnp.where(valid, s, -1e30)

    # ---- online softmax accumulation over the instance axis ----------------
    m_prev = m_sc[...]                                               # (1,1)
    m_new = jnp.maximum(m_prev, jnp.max(s, axis=0, keepdims=True))
    alpha = jnp.exp(m_prev - m_new)                                  # (1,1)
    p = jnp.exp(s - m_new)                                           # (T,1)
    l_sc[...] = alpha * l_sc[...] + jnp.sum(p, axis=0, keepdims=True)
    acc_sc[...] = alpha * acc_sc[...] + jnp.sum(p * h, axis=0, keepdims=True)
    m_sc[...] = m_new

    # ---- last step: finalize patch pool, cluster branch, fc head -----------
    @pl.when(i == pl.num_programs(0) - 1)
    def _finalize():
        E = acc_sc.shape[1]
        # exact normalisation (runs once per call -> approx buys nothing)
        mil = acc_sc[...] / l_sc[...]                                # (1, L)

        # cluster branch (K is small -> single shot, VMEM resident)
        c = c_ref[...].astype(jnp.bfloat16)                          # (K, F)
        hc = jnp.maximum(
            jnp.dot(c, cw1_ref[...], preferred_element_type=jnp.float32)
            + cb1_ref[...], 0.0)                                     # (K, E)
        hc_bf = hc.astype(jnp.bfloat16)
        gc = (jnp.dot(hc_bf, cwab_ref[...], preferred_element_type=jnp.float32)
              + cbab_ref[...])                                       # (K, 2A)
        ad = cwc_ref.shape[1]
        av = jnp.tanh(gc[:, :ad])
        au = jax.nn.sigmoid(gc[:, ad:])
        sc = jnp.sum((av * au) * cwc_ref[...], axis=-1, keepdims=True) + cbc_ref[...]
        sc = sc - jnp.max(sc, axis=0, keepdims=True)
        ec = jnp.exp(sc)
        attn = ec * (cluster_scale / jnp.sum(ec, axis=0, keepdims=True))  # (K,1)
        m_feat = jnp.sum(attn * hc, axis=0, keepdims=True)           # (1, E)

        # fusion = [mil, M]  (written as two halves, no concat)
        fusion_ref[:, :E] = mil
        fusion_ref[:, E:] = m_feat

        # head: out = W2 ReLU(W1a mil + W1b M + b1) + b2
        hh = jnp.maximum(
            jnp.dot(mil.astype(jnp.bfloat16), hw1a_ref[...],
                    preferred_element_type=jnp.float32)
            + jnp.dot(m_feat.astype(jnp.bfloat16), hw1b_ref[...],
                      preferred_element_type=jnp.float32)
            + hb1_ref[...], 0.0)                                     # (1, E)
        out_ref[...] = (
            jnp.dot(hh.astype(jnp.bfloat16), hw2_ref[...],
                    preferred_element_type=jnp.float32) + hb2_ref[...])


# ----------------------------------------------------------------------------
# One-time parameter preparation (outside jit): bf16 casts, gate fusion, head
# W1 split, wc reshaped to a (1, D) lane row.  Called once, reused every call.
# ----------------------------------------------------------------------------
def prepare_params(params):
    pm, cl, hd = params["patch_mil"], params["cluster"], params["head"]
    bf16 = lambda a: a.astype(jnp.bfloat16)
    D = pm["wa"].shape[1]
    A = cl["wa"].shape[1]
    E = cl["w1"].shape[1]
    return {
        # patch-MIL branch
        "pw1": bf16(pm["w1"]), "pb1": pm["b1"],
        "pwab": bf16(jnp.concatenate([pm["wa"], pm["wb"]], axis=1)),
        "pbab": jnp.concatenate([pm["ba"], pm["bb"]], axis=1),
        "pwc": pm["wc"].reshape(1, D), "pbc": pm["bc"],
        # cluster branch
        "cw1": bf16(cl["w1"]), "cb1": cl["b1"],
        "cwab": bf16(jnp.concatenate([cl["wa"], cl["wb"]], axis=1)),
        "cbab": jnp.concatenate([cl["ba"], cl["bb"]], axis=1),
        "cwc": cl["wc"].reshape(1, A), "cbc": cl["bc"],
        # head (W1 split into mil / M halves -> no concat in kernel)
        "hw1a": bf16(hd["w1"][:E, :]), "hw1b": bf16(hd["w1"][E:, :]),
        "hb1": hd["b1"], "hw2": bf16(hd["w2"]), "hb2": hd["b2"],
    }


# ----------------------------------------------------------------------------
# Wrapper
# ----------------------------------------------------------------------------
@functools.partial(jax.jit, static_argnames=("tile_n",))
def ppmil_forward(selected_features, cluster_fusion_features, prepared,
                  *, tile_n=1024):
    """PPMIL.forward(selected_features, cluster_fusion_features, label=None)."""
    n, f = selected_features.shape
    k = cluster_fusion_features.shape[0]
    if n < 1:
        raise ValueError("PPMIL: empty bag (n_patches == 0) is not supported.")
    if k < 1:
        raise ValueError("PPMIL: need at least one cluster feature.")

    p = prepared
    L = p["pw1"].shape[1]
    E = p["cw1"].shape[1]
    n_out = p["hw2"].shape[1]
    assert L == E, "patch MIL feature dim must equal dim_embedding for fusion"

    weight_bytes = sum(a.size * a.dtype.itemsize for a in p.values())
    x_itemsize = selected_features.dtype.itemsize

    def _vmem_need(t):
        x_buf = 2 * t * f * x_itemsize          # double-buffered x tiles
        w_buf = 2 * weight_bytes                # resident weights (dbl-buffered)
        interm = t * 16 * 1024                  # h / gates / p*h intermediates
        return x_buf + w_buf + interm + (4 << 20)

    # tile sizing: multiple of 16 (bf16 sublane packing for h), shrunk until it
    # fits a v7x-safe 48 MiB budget; a bag smaller than one tile gets a single
    # full-extent block (allowed regardless of 8-divisibility).
    VMEM_CAP = 48 * 1024 * 1024
    t = max(16, _round_up(min(int(tile_n), n), 16))
    while t > 256 and _vmem_need(t) > VMEM_CAP:
        t = max(256, _round_up(t // 2, 16))
    if t >= n:
        t = n
    tile_n = t
    grid_n = pl.cdiv(n, tile_n)
    vmem_limit = int(max(32 * 1024 * 1024, min(_vmem_need(tile_n), VMEM_CAP)))

    # NOTE: x is fed as-is (f32) - no wrapper pad / cast passes over HBM; the
    # ragged last tile is masked in-kernel and bf16 cast happens in-register.
    args = (
        selected_features, cluster_fusion_features,
        p["pw1"], p["pb1"], p["pwab"], p["pbab"], p["pwc"], p["pbc"],
        p["cw1"], p["cb1"], p["cwab"], p["cbab"], p["cwc"], p["cbc"],
        p["hw1a"], p["hw1b"], p["hb1"], p["hw2"], p["hb2"],
    )

    in_specs = [pl.BlockSpec((tile_n, f), lambda i: (i, 0))]         # x tiles
    in_specs += [pl.BlockSpec(a.shape, lambda i: (0, 0)) for a in args[1:]]
    out_specs = (pl.BlockSpec((1, n_out), lambda i: (0, 0)),
                 pl.BlockSpec((1, 2 * E), lambda i: (0, 0)))

    kernel = functools.partial(
        _ppmil_fused_kernel,
        n_valid=n, tile_n=tile_n, cluster_scale=1.0 / math.sqrt(k))

    D = p["pwc"].shape[1]
    A = p["cwc"].shape[1]
    n_comp = grid_n * tile_n
    flops = (2 * n_comp * f * L + 2 * n_comp * L * (2 * D) + 2 * n_comp * D   # patch
             + 2 * k * f * E + 2 * k * E * (2 * A) + 2 * k * A                # cluster
             + 4 * E * E + 2 * E * n_out)                                     # head
    transcendentals = n_comp * (2 * D + 1) + k * (2 * A + 1)
    bytes_accessed = (n * f * x_itemsize + k * f * x_itemsize
                      + weight_bytes + 4 * (n_out + 2 * E))

    out, fusion = pl.pallas_call(
        kernel,
        out_shape=(jax.ShapeDtypeStruct((1, n_out), jnp.float32),
                   jax.ShapeDtypeStruct((1, 2 * E), jnp.float32)),
        grid_spec=pltpu.PrefetchScalarGridSpec(
            num_scalar_prefetch=0,
            grid=(grid_n,),
            in_specs=in_specs,
            out_specs=out_specs,
            scratch_shapes=[pltpu.VMEM((1, 1), jnp.float32),     # running max
                            pltpu.VMEM((1, 1), jnp.float32),     # running sum
                            pltpu.VMEM((1, L), jnp.float32)]),   # pooled acc
        compiler_params=pltpu.CompilerParams(
            dimension_semantics=("arbitrary",),
            vmem_limit_bytes=vmem_limit),
        cost_estimate=pl.CostEstimate(flops=int(flops),
                                      transcendentals=int(transcendentals),
                                      bytes_accessed=int(bytes_accessed)),
    )(*args)
    return out, fusion


# ----------------------------------------------------------------------------
# Deterministic parameter init (PyTorch nn.Linear default: U(-1/sqrt(fan_in), ..))
# ----------------------------------------------------------------------------
def _linear(key, fan_in, fan_out):
    kw, kb = jax.random.split(key)
    bound = 1.0 / math.sqrt(fan_in)
    w = jax.random.uniform(kw, (fan_in, fan_out), jnp.float32, -bound, bound)
    b = jax.random.uniform(kb, (1, fan_out), jnp.float32, -bound, bound)
    return w, b


def init_params(key, dim_feature, dim_embedding=512, dim_output=2):
    # NOTE (v5e): for best MXU utilisation keep dim_feature a multiple of 128
    # (true for the demo); pad weights once at init time if it is not.
    keys = jax.random.split(key, 12)
    L, D = 512, 256            # CLAM_SB "small" sizes
    A = 256                    # cluster attention hidden

    pm = {}
    pm["w1"], pm["b1"] = _linear(keys[0], dim_feature, L)
    pm["wa"], pm["ba"] = _linear(keys[1], L, D)
    pm["wb"], pm["bb"] = _linear(keys[2], L, D)
    pm["wc"], pm["bc"] = _linear(keys[3], D, 1)

    cl = {}
    cl["w1"], cl["b1"] = _linear(keys[4], dim_feature, dim_embedding)  # embed
    cl["wa"], cl["ba"] = _linear(keys[5], dim_embedding, A)            # attention_V
    cl["wb"], cl["bb"] = _linear(keys[6], dim_embedding, A)            # attention_U
    cl["wc"], cl["bc"] = _linear(keys[7], A, 1)                        # attention_weights

    hd = {}
    hd["w1"], hd["b1"] = _linear(keys[8], 2 * dim_embedding, dim_embedding)
    hd["w2"], hd["b2"] = _linear(keys[9], dim_embedding, dim_output)

    return {"patch_mil": pm, "cluster": cl, "head": hd}


# ----------------------------------------------------------------------------
# Pure-JAX f32 reference (for correctness check)
# ----------------------------------------------------------------------------
def _ref_pool(x, p, scale):
    h = jax.nn.relu(x @ p["w1"] + p["b1"])
    a = jnp.tanh(h @ p["wa"] + p["ba"])
    b = jax.nn.sigmoid(h @ p["wb"] + p["bb"])
    s = (a * b) @ p["wc"] + p["bc"]              # (N, 1)
    attn = jax.nn.softmax(s.T, axis=1) * scale   # (1, N)
    return attn @ h                              # (1, L)


def _ref_forward(x, c, params):
    k = c.shape[0]
    mil = _ref_pool(x, params["patch_mil"], 1.0)
    m = _ref_pool(c, params["cluster"], 1.0 / math.sqrt(k))
    fusion = jnp.concatenate([mil, m], axis=1)
    hd = params["head"]
    h = jax.nn.relu(fusion @ hd["w1"] + hd["b1"])
    out = h @ hd["w2"] + hd["b2"]
    return out, fusion


# ----------------------------------------------------------------------------
if __name__ == "__main__":
    dim_feature, dim_embedding, dim_output = 256, 512, 2
    # n_patches deliberately NOT a multiple of tile_n to exercise the masked
    # ragged-boundary-tile path; n_clusters not a multiple of 8 (full block).
    n_patches, n_clusters = 40, 12

    key = jax.random.PRNGKey(0)
    k_x, k_c, k_p = jax.random.split(key, 3)
    selected_features = jax.random.normal(k_x, (n_patches, dim_feature),
                                          jnp.float32)
    cluster_fusion_features = jax.random.normal(k_c, (n_clusters, dim_feature),
                                                jnp.float32)
    params = init_params(k_p, dim_feature, dim_embedding, dim_output)
    prepared = prepare_params(params)          # bf16 cast / fusion done ONCE

    ref_out, ref_fusion = _ref_forward(selected_features,
                                       cluster_fusion_features, params)

    # bf16 MXU operands (f32 accumulation) vs. a pure-f32 reference: observed
    # error is ~1e-3 at these shapes; 2e-2 tolerance leaves wide margin.
    for tn in (16, 1024):   # multi-tile ragged path and single-full-block path
        output, fusion_feature = ppmil_forward(
            selected_features, cluster_fusion_features, prepared, tile_n=tn)
        output = jax.block_until_ready(output)
        fusion_feature = jax.block_until_ready(fusion_feature)

        assert output.shape == (1, dim_output)
        assert fusion_feature.shape == (1, 2 * dim_embedding)
        assert jnp.allclose(output, ref_out, rtol=2e-2, atol=2e-2)
        assert jnp.allclose(fusion_feature, ref_fusion, rtol=2e-2, atol=2e-2)

    print("KERNEL_OK")
</pallas_src>

<mosaic_0001>
module attributes {stable_mosaic.version = 11 : i64} {
  func.func @_ppmil_fused_kernel(%arg0: i32, %arg1: memref<16x256xf32, #tpu.memory_space<vmem>>, %arg2: memref<12x256xf32, #tpu.memory_space<vmem>>, %arg3: memref<256x512xbf16, #tpu.memory_space<vmem>>, %arg4: memref<1x512xf32, #tpu.memory_space<vmem>>, %arg5: memref<512x512xbf16, #tpu.memory_space<vmem>>, %arg6: memref<1x512xf32, #tpu.memory_space<vmem>>, %arg7: memref<1x256xf32, #tpu.memory_space<vmem>>, %arg8: memref<1x1xf32, #tpu.memory_space<vmem>>, %arg9: memref<256x512xbf16, #tpu.memory_space<vmem>>, %arg10: memref<1x512xf32, #tpu.memory_space<vmem>>, %arg11: memref<512x512xbf16, #tpu.memory_space<vmem>>, %arg12: memref<1x512xf32, #tpu.memory_space<vmem>>, %arg13: memref<1x256xf32, #tpu.memory_space<vmem>>, %arg14: memref<1x1xf32, #tpu.memory_space<vmem>>, %arg15: memref<512x512xbf16, #tpu.memory_space<vmem>>, %arg16: memref<512x512xbf16, #tpu.memory_space<vmem>>, %arg17: memref<1x512xf32, #tpu.memory_space<vmem>>, %arg18: memref<512x2xbf16, #tpu.memory_space<vmem>>, %arg19: memref<1x2xf32, #tpu.memory_space<vmem>>, %arg20: memref<1x2xf32, #tpu.memory_space<vmem>>, %arg21: memref<1x1024xf32, #tpu.memory_space<vmem>>, %arg22: memref<1x1xf32, #tpu.memory_space<vmem>>, %arg23: memref<1x1xf32, #tpu.memory_space<vmem>>, %arg24: memref<1x512xf32, #tpu.memory_space<vmem>>) attributes {dimension_semantics = [#tpu.dimension_semantics<arbitrary>], iteration_bounds = array<i64: 3>, scalar_prefetch = 0 : i64, scratch_operands = 3 : i64, tpu.core_type = #tpu.core_type<tc>, window_params = [{transform_indices = @transform_0, window_bounds = array<i64: 16, 256>}, {pipeline_mode = #tpu.pipeline_mode<synchronous>, transform_indices = @transform_1, window_bounds = array<i64: 12, 256>}, {pipeline_mode = #tpu.pipeline_mode<synchronous>, transform_indices = @transform_2, window_bounds = array<i64: 256, 512>}, {pipeline_mode = #tpu.pipeline_mode<synchronous>, transform_indices = @transform_3, window_bounds = array<i64: 1, 512>}, {pipeline_mode = #tpu.pipeline_mode<synchronous>, transform_indices = @transform_4, window_bounds = array<i64: 512, 512>}, {pipeline_mode = #tpu.pipeline_mode<synchronous>, transform_indices = @transform_5, window_bounds = array<i64: 1, 512>}, {pipeline_mode = #tpu.pipeline_mode<synchronous>, transform_indices = @transform_6, window_bounds = array<i64: 1, 256>}, {pipeline_mode = #tpu.pipeline_mode<synchronous>, transform_indices = @transform_7, window_bounds = array<i64: 1, 1>}, {pipeline_mode = #tpu.pipeline_mode<synchronous>, transform_indices = @transform_8, window_bounds = array<i64: 256, 512>}, {pipeline_mode = #tpu.pipeline_mode<synchronous>, transform_indices = @transform_9, window_bounds = array<i64: 1, 512>}, {pipeline_mode = #tpu.pipeline_mode<synchronous>, transform_indices = @transform_10, window_bounds = array<i64: 512, 512>}, {pipeline_mode = #tpu.pipeline_mode<synchronous>, transform_indices = @transform_11, window_bounds = array<i64: 1, 512>}, {pipeline_mode = #tpu.pipeline_mode<synchronous>, transform_indices = @transform_12, window_bounds = array<i64: 1, 256>}, {pipeline_mode = #tpu.pipeline_mode<synchronous>, transform_indices = @transform_13, window_bounds = array<i64: 1, 1>}, {pipeline_mode = #tpu.pipeline_mode<synchronous>, transform_indices = @transform_14, window_bounds = array<i64: 512, 512>}, {pipeline_mode = #tpu.pipeline_mode<synchronous>, transform_indices = @transform_15, window_bounds = array<i64: 512, 512>}, {pipeline_mode = #tpu.pipeline_mode<synchronous>, transform_indices = @transform_16, window_bounds = array<i64: 1, 512>}, {pipeline_mode = #tpu.pipeline_mode<synchronous>, transform_indices = @transform_17, window_bounds = array<i64: 512, 2>}, {pipeline_mode = #tpu.pipeline_mode<synchronous>, transform_indices = @transform_18, window_bounds = array<i64: 1, 2>}, {pipeline_mode = #tpu.pipeline_mode<synchronous>, transform_indices = @transform_19, window_bounds = array<i64: 1, 2>}, {pipeline_mode = #tpu.pipeline_mode<synchronous>, transform_indices = @transform_20, window_bounds = array<i64: 1, 1024>}]} {
    %c0_i32 = arith.constant 0 : i32
    %0 = arith.cmpi eq, %arg0, %c0_i32 : i32
    %1 = arith.extui %0 : i1 to i32
    %c0_i32_0 = arith.constant 0 : i32
    %2 = arith.cmpi ne, %1, %c0_i32_0 : i32
    scf.if %2 {
      %cst_36 = arith.constant 0xFF800000 : f32
      %75 = vector.broadcast %cst_36 : f32 to vector<1x1xf32>
      %c0_37 = arith.constant 0 : index
      %c0_38 = arith.constant 0 : index
      %76 = vector.load %arg22[%c0_37, %c0_38] : memref<1x1xf32, #tpu.memory_space<vmem>>, vector<1x1xf32>
      tpu.vector_store %arg22[%c0_37, %c0_38], %75 {strides = array<i32>} : memref<1x1xf32, #tpu.memory_space<vmem>>, vector<1x1xf32>,
      %cst_39 = arith.constant 0.000000e+00 : f32
      %77 = vector.broadcast %cst_39 : f32 to vector<1x1xf32>
      %c0_40 = arith.constant 0 : index
      %c0_41 = arith.constant 0 : index
      %78 = vector.load %arg23[%c0_40, %c0_41] : memref<1x1xf32, #tpu.memory_space<vmem>>, vector<1x1xf32>
      tpu.vector_store %arg23[%c0_40, %c0_41], %77 {strides = array<i32>} : memref<1x1xf32, #tpu.memory_space<vmem>>, vector<1x1xf32>,
      %cst_42 = arith.constant 0.000000e+00 : f32
      %79 = vector.broadcast %cst_42 : f32 to vector<1x512xf32>
      %c0_43 = arith.constant 0 : index
      %c0_44 = arith.constant 0 : index
      %80 = vector.load %arg24[%c0_43, %c0_44] : memref<1x512xf32, #tpu.memory_space<vmem>>, vector<1x512xf32>
      tpu.vector_store %arg24[%c0_43, %c0_44], %79 {strides = array<i32>} : memref<1x512xf32, #tpu.memory_space<vmem>>, vector<1x512xf32>,
    } else {
    }
    %c16_i32 = arith.constant 16 : i32
    %3 = arith.muli %arg0, %c16_i32 : i32
    %4 = tpu.iota {dimensions = array<i32: 0>} : vector<16x1xi32>
    %5 = vector.broadcast %3 : i32 to vector<16x1xi32>
    %6 = arith.addi %5, %4 : vector<16x1xi32>
    %c40_i32 = arith.constant 40 : i32
    %7 = vector.broadcast %c40_i32 : i32 to vector<16x1xi32>
    %8 = arith.cmpi slt, %6, %7 : vector<16x1xi32>
    %c0 = arith.constant 0 : index
    %c0_1 = arith.constant 0 : index
    %9 = vector.load %arg1[%c0, %c0_1] : memref<16x256xf32, #tpu.memory_space<vmem>>, vector<16x256xf32>
    %10 = arith.truncf %9 : vector<16x256xf32> to vector<16x256xbf16>
    %c0_2 = arith.constant 0 : index
    %c0_3 = arith.constant 0 : index
    %11 = vector.load %arg3[%c0_2, %c0_3] : memref<256x512xbf16, #tpu.memory_space<vmem>>, vector<256x512xbf16>
    %cst = arith.constant dense<0.000000e+00> : vector<16x512xf32>
    %12 = tpu.matmul %10, %11, %cst {dimension_numbers = #tpu.dot_dimension_numbers<[1], [0], [0], [1], [0, 0, 1, 1], [], []>} : vector<16x256xbf16>, vector<256x512xbf16>, vector<16x512xf32> -> vector<16x512xf32>
    %c0_4 = arith.constant 0 : index
    %c0_5 = arith.constant 0 : index
    %13 = vector.load %arg4[%c0_4, %c0_5] : memref<1x512xf32, #tpu.memory_space<vmem>>, vector<1x512xf32>
    %14 = vector.broadcast %13 : vector<1x512xf32> to vector<16x512xf32>
    %15 = arith.addf %12, %14 : vector<16x512xf32>
    %cst_6 = arith.constant 0.000000e+00 : f32
    %16 = vector.broadcast %cst_6 : f32 to vector<16x512xf32>
    %17 = arith.maximumf %15, %16 : vector<16x512xf32>
    %cst_7 = arith.constant 0.000000e+00 : f32
    %18 = vector.shape_cast %8 : vector<16x1xi1> to vector<16x1xi1>
    %19 = vector.broadcast %18 : vector<16x1xi1> to vector<16x512xi1>
    %20 = vector.broadcast %cst_7 : f32 to vector<16x512xf32>
    %21 = arith.select %19, %17, %20 : vector<16x512xi1>, vector<16x512xf32>
    %22 = arith.truncf %21 : vector<16x512xf32> to vector<16x512xbf16>
    %c0_8 = arith.constant 0 : index
    %c0_9 = arith.constant 0 : index
    %23 = vector.load %arg5[%c0_8, %c0_9] : memref<512x512xbf16, #tpu.memory_space<vmem>>, vector<512x512xbf16>
    %cst_10 = arith.constant dense<0.000000e+00> : vector<16x512xf32>
    %24 = tpu.matmul %22, %23, %cst_10 {dimension_numbers = #tpu.dot_dimension_numbers<[1], [0], [0], [1], [0, 0, 1, 1], [], []>} : vector<16x512xbf16>, vector<512x512xbf16>, vector<16x512xf32> -> vector<16x512xf32>
    %c0_11 = arith.constant 0 : index
    %c0_12 = arith.constant 0 : index
    %25 = vector.load %arg6[%c0_11, %c0_12] : memref<1x512xf32, #tpu.memory_space<vmem>>, vector<1x512xf32>
    %26 = vector.broadcast %25 : vector<1x512xf32> to vector<16x512xf32>
    %27 = arith.addf %24, %26 : vector<16x512xf32>
    %28 = vector.extract_strided_slice %27 {offsets = [0, 0], sizes = [16, 256], strides = [1, 1]} : vector<16x512xf32> to vector<16x256xf32>
    %29 = math.tanh %28 : vector<16x256xf32>
    %30 = vector.extract_strided_slice %27 {offsets = [0, 256], sizes = [16, 256], strides = [1, 1]} : vector<16x512xf32> to vector<16x256xf32>
    %31 = arith.negf %30 : vector<16x256xf32>
    %32 = math.exp %31 : vector<16x256xf32>
    %cst_13 = arith.constant 1.000000e+00 : f32
    %33 = vector.broadcast %cst_13 : f32 to vector<16x256xf32>
    %34 = arith.addf %33, %32 : vector<16x256xf32>
    %35 = arith.divf %33, %34 : vector<16x256xf32>
    %36 = arith.mulf %29, %35 : vector<16x256xf32>
    %c0_14 = arith.constant 0 : index
    %c0_15 = arith.constant 0 : index
    %37 = vector.load %arg7[%c0_14, %c0_15] : memref<1x256xf32, #tpu.memory_space<vmem>>, vector<1x256xf32>
    %38 = vector.broadcast %37 : vector<1x256xf32> to vector<16x256xf32>
    %39 = arith.mulf %36, %38 : vector<16x256xf32>
    %cst_16 = arith.constant dense<0.000000e+00> : vector<16xf32>
    %40 = vector.multi_reduction <add>, %39, %cst_16 [1] : vector<16x256xf32> to vector<16xf32>
    %41 = vector.shape_cast %40 : vector<16xf32> to vector<16x1xf32>
    %c0_17 = arith.constant 0 : index
    %c0_18 = arith.constant 0 : index
    %42 = vector.load %arg8[%c0_17, %c0_18] : memref<1x1xf32, #tpu.memory_space<vmem>>, vector<1x1xf32>
    %43 = vector.broadcast %42 : vector<1x1xf32> to vector<16x1xf32>
    %44 = arith.addf %41, %43 : vector<16x1xf32>
    %cst_19 = arith.constant -1.000000e+30 : f32
    %45 = vector.broadcast %cst_19 : f32 to vector<16x1xf32>
    %46 = arith.select %8, %44, %45 : vector<16x1xi1>, vector<16x1xf32>
    %c0_20 = arith.constant 0 : index
    %c0_21 = arith.constant 0 : index
    %47 = vector.load %arg22[%c0_20, %c0_21] : memref<1x1xf32, #tpu.memory_space<vmem>>, vector<1x1xf32>
    %cst_22 = arith.constant dense<0xFF800000> : vector<1xf32>
    %48 = vector.multi_reduction <maximumf>, %46, %cst_22 [0] : vector<16x1xf32> to vector<1xf32>
    %49 = vector.shape_cast %48 : vector<1xf32> to vector<1x1xf32>
    %50 = arith.maximumf %47, %49 : vector<1x1xf32>
    %51 = arith.subf %47, %50 : vector<1x1xf32>
    %52 = math.exp %51 : vector<1x1xf32>
    %53 = vector.broadcast %50 : vector<1x1xf32> to vector<16x1xf32>
    %54 = arith.subf %46, %53 : vector<16x1xf32>
    %55 = math.exp %54 : vector<16x1xf32>
    %c0_23 = arith.constant 0 : index
    %c0_24 = arith.constant 0 : index
    %56 = vector.load %arg23[%c0_23, %c0_24] : memref<1x1xf32, #tpu.memory_space<vmem>>, vector<1x1xf32>
    %57 = arith.mulf %52, %56 : vector<1x1xf32>
    %cst_25 = arith.constant dense<0.000000e+00> : vector<1xf32>
    %58 = vector.multi_reduction <add>, %55, %cst_25 [0] : vector<16x1xf32> to vector<1xf32>
    %59 = vector.shape_cast %58 : vector<1xf32> to vector<1x1xf32>
    %60 = arith.addf %57, %59 : vector<1x1xf32>
    %c0_26 = arith.constant 0 : index
    %c0_27 = arith.constant 0 : index
    %61 = vector.load %arg23[%c0_26, %c0_27] : memref<1x1xf32, #tpu.memory_space<vmem>>, vector<1x1xf32>
    tpu.vector_store %arg23[%c0_26, %c0_27], %60 {strides = array<i32>} : memref<1x1xf32, #tpu.memory_space<vmem>>, vector<1x1xf32>,
    %c0_28 = arith.constant 0 : index
    %c0_29 = arith.constant 0 : index
    %62 = vector.load %arg24[%c0_28, %c0_29] : memref<1x512xf32, #tpu.memory_space<vmem>>, vector<1x512xf32>
    %63 = vector.broadcast %52 : vector<1x1xf32> to vector<1x512xf32>
    %64 = arith.mulf %63, %62 : vector<1x512xf32>
    %65 = vector.broadcast %55 : vector<16x1xf32> to vector<16x512xf32>
    %66 = arith.mulf %65, %21 : vector<16x512xf32>
    %cst_30 = arith.constant dense<0.000000e+00> : vector<512xf32>
    %67 = vector.multi_reduction <add>, %66, %cst_30 [0] : vector<16x512xf32> to vector<512xf32>
    %68 = vector.shape_cast %67 : vector<512xf32> to vector<1x512xf32>
    %69 = arith.addf %64, %68 : vector<1x512xf32>
    %c0_31 = arith.constant 0 : index
    %c0_32 = arith.constant 0 : index
    %70 = vector.load %arg24[%c0_31, %c0_32] : memref<1x512xf32, #tpu.memory_space<vmem>>, vector<1x512xf32>
    tpu.vector_store %arg24[%c0_31, %c0_32], %69 {strides = array<i32>} : memref<1x512xf32, #tpu.memory_space<vmem>>, vector<1x512xf32>,
    %c0_33 = arith.constant 0 : index
    %c0_34 = arith.constant 0 : index
    %71 = vector.load %arg22[%c0_33, %c0_34] : memref<1x1xf32, #tpu.memory_space<vmem>>, vector<1x1xf32>
    tpu.vector_store %arg22[%c0_33, %c0_34], %50 {strides = array<i32>} : memref<1x1xf32, #tpu.memory_space<vmem>>, vector<1x1xf32>,
    %c2_i32 = arith.constant 2 : i32
    %72 = arith.cmpi eq, %arg0, %c2_i32 : i32
    %73 = arith.extui %72 : i1 to i32
    %c0_i32_35 = arith.constant 0 : i32
    %74 = arith.cmpi ne, %73, %c0_i32_35 : i32
    scf.if %74 {
      %c0_36 = arith.constant 0 : index
      %c0_37 = arith.constant 0 : index
      %75 = vector.load %arg24[%c0_36, %c0_37] : memref<1x512xf32, #tpu.memory_space<vmem>>, vector<1x512xf32>
      %c0_38 = arith.constant 0 : index
      %c0_39 = arith.constant 0 : index
      %76 = vector.load %arg23[%c0_38, %c0_39] : memref<1x1xf32, #tpu.memory_space<vmem>>, vector<1x1xf32>
      %77 = vector.broadcast %76 : vector<1x1xf32> to vector<1x512xf32>
      %78 = arith.divf %75, %77 : vector<1x512xf32>
      %c0_40 = arith.constant 0 : index
      %c0_41 = arith.constant 0 : index
      %79 = vector.load %arg2[%c0_40, %c0_41] : memref<12x256xf32, #tpu.memory_space<vmem>>, vector<12x256xf32>
      %80 = arith.truncf %79 : vector<12x256xf32> to vector<12x256xbf16>
      %c0_42 = arith.constant 0 : index
      %c0_43 = arith.constant 0 : index
      %81 = vector.load %arg9[%c0_42, %c0_43] : memref<256x512xbf16, #tpu.memory_space<vmem>>, vector<256x512xbf16>
      %cst_44 = arith.constant dense<0.000000e+00> : vector<12x512xf32>
      %82 = tpu.matmul %80, %81, %cst_44 {dimension_numbers = #tpu.dot_dimension_numbers<[1], [0], [0], [1], [0, 0, 1, 1], [], []>} : vector<12x256xbf16>, vector<256x512xbf16>, vector<12x512xf32> -> vector<12x512xf32>
      %c0_45 = arith.constant 0 : index
      %c0_46 = arith.constant 0 : index
      %83 = vector.load %arg10[%c0_45, %c0_46] : memref<1x512xf32, #tpu.memory_space<vmem>>, vector<1x512xf32>
      %84 = vector.broadcast %83 : vector<1x512xf32> to vector<12x512xf32>
      %85 = arith.addf %82, %84 : vector<12x512xf32>
      %cst_47 = arith.constant 0.000000e+00 : f32
      %86 = vector.broadcast %cst_47 : f32 to vector<12x512xf32>
      %87 = arith.maximumf %85, %86 : vector<12x512xf32>
      %88 = arith.truncf %87 : vector<12x512xf32> to vector<12x512xbf16>
      %c0_48 = arith.constant 0 : index
      %c0_49 = arith.constant 0 : index
      %89 = vector.load %arg11[%c0_48, %c0_49] : memref<512x512xbf16, #tpu.memory_space<vmem>>, vector<512x512xbf16>
      %cst_50 = arith.constant dense<0.000000e+00> : vector<12x512xf32>
      %90 = tpu.matmul %88, %89, %cst_50 {dimension_numbers = #tpu.dot_dimension_numbers<[1], [0], [0], [1], [0, 0, 1, 1], [], []>} : vector<12x512xbf16>, vector<512x512xbf16>, vector<12x512xf32> -> vector<12x512xf32>
      %c0_51 = arith.constant 0 : index
      %c0_52 = arith.constant 0 : index
      %91 = vector.load %arg12[%c0_51, %c0_52] : memref<1x512xf32, #tpu.memory_space<vmem>>, vector<1x512xf32>
      %92 = vector.broadcast %91 : vector<1x512xf32> to vector<12x512xf32>
      %93 = arith.addf %90, %92 : vector<12x512xf32>
      %94 = vector.extract_strided_slice %93 {offsets = [0, 0], sizes = [12, 256], strides = [1, 1]} : vector<12x512xf32> to vector<12x256xf32>
      %95 = math.tanh %94 : vector<12x256xf32>
      %96 = vector.extract_strided_slice %93 {offsets = [0, 256], sizes = [12, 256], strides = [1, 1]} : vector<12x512xf32> to vector<12x256xf32>
      %97 = arith.negf %96 : vector<12x256xf32>
      %98 = math.exp %97 : vector<12x256xf32>
      %cst_53 = arith.constant 1.000000e+00 : f32
      %99 = vector.broadcast %cst_53 : f32 to vector<12x256xf32>
      %100 = arith.addf %99, %98 : vector<12x256xf32>
      %101 = arith.divf %99, %100 : vector<12x256xf32>
      %102 = arith.mulf %95, %101 : vector<12x256xf32>
      %c0_54 = arith.constant 0 : index
      %c0_55 = arith.constant 0 : index
      %103 = vector.load %arg13[%c0_54, %c0_55] : memref<1x256xf32, #tpu.memory_space<vmem>>, vector<1x256xf32>
      %104 = vector.broadcast %103 : vector<1x256xf32> to vector<12x256xf32>
      %105 = arith.mulf %102, %104 : vector<12x256xf32>
      %cst_56 = arith.constant dense<0.000000e+00> : vector<12xf32>
      %106 = vector.multi_reduction <add>, %105, %cst_56 [1] : vector<12x256xf32> to vector<12xf32>
      %107 = vector.shape_cast %106 : vector<12xf32> to vector<12x1xf32>
      %c0_57 = arith.constant 0 : index
      %c0_58 = arith.constant 0 : index
      %108 = vector.load %arg14[%c0_57, %c0_58] : memref<1x1xf32, #tpu.memory_space<vmem>>, vector<1x1xf32>
      %109 = vector.broadcast %108 : vector<1x1xf32> to vector<12x1xf32>
      %110 = arith.addf %107, %109 : vector<12x1xf32>
      %cst_59 = arith.constant dense<0xFF800000> : vector<1xf32>
      %111 = vector.multi_reduction <maximumf>, %110, %cst_59 [0] : vector<12x1xf32> to vector<1xf32>
      %112 = vector.shape_cast %111 : vector<1xf32> to vector<1x1xf32>
      %113 = vector.broadcast %112 : vector<1x1xf32> to vector<12x1xf32>
      %114 = arith.subf %110, %113 : vector<12x1xf32>
      %115 = math.exp %114 : vector<12x1xf32>
      %cst_60 = arith.constant dense<0.000000e+00> : vector<1xf32>
      %116 = vector.multi_reduction <add>, %115, %cst_60 [0] : vector<12x1xf32> to vector<1xf32>
      %117 = vector.shape_cast %116 : vector<1xf32> to vector<1x1xf32>
      %cst_61 = arith.constant 0.288675129 : f32
      %118 = vector.broadcast %cst_61 : f32 to vector<1x1xf32>
      %119 = arith.divf %118, %117 : vector<1x1xf32>
      %120 = vector.broadcast %119 : vector<1x1xf32> to vector<12x1xf32>
      %121 = arith.mulf %115, %120 : vector<12x1xf32>
      %122 = vector.broadcast %121 : vector<12x1xf32> to vector<12x512xf32>
      %123 = arith.mulf %122, %87 : vector<12x512xf32>
      %cst_62 = arith.constant dense<0.000000e+00> : vector<512xf32>
      %124 = vector.multi_reduction <add>, %123, %cst_62 [0] : vector<12x512xf32> to vector<512xf32>
      %125 = vector.shape_cast %124 : vector<512xf32> to vector<1x512xf32>
      %c0_63 = arith.constant 0 : index
      %c0_64 = arith.constant 0 : index
      %126 = vector.load %arg21[%c0_63, %c0_64] : memref<1x1024xf32, #tpu.memory_space<vmem>>, vector<1x512xf32>
      tpu.vector_store %arg21[%c0_63, %c0_64], %78 {strides = array<i32>} : memref<1x1024xf32, #tpu.memory_space<vmem>>, vector<1x512xf32>,
      %c0_65 = arith.constant 0 : index
      %c512 = arith.constant 512 : index
      %127 = vector.load %arg21[%c0_65, %c512] : memref<1x1024xf32, #tpu.memory_space<vmem>>, vector<1x512xf32>
      tpu.vector_store %arg21[%c0_65, %c512], %125 {strides = array<i32>} : memref<1x1024xf32, #tpu.memory_space<vmem>>, vector<1x512xf32>,
      %128 = arith.truncf %78 : vector<1x512xf32> to vector<1x512xbf16>
      %c0_66 = arith.constant 0 : index
      %c0_67 = arith.constant 0 : index
      %129 = vector.load %arg15[%c0_66, %c0_67] : memref<512x512xbf16, #tpu.memory_space<vmem>>, vector<512x512xbf16>
      %cst_68 = arith.constant dense<0.000000e+00> : vector<1x512xf32>
      %130 = tpu.matmul %128, %129, %cst_68 {dimension_numbers = #tpu.dot_dimension_numbers<[1], [0], [0], [1], [0, 0, 1, 1], [], []>} : vector<1x512xbf16>, vector<512x512xbf16>, vector<1x512xf32> -> vector<1x512xf32>
      %131 = arith.truncf %125 : vector<1x512xf32> to vector<1x512xbf16>
      %c0_69 = arith.constant 0 : index
      %c0_70 = arith.constant 0 : index
      %132 = vector.load %arg16[%c0_69, %c0_70] : memref<512x512xbf16, #tpu.memory_space<vmem>>, vector<512x512xbf16>
      %cst_71 = arith.constant dense<0.000000e+00> : vector<1x512xf32>
      %133 = tpu.matmul %131, %132, %cst_71 {dimension_numbers = #tpu.dot_dimension_numbers<[1], [0], [0], [1], [0, 0, 1, 1], [], []>} : vector<1x512xbf16>, vector<512x512xbf16>, vector<1x512xf32> -> vector<1x512xf32>
      %134 = arith.addf %130, %133 : vector<1x512xf32>
      %c0_72 = arith.constant 0 : index
      %c0_73 = arith.constant 0 : index
      %135 = vector.load %arg17[%c0_72, %c0_73] : memref<1x512xf32, #tpu.memory_space<vmem>>, vector<1x512xf32>
      %136 = arith.addf %134, %135 : vector<1x512xf32>
      %cst_74 = arith.constant 0.000000e+00 : f32
      %137 = vector.broadcast %cst_74 : f32 to vector<1x512xf32>
      %138 = arith.maximumf %136, %137 : vector<1x512xf32>
      %139 = arith.truncf %138 : vector<1x512xf32> to vector<1x512xbf16>
      %c0_75 = arith.constant 0 : index
      %c0_76 = arith.constant 0 : index
      %140 = vector.load %arg18[%c0_75, %c0_76] : memref<512x2xbf16, #tpu.memory_space<vmem>>, vector<512x2xbf16>
      %cst_77 = arith.constant dense<0.000000e+00> : vector<1x2xf32>
      %141 = tpu.matmul %139, %140, %cst_77 {dimension_numbers = #tpu.dot_dimension_numbers<[1], [0], [0], [1], [0, 0, 1, 1], [], []>} : vector<1x512xbf16>, vector<512x2xbf16>, vector<1x2xf32> -> vector<1x2xf32>
      %c0_78 = arith.constant 0 : index
      %c0_79 = arith.constant 0 : index
      %142 = vector.load %arg19[%c0_78, %c0_79] : memref<1x2xf32, #tpu.memory_space<vmem>>, vector<1x2xf32>
      %143 = arith.addf %141, %142 : vector<1x2xf32>
      %c0_80 = arith.constant 0 : index
      %c0_81 = arith.constant 0 : index
      %144 = vector.load %arg20[%c0_80, %c0_81] : memref<1x2xf32, #tpu.memory_space<vmem>>, vector<1x2xf32>
      tpu.vector_store %arg20[%c0_80, %c0_81], %143 {strides = array<i32>} : memref<1x2xf32, #tpu.memory_space<vmem>>, vector<1x2xf32>,
    } else {
    }
    return
  }
  func.func @transform_0(%arg0: i32) -> (i32, i32) {
    %c0_i32 = arith.constant 0 : i32
    %c0_i32_0 = arith.constant 0 : i32
    return %arg0, %c0_i32 : i32, i32
  }
  func.func @transform_1(%arg0: i32) -> (i32, i32) {
    %c0_i32 = arith.constant 0 : i32
    %c0_i32_0 = arith.constant 0 : i32
    %c0_i32_1 = arith.constant 0 : i32
    return %c0_i32, %c0_i32_0 : i32, i32
  }
  func.func @transform_2(%arg0: i32) -> (i32, i32) {
    %c0_i32 = arith.constant 0 : i32
    %c0_i32_0 = arith.constant 0 : i32
    %c0_i32_1 = arith.constant 0 : i32
    return %c0_i32, %c0_i32_0 : i32, i32
  }
  func.func @transform_3(%arg0: i32) -> (i32, i32) {
    %c0_i32 = arith.constant 0 : i32
    %c0_i32_0 = arith.constant 0 : i32
    %c0_i32_1 = arith.constant 0 : i32
    return %c0_i32, %c0_i32_0 : i32, i32
  }
  func.func @transform_4(%arg0: i32) -> (i32, i32) {
    %c0_i32 = arith.constant 0 : i32
    %c0_i32_0 = arith.constant 0 : i32
    %c0_i32_1 = arith.constant 0 : i32
    return %c0_i32, %c0_i32_0 : i32, i32
  }
  func.func @transform_5(%arg0: i32) -> (i32, i32) {
    %c0_i32 = arith.constant 0 : i32
    %c0_i32_0 = arith.constant 0 : i32
    %c0_i32_1 = arith.constant 0 : i32
    return %c0_i32, %c0_i32_0 : i32, i32
  }
  func.func @transform_6(%arg0: i32) -> (i32, i32) {
    %c0_i32 = arith.constant 0 : i32
    %c0_i32_0 = arith.constant 0 : i32
    %c0_i32_1 = arith.constant 0 : i32
    return %c0_i32, %c0_i32_0 : i32, i32
  }
  func.func @transform_7(%arg0: i32) -> (i32, i32) {
    %c0_i32 = arith.constant 0 : i32
    %c0_i32_0 = arith.constant 0 : i32
    %c0_i32_1 = arith.constant 0 : i32
    return %c0_i32, %c0_i32_0 : i32, i32
  }
  func.func @transform_8(%arg0: i32) -> (i32, i32) {
    %c0_i32 = arith.constant 0 : i32
    %c0_i32_0 = arith.constant 0 : i32
    %c0_i32_1 = arith.constant 0 : i32
    return %c0_i32, %c0_i32_0 : i32, i32
  }
  func.func @transform_9(%arg0: i32) -> (i32, i32) {
    %c0_i32 = arith.constant 0 : i32
    %c0_i32_0 = arith.constant 0 : i32
    %c0_i32_1 = arith.constant 0 : i32
    return %c0_i32, %c0_i32_0 : i32, i32
  }
  func.func @transform_10(%arg0: i32) -> (i32, i32) {
    %c0_i32 = arith.constant 0 : i32
    %c0_i32_0 = arith.constant 0 : i32
    %c0_i32_1 = arith.constant 0 : i32
    return %c0_i32, %c0_i32_0 : i32, i32
  }
  func.func @transform_11(%arg0: i32) -> (i32, i32) {
    %c0_i32 = arith.constant 0 : i32
    %c0_i32_0 = arith.constant 0 : i32
    %c0_i32_1 = arith.constant 0 : i32
    return %c0_i32, %c0_i32_0 : i32, i32
  }
  func.func @transform_12(%arg0: i32) -> (i32, i32) {
    %c0_i32 = arith.constant 0 : i32
    %c0_i32_0 = arith.constant 0 : i32
    %c0_i32_1 = arith.constant 0 : i32
    return %c0_i32, %c0_i32_0 : i32, i32
  }
  func.func @transform_13(%arg0: i32) -> (i32, i32) {
    %c0_i32 = arith.constant 0 : i32
    %c0_i32_0 = arith.constant 0 : i32
    %c0_i32_1 = arith.constant 0 : i32
    return %c0_i32, %c0_i32_0 : i32, i32
  }
  func.func @transform_14(%arg0: i32) -> (i32, i32) {
    %c0_i32 = arith.constant 0 : i32
    %c0_i32_0 = arith.constant 0 : i32
    %c0_i32_1 = arith.constant 0 : i32
    return %c0_i32, %c0_i32_0 : i32, i32
  }
  func.func @transform_15(%arg0: i32) -> (i32, i32) {
    %c0_i32 = arith.constant 0 : i32
    %c0_i32_0 = arith.constant 0 : i32
    %c0_i32_1 = arith.constant 0 : i32
    return %c0_i32, %c0_i32_0 : i32, i32
  }
  func.func @transform_16(%arg0: i32) -> (i32, i32) {
    %c0_i32 = arith.constant 0 : i32
    %c0_i32_0 = arith.constant 0 : i32
    %c0_i32_1 = arith.constant 0 : i32
    return %c0_i32, %c0_i32_0 : i32, i32
  }
  func.func @transform_17(%arg0: i32) -> (i32, i32) {
    %c0_i32 = arith.constant 0 : i32
    %c0_i32_0 = arith.constant 0 : i32
    %c0_i32_1 = arith.constant 0 : i32
    return %c0_i32, %c0_i32_0 : i32, i32
  }
  func.func @transform_18(%arg0: i32) -> (i32, i32) {
    %c0_i32 = arith.constant 0 : i32
    %c0_i32_0 = arith.constant 0 : i32
    %c0_i32_1 = arith.constant 0 : i32
    return %c0_i32, %c0_i32_0 : i32, i32
  }
  func.func @transform_19(%arg0: i32) -> (i32, i32) {
    %c0_i32 = arith.constant 0 : i32
    %c0_i32_0 = arith.constant 0 : i32
    %c0_i32_1 = arith.constant 0 : i32
    return %c0_i32, %c0_i32_0 : i32, i32
  }
  func.func @transform_20(%arg0: i32) -> (i32, i32) {
    %c0_i32 = arith.constant 0 : i32
    %c0_i32_0 = arith.constant 0 : i32
    %c0_i32_1 = arith.constant 0 : i32
    return %c0_i32, %c0_i32_0 : i32, i32
  }
}

</mosaic_0001>

<llo_original>
// kernel: ppmil_forward.1
$region0: #{ppmil_forward.1}
  #allocation0 [shape = 'u32[]', space=smem, size = 0x4, offset = 0x4, fixed_abs, tag = 'smem constant byte address 0x4 - core index']
  #allocation1 [shape = 'u32[144,128]{1,0:T(1,128)}', space=vmem, size = 0x12000, scoped, tag = 'internal scratch']
  #allocation2 [shape = 'f32[1,1]{1,0:T(1,128)}', space=vmem, size = 0x200, scoped, tag = 'scratch operand']
  #allocation3 [shape = 'f32[1,1]{1,0:T(1,128)}', space=vmem, size = 0x200, scoped, tag = 'scratch operand']
  #allocation4 [shape = 'f32[1,512]{1,0:T(1,128)}', space=vmem, size = 0x800, scoped, tag = 'scratch operand']
  #allocation5 [shape = 'f32[1,1]{1,0:T(1,128)S(1)}', space=vmem, size = 0x200, scoped, tag = 'scoped memory for ppmil_forward.1']
  #allocation6 [shape = 'f32[1,1]{1,0:T(1,128)S(1)}', space=vmem, size = 0x200, scoped, tag = 'scoped memory for ppmil_forward.1']
  %s0 = inlined_call_operand.vmem [shape: f32[40,256], index: 0, kind: input, shape index: {}]
  %s1 = inlined_call_operand.vmem [shape: f32[12,256], index: 1, kind: input, shape index: {}]
  %s2 = inlined_call_operand.hbm [shape: bf16[256,512], index: 2, kind: input, shape index: {}]
  %s3 = inlined_call_operand.vmem [shape: f32[1,512], index: 3, kind: input, shape index: {}]
  %s4 = inlined_call_operand.hbm [shape: bf16[512,512], index: 4, kind: input, shape index: {}]
  %s5 = inlined_call_operand.vmem [shape: f32[1,512], index: 5, kind: input, shape index: {}]
  %s6 = inlined_call_operand.vmem [shape: f32[1,256], index: 6, kind: input, shape index: {}]
  %s7 = inlined_call_operand.<no memory space> [shape: f32[1,1], index: 7, kind: input, shape index: {}]
  %s8 = inlined_call_operand.hbm [shape: bf16[256,512], index: 8, kind: input, shape index: {}]
  %s9 = inlined_call_operand.vmem [shape: f32[1,512], index: 9, kind: input, shape index: {}]
  %s10 = inlined_call_operand.hbm [shape: bf16[512,512], index: 10, kind: input, shape index: {}]
  %s11 = inlined_call_operand.vmem [shape: f32[1,512], index: 11, kind: input, shape index: {}]
  %s12 = inlined_call_operand.vmem [shape: f32[1,256], index: 12, kind: input, shape index: {}]
  %s13 = inlined_call_operand.<no memory space> [shape: f32[1,1], index: 13, kind: input, shape index: {}]
  %s14 = inlined_call_operand.hbm [shape: bf16[512,512], index: 14, kind: input, shape index: {}]
  %s15 = inlined_call_operand.hbm [shape: bf16[512,512], index: 15, kind: input, shape index: {}]
  %s16 = inlined_call_operand.vmem [shape: f32[1,512], index: 16, kind: input, shape index: {}]
  %s17 = inlined_call_operand.vmem [shape: bf16[512,2], index: 17, kind: input, shape index: {}]
  %s18 = inlined_call_operand.vmem [shape: f32[1,2], index: 18, kind: input, shape index: {}]
  %s19 = inlined_call_operand.hbm [shape: f32[1,2], index: 19, kind: output, shape index: {0}]
  %s20 = inlined_call_operand.hbm [shape: f32[1,1024], index: 20, kind: output, shape index: {1}]
  %21 = xla_tuple %s19, %s20
  %s22 = sld [smem:[#allocation0]]
  $region149: #{ppmil_forward.1} parent=0
    _
  %s24 = ssub.s32 1, %s22
  %s25 = scalar_select 0, %s24, %s22
  %v26 = vstv %s7
  %27 = vst [vmem:[#allocation5] sm:$0x1] %v26
  %v28 = vstv %s13
  %29 = vst [vmem:[#allocation6] sm:$0x1] %v28
  $region1: #{ppmil_forward.1} parent=0
    #allocation7 [shape = 'u8[262144]{0}', space=vmem, size = 0x40000, scoped, tag = 'input window, operand 2, single buffered']
    #allocation8 [shape = 's32[2]{0}', space=sflag, size = 0x8, scoped, tag = 'scoped memory for ppmil_forward.1']
    #allocation9 [shape = 's32[2]{0}', space=sflag, size = 0x8, scoped, tag = 'scoped memory for ppmil_forward.1']
    #allocation10 [shape = 'u8[524288]{0}', space=vmem, size = 0x80000, scoped, tag = 'input window, operand 4, single buffered']
    #allocation11 [shape = 's32[1]{0}', space=sflag, size = 0x4, scoped, tag = 'scoped memory for ppmil_forward.1']
    #allocation12 [shape = 'u8[262144]{0}', space=vmem, size = 0x40000, scoped, tag = 'input window, operand 8, single buffered']
    #allocation13 [shape = 'u8[524288]{0}', space=vmem, size = 0x80000, scoped, tag = 'input window, operand 10, single buffered']
    #allocation14 [shape = 's32[1]{0}', space=sflag, size = 0x4, scoped, tag = 'scoped memory for ppmil_forward.1']
    #allocation15 [shape = 'u8[524288]{0}', space=vmem, size = 0x80000, scoped, tag = 'input window, operand 14, single buffered']
    #allocation16 [shape = 'u8[524288]{0}', space=vmem, size = 0x80000, scoped, tag = 'input window, operand 15, single buffered']
    #allocation17 [shape = 's32[1]{0}', space=sflag, size = 0x4, scoped, tag = 'scoped memory for ppmil_forward.1']
    #allocation18 [shape = 'u8[512]{0}', space=vmem, size = 0x400, scoped, tag = 'output window, operand 0, single buffered']
    #allocation19 [shape = 'u8[4096]{0}', space=vmem, size = 0x1000, scoped, tag = 'output window, operand 1, single buffered']
    #allocation20 [shape = 's32[1]{0}', space=sflag, size = 0x4, scoped, tag = 'scoped memory for ppmil_forward.1']
    %30 = vsyncpa [#allocation8], 0
    %31 = vsyncpa [#allocation11], 0
    %32 = vsyncpa [#allocation14], 0
    %33 = vsyncpa [#allocation17], 0
    %34 = vsyncpa [#allocation9], 0
    %35 = vsyncpa [#allocation20], 0
    loop: start=0, step=1, limit=5
    $region2: #{ppmil_forward.1} parent=1 // loop_pre_header
      _
    $region3: #{ppmil_forward.1} parent=1 // loop_header
      %s37 = sphi 0, %s41
      %p38 = scmp.ge.s32.totalorder %s37, 5
      %s47 = sphi 0, %s49
      %s50 = sphi 0, %s47
      %s51 = sphi 0, %s50
      %s67 = sphi 0, %s51
      %s71 = sphi 0, %s71
      %s73 = sphi 0, %s71
      %s74 = sphi 0, %s73
      %s88 = sphi 0, %s74
      %s92 = sphi 0, %s92
      %s94 = sphi 0, %s92
      %s95 = sphi 0, %s94
      %s109 = sphi 0, %s95
      %s113 = sphi 0, %s113
      %s115 = sphi 0, %s113
      %s116 = sphi 0, %s115
      %s130 = sphi 0, %s116
      %s134 = sphi 0, %s134
      %s136 = sphi 0, %s134
      %s137 = sphi 0, %s136
      %s151 = sphi 0, %s137
      %s155 = sphi 0, %s155
      %s157 = sphi 0, %s155
      %s158 = sphi 0, %s157
      %s172 = sphi 0, %s158
      %s176 = sphi 0, %s176
      %s178 = sphi 0, %s176
      %s179 = sphi 0, %s178
      %s193 = sphi 0, %s179
      %s197 = sphi 0, %s197
      %s199 = sphi 0, %s197
      %s200 = sphi 0, %s199
      %s214 = sphi 0, %s200
      %s218 = sphi 0, %s218
      %s220 = sphi 0, %s218
      %s221 = sphi 0, %s220
      %s235 = sphi 0, %s221
      %s239 = sphi 0, %s239
      %s241 = sphi 0, %s239
      %s242 = sphi 0, %s241
      %s256 = sphi 0, %s242
      %s260 = sphi 0, %s260
      %s262 = sphi 0, %s260
      %s263 = sphi 0, %s262
      %s277 = sphi 0, %s263
      %s281 = sphi 0, %s281
      %s283 = sphi 0, %s281
      %s284 = sphi 0, %s283
      %s298 = sphi 0, %s284
      %s302 = sphi 0, %s302
      %s304 = sphi 0, %s302
      %s305 = sphi 0, %s304
      %s319 = sphi 0, %s305
      %s323 = sphi 0, %s323
      %s325 = sphi 0, %s323
      %s326 = sphi 0, %s325
      %s340 = sphi 0, %s326
      %s344 = sphi 0, %s344
      %s346 = sphi 0, %s344
      %s347 = sphi 0, %s346
      %s361 = sphi 0, %s347
      %s365 = sphi 0, %s365
      %s367 = sphi 0, %s365
      %s368 = sphi 0, %s367
      %s382 = sphi 0, %s368
      %s386 = sphi 0, %s386
      %s388 = sphi 0, %s386
      %s389 = sphi 0, %s388
      %s403 = sphi 0, %s389
      %s407 = sphi 0, %s407
      %s409 = sphi 0, %s407
      %s410 = sphi 0, %s409
      %s424 = sphi 0, %s410
      %s428 = sphi 0, %s428
      %s430 = sphi 0, %s428
      %s431 = sphi 0, %s430
      %s445 = sphi 0, %s431
      %s449 = sphi 0, %s449
      %s451 = sphi 0, %s449
      %s452 = sphi 0, %s451
      %s466 = sphi 0, %s452
      %s470 = sphi 0, %s470
      %s472 = sphi 0, %s470
      %s473 = sphi 0, %s472
      %s487 = sphi 0, %s473
    $region4: #{ppmil_forward.1} parent=1 // loop_header_branch
      %40 = sbr.rel (%p38) target = $region8
    $region5: #{ppmil_forward.1} parent=1 // loop_body
      %s42 = ssub.s32 %s37, 1
      %s43 = ssub.s32 %s37, 2
      %s44 = sadd.s32 %s37, 1
      %s45 = ssub.s32 %s37, %s44
      %p46 = scmp.eq.s32.totalorder %s45, 0
      %s48 = sadd.s32 %s47, 1
      %s49 = scalar_select %p46, %s47, %s48
      %p52 = pneg %p46
      %p53 = scmp.eq.s32.totalorder %s37, 2
      %p54 = por %p52, %p53
      %p55 = scmp.ne.s32.totalorder %s47, %s50
      %p56 = scmp.eq.s32.totalorder %s37, 0
      %p57 = por %p55, %p56
      %p58 = scmp.ne.s32.totalorder %s47, %s50
      %p59 = scmp.eq.s32.totalorder %s42, 2
      %p60 = por %p58, %p59
      %p61 = scmp.ne.s32.totalorder %s50, %s51
      %p62 = scmp.eq.s32.totalorder %s42, 0
      %p63 = por %p61, %p62
      %p64 = scmp.ne.s32.totalorder %s50, %s51
      %p65 = scmp.eq.s32.totalorder %s43, 2
      %p66 = por %p64, %p65
      %p68 = scmp.ne.s32.totalorder %s51, %s67
      %p69 = scmp.eq.s32.totalorder %s43, 0
      %p70 = por %p68, %p69
      %s72 = sadd.s32 %s71, 1
      %p75 = scmp.eq.s32.totalorder %s37, 2
      %p76 = scmp.ne.s32.totalorder %s71, %s73
      %p77 = scmp.eq.s32.totalorder %s37, 0
      %p78 = por %p76, %p77
      %p79 = scmp.ne.s32.totalorder %s71, %s73
      %p80 = scmp.eq.s32.totalorder %s42, 2
      %p81 = por %p79, %p80
      %p82 = scmp.ne.s32.totalorder %s73, %s74
      %p83 = scmp.eq.s32.totalorder %s42, 0
      %p84 = por %p82, %p83
      %p85 = scmp.ne.s32.totalorder %s73, %s74
      %p86 = scmp.eq.s32.totalorder %s43, 2
      %p87 = por %p85, %p86
      %p89 = scmp.ne.s32.totalorder %s74, %s88
      %p90 = scmp.eq.s32.totalorder %s43, 0
      %p91 = por %p89, %p90
      %s93 = sadd.s32 %s92, 1
      %p96 = scmp.eq.s32.totalorder %s37, 2
      %p97 = scmp.ne.s32.totalorder %s92, %s94
      %p98 = scmp.eq.s32.totalorder %s37, 0
      %p99 = por %p97, %p98
      %p100 = scmp.ne.s32.totalorder %s92, %s94
      %p101 = scmp.eq.s32.totalorder %s42, 2
      %p102 = por %p100, %p101
      %p103 = scmp.ne.s32.totalorder %s94, %s95
      %p104 = scmp.eq.s32.totalorder %s42, 0
      %p105 = por %p103, %p104
      %p106 = scmp.ne.s32.totalorder %s94, %s95
      %p107 = scmp.eq.s32.totalorder %s43, 2
      %p108 = por %p106, %p107
      %p110 = scmp.ne.s32.totalorder %s95, %s109
      %p111 = scmp.eq.s32.totalorder %s43, 0
      %p112 = por %p110, %p111
      %s114 = sadd.s32 %s113, 1
      %p117 = scmp.eq.s32.totalorder %s37, 2
      %p118 = scmp.ne.s32.totalorder %s113, %s115
      %p119 = scmp.eq.s32.totalorder %s37, 0
      %p120 = por %p118, %p119
      %p121 = scmp.ne.s32.totalorder %s113, %s115
      %p122 = scmp.eq.s32.totalorder %s42, 2
      %p123 = por %p121, %p122
      %p124 = scmp.ne.s32.totalorder %s115, %s116
      %p125 = scmp.eq.s32.totalorder %s42, 0
      %p126 = por %p124, %p125
      %p127 = scmp.ne.s32.totalorder %s115, %s116
      %p128 = scmp.eq.s32.totalorder %s43, 2
      %p129 = por %p127, %p128
      %p131 = scmp.ne.s32.totalorder %s116, %s130
      %p132 = scmp.eq.s32.totalorder %s43, 0
      %p133 = por %p131, %p132
      %s135 = sadd.s32 %s134, 1
      %p138 = scmp.eq.s32.totalorder %s37, 2
      %p139 = scmp.ne.s32.totalorder %s134, %s136
      %p140 = scmp.eq.s32.totalorder %s37, 0
      %p141 = por %p139, %p140
      %p142 = scmp.ne.s32.totalorder %s134, %s136
      %p143 = scmp.eq.s32.totalorder %s42, 2
      %p144 = por %p142, %p143
      %p145 = scmp.ne.s32.totalorder %s136, %s137
      %p146 = scmp.eq.s32.totalorder %s42, 0
      %p147 = por %p145, %p146
      %p148 = scmp.ne.s32.totalorder %s136, %s137
      %p149 = scmp.eq.s32.totalorder %s43, 2
      %p150 = por %p148, %p149
      %p152 = scmp.ne.s32.totalorder %s137, %s151
      %p153 = scmp.eq.s32.totalorder %s43, 0
      %p154 = por %p152, %p153
      %s156 = sadd.s32 %s155, 1
      %p159 = scmp.eq.s32.totalorder %s37, 2
      %p160 = scmp.ne.s32.totalorder %s155, %s157
      %p161 = scmp.eq.s32.totalorder %s37, 0
      %p162 = por %p160, %p161
      %p163 = scmp.ne.s32.totalorder %s155, %s157
      %p164 = scmp.eq.s32.totalorder %s42, 2
      %p165 = por %p163, %p164
      %p166 = scmp.ne.s32.totalorder %s157, %s158
      %p167 = scmp.eq.s32.totalorder %s42, 0
      %p168 = por %p166, %p167
      %p169 = scmp.ne.s32.totalorder %s157, %s158
      %p170 = scmp.eq.s32.totalorder %s43, 2
      %p171 = por %p169, %p170
      %p173 = scmp.ne.s32.totalorder %s158, %s172
      %p174 = scmp.eq.s32.totalorder %s43, 0
      %p175 = por %p173, %p174
      %s177 = sadd.s32 %s176, 1
      %p180 = scmp.eq.s32.totalorder %s37, 2
      %p181 = scmp.ne.s32.totalorder %s176, %s178
      %p182 = scmp.eq.s32.totalorder %s37, 0
      %p183 = por %p181, %p182
      %p184 = scmp.ne.s32.totalorder %s176, %s178
      %p185 = scmp.eq.s32.totalorder %s42, 2
      %p186 = por %p184, %p185
      %p187 = scmp.ne.s32.totalorder %s178, %s179
      %p188 = scmp.eq.s32.totalorder %s42, 0
      %p189 = por %p187, %p188
      %p190 = scmp.ne.s32.totalorder %s178, %s179
      %p191 = scmp.eq.s32.totalorder %s43, 2
      %p192 = por %p190, %p191
      %p194 = scmp.ne.s32.totalorder %s179, %s193
      %p195 = scmp.eq.s32.totalorder %s43, 0
      %p196 = por %p194, %p195
      %s198 = sadd.s32 %s197, 1
      %p201 = scmp.eq.s32.totalorder %s37, 2
      %p202 = scmp.ne.s32.totalorder %s197, %s199
      %p203 = scmp.eq.s32.totalorder %s37, 0
      %p204 = por %p202, %p203
      %p205 = scmp.ne.s32.totalorder %s197, %s199
      %p206 = scmp.eq.s32.totalorder %s42, 2
      %p207 = por %p205, %p206
      %p208 = scmp.ne.s32.totalorder %s199, %s200
      %p209 = scmp.eq.s32.totalorder %s42, 0
      %p210 = por %p208, %p209
      %p211 = scmp.ne.s32.totalorder %s199, %s200
      %p212 = scmp.eq.s32.totalorder %s43, 2
      %p213 = por %p211, %p212
      %p215 = scmp.ne.s32.totalorder %s200, %s214
      %p216 = scmp.eq.s32.totalorder %s43, 0
      %p217 = por %p215, %p216
      %s219 = sadd.s32 %s218, 1
      %p222 = scmp.eq.s32.totalorder %s37, 2
      %p223 = scmp.ne.s32.totalorder %s218, %s220
      %p224 = scmp.eq.s32.totalorder %s37, 0
      %p225 = por %p223, %p224
      %p226 = scmp.ne.s32.totalorder %s218, %s220
      %p227 = scmp.eq.s32.totalorder %s42, 2
      %p228 = por %p226, %p227
      %p229 = scmp.ne.s32.totalorder %s220, %s221
      %p230 = scmp.eq.s32.totalorder %s42, 0
      %p231 = por %p229, %p230
      %p232 = scmp.ne.s32.totalorder %s220, %s221
      %p233 = scmp.eq.s32.totalorder %s43, 2
      %p234 = por %p232, %p233
      %p236 = scmp.ne.s32.totalorder %s221, %s235
      %p237 = scmp.eq.s32.totalorder %s43, 0
      %p238 = por %p236, %p237
      %s240 = sadd.s32 %s239, 1
      %p243 = scmp.eq.s32.totalorder %s37, 2
      %p244 = scmp.ne.s32.totalorder %s239, %s241
      %p245 = scmp.eq.s32.totalorder %s37, 0
      %p246 = por %p244, %p245
      %p247 = scmp.ne.s32.totalorder %s239, %s241
      %p248 = scmp.eq.s32.totalorder %s42, 2
      %p249 = por %p247, %p248
      %p250 = scmp.ne.s32.totalorder %s241, %s242
      %p251 = scmp.eq.s32.totalorder %s42, 0
      %p252 = por %p250, %p251
      %p253 = scmp.ne.s32.totalorder %s241, %s242
      %p254 = scmp.eq.s32.totalorder %s43, 2
      %p255 = por %p253, %p254
      %p257 = scmp.ne.s32.totalorder %s242, %s256
      %p258 = scmp.eq.s32.totalorder %s43, 0
      %p259 = por %p257, %p258
      %s261 = sadd.s32 %s260, 1
      %p264 = scmp.eq.s32.totalorder %s37, 2
      %p265 = scmp.ne.s32.totalorder %s260, %s262
      %p266 = scmp.eq.s32.totalorder %s37, 0
      %p267 = por %p265, %p266
      %p268 = scmp.ne.s32.totalorder %s260, %s262
      %p269 = scmp.eq.s32.totalorder %s42, 2
      %p270 = por %p268, %p269
      %p271 = scmp.ne.s32.totalorder %s262, %s263
      %p272 = scmp.eq.s32.totalorder %s42, 0
      %p273 = por %p271, %p272
      %p274 = scmp.ne.s32.totalorder %s262, %s263
      %p275 = scmp.eq.s32.totalorder %s43, 2
      %p276 = por %p274, %p275
      %p278 = scmp.ne.s32.totalorder %s263, %s277
      %p279 = scmp.eq.s32.totalorder %s43, 0
      %p280 = por %p278, %p279
      %s282 = sadd.s32 %s281, 1
      %p285 = scmp.eq.s32.totalorder %s37, 2
      %p286 = scmp.ne.s32.totalorder %s281, %s283
      %p287 = scmp.eq.s32.totalorder %s37, 0
      %p288 = por %p286, %p287
      %p289 = scmp.ne.s32.totalorder %s281, %s283
      %p290 = scmp.eq.s32.totalorder %s42, 2
      %p291 = por %p289, %p290
      %p292 = scmp.ne.s32.totalorder %s283, %s284
      %p293 = scmp.eq.s32.totalorder %s42, 0
      %p294 = por %p292, %p293
      %p295 = scmp.ne.s32.totalorder %s283, %s284
      %p296 = scmp.eq.s32.totalorder %s43, 2
      %p297 = por %p295, %p296
      %p299 = scmp.ne.s32.totalorder %s284, %s298
      %p300 = scmp.eq.s32.totalorder %s43, 0
      %p301 = por %p299, %p300
      %s303 = sadd.s32 %s302, 1
      %p306 = scmp.eq.s32.totalorder %s37, 2
      %p307 = scmp.ne.s32.totalorder %s302, %s304
      %p308 = scmp.eq.s32.totalorder %s37, 0
      %p309 = por %p307, %p308
      %p310 = scmp.ne.s32.totalorder %s302, %s304
      %p311 = scmp.eq.s32.totalorder %s42, 2
      %p312 = por %p310, %p311
      %p313 = scmp.ne.s32.totalorder %s304, %s305
      %p314 = scmp.eq.s32.totalorder %s42, 0
      %p315 = por %p313, %p314
      %p316 = scmp.ne.s32.totalorder %s304, %s305
      %p317 = scmp.eq.s32.totalorder %s43, 2
      %p318 = por %p316, %p317
      %p320 = scmp.ne.s32.totalorder %s305, %s319
      %p321 = scmp.eq.s32.totalorder %s43, 0
      %p322 = por %p320, %p321
      %s324 = sadd.s32 %s323, 1
      %p327 = scmp.eq.s32.totalorder %s37, 2
      %p328 = scmp.ne.s32.totalorder %s323, %s325
      %p329 = scmp.eq.s32.totalorder %s37, 0
      %p330 = por %p328, %p329
      %p331 = scmp.ne.s32.totalorder %s323, %s325
      %p332 = scmp.eq.s32.totalorder %s42, 2
      %p333 = por %p331, %p332
      %p334 = scmp.ne.s32.totalorder %s325, %s326
      %p335 = scmp.eq.s32.totalorder %s42, 0
      %p336 = por %p334, %p335
      %p337 = scmp.ne.s32.totalorder %s325, %s326
      %p338 = scmp.eq.s32.totalorder %s43, 2
      %p339 = por %p337, %p338
      %p341 = scmp.ne.s32.totalorder %s326, %s340
      %p342 = scmp.eq.s32.totalorder %s43, 0
      %p343 = por %p341, %p342
      %s345 = sadd.s32 %s344, 1
      %p348 = scmp.eq.s32.totalorder %s37, 2
      %p349 = scmp.ne.s32.totalorder %s344, %s346
      %p350 = scmp.eq.s32.totalorder %s37, 0
      %p351 = por %p349, %p350
      %p352 = scmp.ne.s32.totalorder %s344, %s346
      %p353 = scmp.eq.s32.totalorder %s42, 2
      %p354 = por %p352, %p353
      %p355 = scmp.ne.s32.totalorder %s346, %s347
      %p356 = scmp.eq.s32.totalorder %s42, 0
      %p357 = por %p355, %p356
      %p358 = scmp.ne.s32.totalorder %s346, %s347
      %p359 = scmp.eq.s32.totalorder %s43, 2
      %p360 = por %p358, %p359
      %p362 = scmp.ne.s32.totalorder %s347, %s361
      %p363 = scmp.eq.s32.totalorder %s43, 0
      %p364 = por %p362, %p363
      %s366 = sadd.s32 %s365, 1
      %p369 = scmp.eq.s32.totalorder %s37, 2
      %p370 = scmp.ne.s32.totalorder %s365, %s367
      %p371 = scmp.eq.s32.totalorder %s37, 0
      %p372 = por %p370, %p371
      %p373 = scmp.ne.s32.totalorder %s365, %s367
      %p374 = scmp.eq.s32.totalorder %s42, 2
      %p375 = por %p373, %p374
      %p376 = scmp.ne.s32.totalorder %s367, %s368
      %p377 = scmp.eq.s32.totalorder %s42, 0
      %p378 = por %p376, %p377
      %p379 = scmp.ne.s32.totalorder %s367, %s368
      %p380 = scmp.eq.s32.totalorder %s43, 2
      %p381 = por %p379, %p380
      %p383 = scmp.ne.s32.totalorder %s368, %s382
      %p384 = scmp.eq.s32.totalorder %s43, 0
      %p385 = por %p383, %p384
      %s387 = sadd.s32 %s386, 1
      %p390 = scmp.eq.s32.totalorder %s37, 2
      %p391 = scmp.ne.s32.totalorder %s386, %s388
      %p392 = scmp.eq.s32.totalorder %s37, 0
      %p393 = por %p391, %p392
      %p394 = scmp.ne.s32.totalorder %s386, %s388
      %p395 = scmp.eq.s32.totalorder %s42, 2
      %p396 = por %p394, %p395
      %p397 = scmp.ne.s32.totalorder %s388, %s389
      %p398 = scmp.eq.s32.totalorder %s42, 0
      %p399 = por %p397, %p398
      %p400 = scmp.ne.s32.totalorder %s388, %s389
      %p401 = scmp.eq.s32.totalorder %s43, 2
      %p402 = por %p400, %p401
      %p404 = scmp.ne.s32.totalorder %s389, %s403
      %p405 = scmp.eq.s32.totalorder %s43, 0
      %p406 = por %p404, %p405
      %s408 = sadd.s32 %s407, 1
      %p411 = scmp.eq.s32.totalorder %s37, 2
      %p412 = scmp.ne.s32.totalorder %s407, %s409
      %p413 = scmp.eq.s32.totalorder %s37, 0
      %p414 = por %p412, %p413
      %p415 = scmp.ne.s32.totalorder %s407, %s409
      %p416 = scmp.eq.s32.totalorder %s42, 2
      %p417 = por %p415, %p416
      %p418 = scmp.ne.s32.totalorder %s409, %s410
      %p419 = scmp.eq.s32.totalorder %s42, 0
      %p420 = por %p418, %p419
      %p421 = scmp.ne.s32.totalorder %s409, %s410
      %p422 = scmp.eq.s32.totalorder %s43, 2
      %p423 = por %p421, %p422
      %p425 = scmp.ne.s32.totalorder %s410, %s424
      %p426 = scmp.eq.s32.totalorder %s43, 0
      %p427 = por %p425, %p426
      %s429 = sadd.s32 %s428, 1
      %p432 = scmp.eq.s32.totalorder %s37, 2
      %p433 = scmp.ne.s32.totalorder %s428, %s430
      %p434 = scmp.eq.s32.totalorder %s37, 0
      %p435 = por %p433, %p434
      %p436 = scmp.ne.s32.totalorder %s428, %s430
      %p437 = scmp.eq.s32.totalorder %s42, 2
      %p438 = por %p436, %p437
      %p439 = scmp.ne.s32.totalorder %s430, %s431
      %p440 = scmp.eq.s32.totalorder %s42, 0
      %p441 = por %p439, %p440
      %p442 = scmp.ne.s32.totalorder %s430, %s431
      %p443 = scmp.eq.s32.totalorder %s43, 2
      %p444 = por %p442, %p443
      %p446 = scmp.ne.s32.totalorder %s431, %s445
      %p447 = scmp.eq.s32.totalorder %s43, 0
      %p448 = por %p446, %p447
      %s450 = sadd.s32 %s449, 1
      %p453 = scmp.eq.s32.totalorder %s37, 2
      %p454 = scmp.ne.s32.totalorder %s449, %s451
      %p455 = scmp.eq.s32.totalorder %s37, 0
      %p456 = por %p454, %p455
      %p457 = scmp.ne.s32.totalorder %s449, %s451
      %p458 = scmp.eq.s32.totalorder %s42, 2
      %p459 = por %p457, %p458
      %p460 = scmp.ne.s32.totalorder %s451, %s452
      %p461 = scmp.eq.s32.totalorder %s42, 0
      %p462 = por %p460, %p461
      %p463 = scmp.ne.s32.totalorder %s451, %s452
      %p464 = scmp.eq.s32.totalorder %s43, 2
      %p465 = por %p463, %p464
      %p467 = scmp.ne.s32.totalorder %s452, %s466
      %p468 = scmp.eq.s32.totalorder %s43, 0
      %p469 = por %p467, %p468
      %s471 = sadd.s32 %s470, 1
      %p474 = scmp.eq.s32.totalorder %s37, 2
      %p475 = scmp.ne.s32.totalorder %s470, %s472
      %p476 = scmp.eq.s32.totalorder %s37, 0
      %p477 = por %p475, %p476
      %p478 = scmp.ne.s32.totalorder %s470, %s472
      %p479 = scmp.eq.s32.totalorder %s42, 2
      %p480 = por %p478, %p479
      %p481 = scmp.ne.s32.totalorder %s472, %s473
      %p482 = scmp.eq.s32.totalorder %s42, 0
      %p483 = por %p481, %p482
      %p484 = scmp.ne.s32.totalorder %s472, %s473
      %p485 = scmp.eq.s32.totalorder %s43, 2
      %p486 = por %p484, %p485
      %p488 = scmp.ne.s32.totalorder %s473, %s487
      %p489 = scmp.eq.s32.totalorder %s43, 0
      %p490 = por %p488, %p489
      %p491 = scmp.le.s32.totalorder 1, %s37
      %p492 = scmp.lt.s32.totalorder %s37, 4
      %p493 = pnand %p491, %p492
      %p494 = pneg %p493
      // Predicated region
      $region9: #{ppmil_forward.1} parent=5 // pred_check
        _
      $region10: #{ppmil_forward.1} parent=5 // pred_check_branch
        %496 = sbr.rel (%p493) target = $region12
      $region11: #{ppmil_forward.1} parent=5 // pred_region
        %s497 = ssub.s32 %s37, 1
        // Predicated region
        $region13: #{ppmil_forward.1} parent=11 // pred_check
          %p498 = pneg %p84
        $region14: #{ppmil_forward.1} parent=11 // pred_check_branch
          %500 = sbr.rel (%p498) target = $region16
        $region15: #{ppmil_forward.1} parent=11 // pred_region
          _
        $region16: #{ppmil_forward.1} parent=11 // pred_fallthru
          _
        // Predicated region
        $region17: #{ppmil_forward.1} parent=11 // pred_check
          %p501 = pneg %p105
        $region18: #{ppmil_forward.1} parent=11 // pred_check_branch
          %503 = sbr.rel (%p501) target = $region20
        $region19: #{ppmil_forward.1} parent=11 // pred_region
          %s505 = ssub.s32 8192, 8192
          %506 = vsyncadd [#allocation8], %s505
          %s507 = sshll.u32 [#allocation7], 4
          %s508 = int_to_ptr.vmem [resolvable:$true] %s507
          %513 = dma.hbm_to_vmem [thread:$0]  %s2, 8192, %s508, [#allocation8], 256, 256, 16
        $region20: #{ppmil_forward.1} parent=11 // pred_fallthru
          _
        // Predicated region
        $region21: #{ppmil_forward.1} parent=11 // pred_check
          %p514 = pneg %p126
        $region22: #{ppmil_forward.1} parent=11 // pred_check_branch
          %516 = sbr.rel (%p514) target = $region24
        $region23: #{ppmil_forward.1} parent=11 // pred_region
          _
        $region24: #{ppmil_forward.1} parent=11 // pred_fallthru
          _
        // Predicated region
        $region25: #{ppmil_forward.1} parent=11 // pred_check
          %p517 = pneg %p147
        $region26: #{ppmil_forward.1} parent=11 // pred_check_branch
          %519 = sbr.rel (%p517) target = $region28
        $region27: #{ppmil_forward.1} parent=11 // pred_region
          %s521 = ssub.s32 16384, 16384
          %522 = vsyncadd [#allocation11], %s521
          %s523 = sshll.u32 [#allocation10], 4
          %s524 = int_to_ptr.vmem [resolvable:$true] %s523
          %529 = dma.hbm_to_vmem [thread:$0]  %s4, 16384, %s524, [#allocation11], 256, 256, 16
        $region28: #{ppmil_forward.1} parent=11 // pred_fallthru
          _
        // Predicated region
        $region29: #{ppmil_forward.1} parent=11 // pred_check
          %p530 = pneg %p168
        $region30: #{ppmil_forward.1} parent=11 // pred_check_branch
          %532 = sbr.rel (%p530) target = $region32
        $region31: #{ppmil_forward.1} parent=11 // pred_region
          _
        $region32: #{ppmil_forward.1} parent=11 // pred_fallthru
          _
        // Predicated region
        $region33: #{ppmil_forward.1} parent=11 // pred_check
          %p533 = pneg %p189
        $region34: #{ppmil_forward.1} parent=11 // pred_check_branch
          %535 = sbr.rel (%p533) target = $region36
        $region35: #{ppmil_forward.1} parent=11 // pred_region
          _
        $region36: #{ppmil_forward.1} parent=11 // pred_fallthru
          _
        // Predicated region
        $region37: #{ppmil_forward.1} parent=11 // pred_check
          %p536 = pneg %p210
        $region38: #{ppmil_forward.1} parent=11 // pred_check_branch
          %538 = sbr.rel (%p536) target = $region40
        $region39: #{ppmil_forward.1} parent=11 // pred_region
          _
        $region40: #{ppmil_forward.1} parent=11 // pred_fallthru
          _
        // Predicated region
        $region41: #{ppmil_forward.1} parent=11 // pred_check
          %p539 = pneg %p231
        $region42: #{ppmil_forward.1} parent=11 // pred_check_branch
          %541 = sbr.rel (%p539) target = $region44
        $region43: #{ppmil_forward.1} parent=11 // pred_region
          %s543 = ssub.s32 8192, 8192
          %544 = vsyncadd [#allocation11], %s543
          %s545 = sshll.u32 [#allocation12], 4
          %s546 = int_to_ptr.vmem [resolvable:$true] %s545
          %551 = dma.hbm_to_vmem [thread:$0]  %s8, 8192, %s546, [#allocation11], 256, 256, 16
        $region44: #{ppmil_forward.1} parent=11 // pred_fallthru
          _
        // Predicated region
        $region45: #{ppmil_forward.1} parent=11 // pred_check
          %p552 = pneg %p252
        $region46: #{ppmil_forward.1} parent=11 // pred_check_branch
          %554 = sbr.rel (%p552) target = $region48
        $region47: #{ppmil_forward.1} parent=11 // pred_region
          _
        $region48: #{ppmil_forward.1} parent=11 // pred_fallthru
          _
        // Predicated region
        $region49: #{ppmil_forward.1} parent=11 // pred_check
          %p555 = pneg %p273
        $region50: #{ppmil_forward.1} parent=11 // pred_check_branch
          %557 = sbr.rel (%p555) target = $region52
        $region51: #{ppmil_forward.1} parent=11 // pred_region
          %s559 = ssub.s32 16384, 16384
          %560 = vsyncadd [#allocation14], %s559
          %s561 = sshll.u32 [#allocation13], 4
          %s562 = int_to_ptr.vmem [resolvable:$true] %s561
          %567 = dma.hbm_to_vmem [thread:$0]  %s10, 16384, %s562, [#allocation14], 256, 256, 16
        $region52: #{ppmil_forward.1} parent=11 // pred_fallthru
          _
        // Predicated region
        $region53: #{ppmil_forward.1} parent=11 // pred_check
          %p568 = pneg %p294
        $region54: #{ppmil_forward.1} parent=11 // pred_check_branch
          %570 = sbr.rel (%p568) target = $region56
        $region55: #{ppmil_forward.1} parent=11 // pred_region
          _
        $region56: #{ppmil_forward.1} parent=11 // pred_fallthru
          _
        // Predicated region
        $region57: #{ppmil_forward.1} parent=11 // pred_check
          %p571 = pneg %p315
        $region58: #{ppmil_forward.1} parent=11 // pred_check_branch
          %573 = sbr.rel (%p571) target = $region60
        $region59: #{ppmil_forward.1} parent=11 // pred_region
          _
        $region60: #{ppmil_forward.1} parent=11 // pred_fallthru
          _
        // Predicated region
        $region61: #{ppmil_forward.1} parent=11 // pred_check
          %p574 = pneg %p336
        $region62: #{ppmil_forward.1} parent=11 // pred_check_branch
          %576 = sbr.rel (%p574) target = $region64
        $region63: #{ppmil_forward.1} parent=11 // pred_region
          _
        $region64: #{ppmil_forward.1} parent=11 // pred_fallthru
          _
        // Predicated region
        $region65: #{ppmil_forward.1} parent=11 // pred_check
          %p577 = pneg %p357
        $region66: #{ppmil_forward.1} parent=11 // pred_check_branch
          %579 = sbr.rel (%p577) target = $region68
        $region67: #{ppmil_forward.1} parent=11 // pred_region
          %s581 = ssub.s32 16384, 16384
          %582 = vsyncadd [#allocation14], %s581
          %s583 = sshll.u32 [#allocation15], 4
          %s584 = int_to_ptr.vmem [resolvable:$true] %s583
          %589 = dma.hbm_to_vmem [thread:$0]  %s14, 16384, %s584, [#allocation14], 256, 256, 16
        $region68: #{ppmil_forward.1} parent=11 // pred_fallthru
          _
        // Predicated region
        $region69: #{ppmil_forward.1} parent=11 // pred_check
          %p590 = pneg %p378
        $region70: #{ppmil_forward.1} parent=11 // pred_check_branch
          %592 = sbr.rel (%p590) target = $region72
        $region71: #{ppmil_forward.1} parent=11 // pred_region
          %s594 = ssub.s32 16384, 16384
          %595 = vsyncadd [#allocation17], %s594
          %s596 = sshll.u32 [#allocation16], 4
          %s597 = int_to_ptr.vmem [resolvable:$true] %s596
          %602 = dma.hbm_to_vmem [thread:$0]  %s15, 16384, %s597, [#allocation17], 256, 256, 16
        $region72: #{ppmil_forward.1} parent=11 // pred_fallthru
          _
        // Predicated region
        $region73: #{ppmil_forward.1} parent=11 // pred_check
          %p603 = pneg %p399
        $region74: #{ppmil_forward.1} parent=11 // pred_check_branch
          %605 = sbr.rel (%p603) target = $region76
        $region75: #{ppmil_forward.1} parent=11 // pred_region
          _
        $region76: #{ppmil_forward.1} parent=11 // pred_fallthru
          _
        // Predicated region
        $region77: #{ppmil_forward.1} parent=11 // pred_check
          %p606 = pneg %p420
        $region78: #{ppmil_forward.1} parent=11 // pred_check_branch
          %608 = sbr.rel (%p606) target = $region80
        $region79: #{ppmil_forward.1} parent=11 // pred_region
          _
        $region80: #{ppmil_forward.1} parent=11 // pred_fallthru
          _
        // Predicated region
        $region81: #{ppmil_forward.1} parent=11 // pred_check
          %p609 = pneg %p441
        $region82: #{ppmil_forward.1} parent=11 // pred_check_branch
          %611 = sbr.rel (%p609) target = $region84
        $region83: #{ppmil_forward.1} parent=11 // pred_region
          _
        $region84: #{ppmil_forward.1} parent=11 // pred_fallthru
          _
      $region12: #{ppmil_forward.1} parent=5 // pred_fallthru
        _
      %p612 = scmp.lt.s32.totalorder %s37, 3
      // Predicated region
      $region85: #{ppmil_forward.1} parent=5 // pred_check
        %p613 = pneg %p612
      $region86: #{ppmil_forward.1} parent=5 // pred_check_branch
        %615 = sbr.rel (%p613) target = $region88
      $region87: #{ppmil_forward.1} parent=5 // pred_region
        // Predicated region
        $region89: #{ppmil_forward.1} parent=87 // pred_check
          %p616 = pneg %p57
        $region90: #{ppmil_forward.1} parent=87 // pred_check_branch
          %618 = sbr.rel (%p616) target = $region92
        $region91: #{ppmil_forward.1} parent=87 // pred_region
          %s619 = smul.u32 2, %s37
          %s620 = ssub.s32 5, %s619
          %p621 = scmp.lt.s32.totalorder %s620, 2
          %s622 = scalar_select %p621, %s620, 2
          %s623 = smul.u32 128, %s622
          %s624 = smul.u32 %s623, 2
          %p625 = scmp.lt.s32.totalorder %s619, 4
          %s626 = scalar_select %p625, %s619, 4
          %s627 = smul.addr %s626, 2
          %s628 = smul.addr %s627, 8
          %s629 = scalar_lea.vmem %s0, %s628
          %s630 = smul.u32 2, %s37
          %s631 = ssub.s32 5, %s630
          %p632 = scmp.lt.s32.totalorder %s631, 2
          %s633 = scalar_select %p632, %s631, 2
          %s634 = smul.u32 128, %s633
          %s635 = smul.u32 %s634, 2
        $region92: #{ppmil_forward.1} parent=87 // pred_fallthru
          _
      $region88: #{ppmil_forward.1} parent=5 // pred_fallthru
        _
      %p636 = scmp.le.s32.totalorder 1, %s37
      %p637 = scmp.lt.s32.totalorder %s37, 4
      %p638 = pnand %p636, %p637
      %p639 = pneg %p638
      // Predicated region
      $region93: #{ppmil_forward.1} parent=5 // pred_check
        _
      $region94: #{ppmil_forward.1} parent=5 // pred_check_branch
        %641 = sbr.rel (%p638) target = $region96
      $region95: #{ppmil_forward.1} parent=5 // pred_region
        %s642 = ssub.s32 %s37, 1
        // Predicated region
        $region97: #{ppmil_forward.1} parent=95 // pred_check
          %p643 = pneg %p105
        $region98: #{ppmil_forward.1} parent=95 // pred_check_branch
          %645 = sbr.rel (%p643) target = $region100
        $region99: #{ppmil_forward.1} parent=95 // pred_region
          %646 = dma.done [#allocation8], 8192
        $region100: #{ppmil_forward.1} parent=95 // pred_fallthru
          _
        // Predicated region
        $region101: #{ppmil_forward.1} parent=95 // pred_check
          %p647 = pneg %p147
        $region102: #{ppmil_forward.1} parent=95 // pred_check_branch
          %649 = sbr.rel (%p647) target = $region104
        $region103: #{ppmil_forward.1} parent=95 // pred_region
          %650 = dma.done [#allocation11], 16384
        $region104: #{ppmil_forward.1} parent=95 // pred_fallthru
          _
        // Predicated region
        $region105: #{ppmil_forward.1} parent=95 // pred_check
          %p651 = pneg %p231
        $region106: #{ppmil_forward.1} parent=95 // pred_check_branch
          %653 = sbr.rel (%p651) target = $region108
        $region107: #{ppmil_forward.1} parent=95 // pred_region
          %654 = dma.done [#allocation11], 8192
        $region108: #{ppmil_forward.1} parent=95 // pred_fallthru
          _
        // Predicated region
        $region109: #{ppmil_forward.1} parent=95 // pred_check
          %p655 = pneg %p273
        $region110: #{ppmil_forward.1} parent=95 // pred_check_branch
          %657 = sbr.rel (%p655) target = $region112
        $region111: #{ppmil_forward.1} parent=95 // pred_region
          %658 = dma.done [#allocation14], 16384
        $region112: #{ppmil_forward.1} parent=95 // pred_fallthru
          _
        // Predicated region
        $region113: #{ppmil_forward.1} parent=95 // pred_check
          %p659 = pneg %p357
        $region114: #{ppmil_forward.1} parent=95 // pred_check_branch
          %661 = sbr.rel (%p659) target = $region116
        $region115: #{ppmil_forward.1} parent=95 // pred_region
          %662 = dma.done [#allocation14], 16384
        $region116: #{ppmil_forward.1} parent=95 // pred_fallthru
          _
        // Predicated region
        $region117: #{ppmil_forward.1} parent=95 // pred_check
          %p663 = pneg %p378
        $region118: #{ppmil_forward.1} parent=95 // pred_check_branch
          %665 = sbr.rel (%p663) target = $region120
        $region119: #{ppmil_forward.1} parent=95 // pred_region
          %666 = dma.done [#allocation17], 16384
        $region120: #{ppmil_forward.1} parent=95 // pred_fallthru
          _
        %s667 = smul.u32 2, %s42
        %s668 = ssub.s32 5, %s667
        %p669 = scmp.lt.s32.totalorder %s668, 2
        %s670 = scalar_select %p669, %s668, 2
        %s671 = smul.u32 128, %s670
        %s672 = smul.u32 %s671, 2
        %p673 = scmp.lt.s32.totalorder %s667, 4
        %s674 = scalar_select %p673, %s667, 4
        %s675 = smul.addr %s674, 2
        %s676 = smul.addr %s675, 8
        %s677 = scalar_lea.vmem %s0, %s676
        %p678 = pneg %p63
        %p679 = pneg %p60
        %p680 = pneg %p84
        %p681 = pneg %p81
        %p682 = pneg %p105
        %p683 = pneg %p102
        %p684 = pneg %p126
        %p685 = pneg %p123
        %p686 = pneg %p147
        %p687 = pneg %p144
        %p688 = pneg %p168
        %p689 = pneg %p165
        %p690 = pneg %p189
        %p691 = pneg %p186
        %p692 = pneg %p210
        %p693 = pneg %p207
        %p694 = pneg %p231
        %p695 = pneg %p228
        %p696 = pneg %p252
        %p697 = pneg %p249
        %p698 = pneg %p273
        %p699 = pneg %p270
        %p700 = pneg %p294
        %p701 = pneg %p291
        %p702 = pneg %p315
        %p703 = pneg %p312
        %p704 = pneg %p336
        %p705 = pneg %p333
        %p706 = pneg %p357
        %p707 = pneg %p354
        %p708 = pneg %p378
        %p709 = pneg %p375
        %p710 = pneg %p399
        %p711 = pneg %p396
        %p712 = pneg %p420
        %p713 = pneg %p417
        %p714 = pneg %p441
        %p715 = pneg %p438
        %p716 = pneg %p462
        %p717 = pneg %p459
        %p718 = pneg %p483
        %p719 = pneg %p480
        %s720 = smul.u32 2, %s42
        %s721 = ssub.s32 5, %s720
        %p722 = scmp.lt.s32.totalorder %s721, 2
        %s723 = scalar_select %p722, %s721, 2
        %s724 = smul.u32 128, %s723
        %s725 = smul.u32 %s724, 2
        %p726 = scmp.lt.s32.totalorder %s720, 4
        %s727 = scalar_select %p726, %s720, 4
        %s728 = smul.addr %s727, 2
        %s729 = smul.addr %s728, 8
        %s730 = scalar_lea.vmem %s0, %s729
        %s731 = smul.u32 2, %s42
        %s732 = ssub.s32 5, %s731
        %p733 = scmp.lt.s32.totalorder %s732, 2
        %s734 = scalar_select %p733, %s732, 2
        %s735 = smul.u32 128, %s734
        %s736 = smul.u32 %s735, 2
        %p738 = scmp.eq.s32.totalorder %s42, 0
        // Predicated region
        $region121: #{ppmil_forward.1} parent=95 // pred_check
          %p739 = pneg %p738
        $region122: #{ppmil_forward.1} parent=95 // pred_check_branch
          %741 = sbr.rel (%p739) target = $region124
        $region123: #{ppmil_forward.1} parent=95 // pred_region
          %vm742 = vcmask 0
          %743 = vst.msk [vmem:[#allocation2] sm:$0x1] %vm742, -inf
          %744 = vst.msk [vmem:[#allocation3] sm:$0x1] %vm742, 0.0
          %v745 = vlaneseq
          %vm746 = vcmp.ge.s32.totalorder %v745, 0
          %vm747 = vcmp.lt.s32.totalorder %v745, 512
          %vm748 = vmand %vm746, %vm747
          %749 = vst.msk [vmem:[#allocation4] sm:$0xf] %vm748, 0.0
        $region124: #{ppmil_forward.1} parent=95 // pred_fallthru
          _
        %s750 = smul.u32 %s42, 16
        %v751 = vlaneseq
        %v752 = vshrl.u32 %v751, 7
        %v753 = vadd.s32 %v752, 8
        %v754 = vstv %s750
        %v755 = vadd.s32 %v754, %v752
        %v756 = vadd.s32 %v754, %v753
        %vm757 = vcmp.lt.s32.totalorder %v755, 40
        %vm758 = vcmp.lt.s32.totalorder %v756, 40
        %v759 = vld [vmem:[%s730] sm:$0xff]
        %v760 = vld [vmem:[%s730 + $0x8] sm:$0xff]
        %v761 = vld [vmem:[%s730 + $0x10] sm:$0xff]
        %v762 = vld [vmem:[%s730 + $0x18] sm:$0xff]
        %v763 = vpack.c.bf16 %v761, %v759
        %v764 = vpack.c.bf16 %v762, %v760
        %v765 = vld [vmem:[#allocation7] sm:$0xff]
        %v766 = vld [vmem:[#allocation7 + $0x8] sm:$0xff]
        %v767 = vld [vmem:[#allocation7 + $0x10] sm:$0xff]
        %v768 = vld [vmem:[#allocation7 + $0x18] sm:$0xff]
        %v769 = vld [vmem:[#allocation7 + $0x20] sm:$0xff]
        %v770 = vld [vmem:[#allocation7 + $0x28] sm:$0xff]
        %v771 = vld [vmem:[#allocation7 + $0x30] sm:$0xff]
        %v772 = vld [vmem:[#allocation7 + $0x38] sm:$0xff]
        %v773 = vld [vmem:[#allocation7 + $0x40] sm:$0xff]
        %v774 = vld [vmem:[#allocation7 + $0x48] sm:$0xff]
        %v775 = vld [vmem:[#allocation7 + $0x50] sm:$0xff]
        %v776 = vld [vmem:[#allocation7 + $0x58] sm:$0xff]
        %v777 = vld [vmem:[#allocation7 + $0x60] sm:$0xff]
        %v778 = vld [vmem:[#allocation7 + $0x68] sm:$0xff]
        %v779 = vld [vmem:[#allocation7 + $0x70] sm:$0xff]
        %v780 = vld [vmem:[#allocation7 + $0x78] sm:$0xff]
        %v781 = vld [vmem:[#allocation7 + $0x80] sm:$0xff]
        %v782 = vld [vmem:[#allocation7 + $0x88] sm:$0xff]
        %v783 = vld [vmem:[#allocation7 + $0x90] sm:$0xff]
        %v784 = vld [vmem:[#allocation7 + $0x98] sm:$0xff]
        %v785 = vld [vmem:[#allocation7 + $0xa0] sm:$0xff]
        %v786 = vld [vmem:[#allocation7 + $0xa8] sm:$0xff]
        %v787 = vld [vmem:[#allocation7 + $0xb0] sm:$0xff]
        %v788 = vld [vmem:[#allocation7 + $0xb8] sm:$0xff]
        %v789 = vld [vmem:[#allocation7 + $0xc0] sm:$0xff]
        %v790 = vld [vmem:[#allocation7 + $0xc8] sm:$0xff]
        %v791 = vld [vmem:[#allocation7 + $0xd0] sm:$0xff]
        %v792 = vld [vmem:[#allocation7 + $0xd8] sm:$0xff]
        %v793 = vld [vmem:[#allocation7 + $0xe0] sm:$0xff]
        %v794 = vld [vmem:[#allocation7 + $0xe8] sm:$0xff]
        %v795 = vld [vmem:[#allocation7 + $0xf0] sm:$0xff]
        %v796 = vld [vmem:[#allocation7 + $0xf8] sm:$0xff]
        %v797 = vld [vmem:[#allocation7 + $0x100] sm:$0xff]
        %v798 = vld [vmem:[#allocation7 + $0x108] sm:$0xff]
        %v799 = vld [vmem:[#allocation7 + $0x110] sm:$0xff]
        %v800 = vld [vmem:[#allocation7 + $0x118] sm:$0xff]
        %v801 = vld [vmem:[#allocation7 + $0x120] sm:$0xff]
        %v802 = vld [vmem:[#allocation7 + $0x128] sm:$0xff]
        %v803 = vld [vmem:[#allocation7 + $0x130] sm:$0xff]
        %v804 = vld [vmem:[#allocation7 + $0x138] sm:$0xff]
        %v805 = vld [vmem:[#allocation7 + $0x140] sm:$0xff]
        %v806 = vld [vmem:[#allocation7 + $0x148] sm:$0xff]
        %v807 = vld [vmem:[#allocation7 + $0x150] sm:$0xff]
        %v808 = vld [vmem:[#allocation7 + $0x158] sm:$0xff]
        %v809 = vld [vmem:[#allocation7 + $0x160] sm:$0xff]
        %v810 = vld [vmem:[#allocation7 + $0x168] sm:$0xff]
        %v811 = vld [vmem:[#allocation7 + $0x170] sm:$0xff]
        %v812 = vld [vmem:[#allocation7 + $0x178] sm:$0xff]
        %v813 = vld [vmem:[#allocation7 + $0x180] sm:$0xff]
        %v814 = vld [vmem:[#allocation7 + $0x188] sm:$0xff]
        %v815 = vld [vmem:[#allocation7 + $0x190] sm:$0xff]
        %v816 = vld [vmem:[#allocation7 + $0x198] sm:$0xff]
        %v817 = vld [vmem:[#allocation7 + $0x1a0] sm:$0xff]
        %v818 = vld [vmem:[#allocation7 + $0x1a8] sm:$0xff]
        %v819 = vld [vmem:[#allocation7 + $0x1b0] sm:$0xff]
        %v820 = vld [vmem:[#allocation7 + $0x1b8] sm:$0xff]
        %v821 = vld [vmem:[#allocation7 + $0x1c0] sm:$0xff]
        %v822 = vld [vmem:[#allocation7 + $0x1c8] sm:$0xff]
        %v823 = vld [vmem:[#allocation7 + $0x1d0] sm:$0xff]
        %v824 = vld [vmem:[#allocation7 + $0x1d8] sm:$0xff]
        %v825 = vld [vmem:[#allocation7 + $0x1e0] sm:$0xff]
        %v826 = vld [vmem:[#allocation7 + $0x1e8] sm:$0xff]
        %v827 = vld [vmem:[#allocation7 + $0x1f0] sm:$0xff]
        %v828 = vld [vmem:[#allocation7 + $0x1f8] sm:$0xff]
        %v829 = vld [vmem:[%s3] sm:$0xf]
        %v831 = vlaneseq
        %v832 = vshrl.u32 %v831, 7
        %v833 = vsub.s32 0, %v832
        %v834 = vrot.slane %v829, %v833
        %v835 = vlaneseq
        %v836 = vshrl.u32 %v835, 7
        %v837 = vsub.s32 1, %v836
        %v838 = vrot.slane %v829, %v837
        %v839 = vlaneseq
        %v840 = vshrl.u32 %v839, 7
        %v841 = vsub.s32 2, %v840
        %v842 = vrot.slane %v829, %v841
        %v843 = vlaneseq
        %v844 = vshrl.u32 %v843, 7
        %v845 = vsub.s32 3, %v844
        %v846 = vrot.slane %v829, %v845
        %v915 = vunpack.c.l.b16 %v765
        %v916 = vunpack.c.h.b16 %v765
        %v917 = vunpack.c.l.b16 %v766
        %v918 = vunpack.c.h.b16 %v766
        %v919 = vunpack.c.l.b16 %v767
        %v920 = vunpack.c.h.b16 %v767
        %v921 = vunpack.c.l.b16 %v768
        %v922 = vunpack.c.h.b16 %v768
        %v923 = vunpack.c.l.b16 %v769
        %v924 = vunpack.c.h.b16 %v769
        %v925 = vunpack.c.l.b16 %v770
        %v926 = vunpack.c.h.b16 %v770
        %v927 = vunpack.c.l.b16 %v771
        %v928 = vunpack.c.h.b16 %v771
        %v929 = vunpack.c.l.b16 %v772
        %v930 = vunpack.c.h.b16 %v772
        %v931 = vunpack.c.l.b16 %v773
        %v932 = vunpack.c.h.b16 %v773
        %v933 = vunpack.c.l.b16 %v774
        %v934 = vunpack.c.h.b16 %v774
        %v935 = vunpack.c.l.b16 %v775
        %v936 = vunpack.c.h.b16 %v775
        %v937 = vunpack.c.l.b16 %v776
        %v938 = vunpack.c.h.b16 %v776
        %v939 = vunpack.c.l.b16 %v777
        %v940 = vunpack.c.h.b16 %v777
        %v941 = vunpack.c.l.b16 %v778
        %v942 = vunpack.c.h.b16 %v778
        %v943 = vunpack.c.l.b16 %v779
        %v944 = vunpack.c.h.b16 %v779
        %v945 = vunpack.c.l.b16 %v780
        %v946 = vunpack.c.h.b16 %v780
        %v947 = vunpack.c.l.b16 %v781
        %v948 = vunpack.c.h.b16 %v781
        %v949 = vunpack.c.l.b16 %v782
        %v950 = vunpack.c.h.b16 %v782
        %v951 = vunpack.c.l.b16 %v783
        %v952 = vunpack.c.h.b16 %v783
        %v953 = vunpack.c.l.b16 %v784
        %v954 = vunpack.c.h.b16 %v784
        %v955 = vunpack.c.l.b16 %v785
        %v956 = vunpack.c.h.b16 %v785
        %v957 = vunpack.c.l.b16 %v786
        %v958 = vunpack.c.h.b16 %v786
        %v959 = vunpack.c.l.b16 %v787
        %v960 = vunpack.c.h.b16 %v787
        %v961 = vunpack.c.l.b16 %v788
        %v962 = vunpack.c.h.b16 %v788
        %v963 = vunpack.c.l.b16 %v789
        %v964 = vunpack.c.h.b16 %v789
        %v965 = vunpack.c.l.b16 %v790
        %v966 = vunpack.c.h.b16 %v790
        %v967 = vunpack.c.l.b16 %v791
        %v968 = vunpack.c.h.b16 %v791
        %v969 = vunpack.c.l.b16 %v792
        %v970 = vunpack.c.h.b16 %v792
        %v971 = vunpack.c.l.b16 %v793
        %v972 = vunpack.c.h.b16 %v793
        %v973 = vunpack.c.l.b16 %v794
        %v974 = vunpack.c.h.b16 %v794
        %v975 = vunpack.c.l.b16 %v795
        %v976 = vunpack.c.h.b16 %v795
        %v977 = vunpack.c.l.b16 %v796
        %v978 = vunpack.c.h.b16 %v796
        %v979 = vunpack.c.l.b16 %v797
        %v980 = vunpack.c.h.b16 %v797
        %v981 = vunpack.c.l.b16 %v798
        %v982 = vunpack.c.h.b16 %v798
        %v983 = vunpack.c.l.b16 %v799
        %v984 = vunpack.c.h.b16 %v799
        %v985 = vunpack.c.l.b16 %v800
        %v986 = vunpack.c.h.b16 %v800
        %v987 = vunpack.c.l.b16 %v801
        %v988 = vunpack.c.h.b16 %v801
        %v989 = vunpack.c.l.b16 %v802
        %v990 = vunpack.c.h.b16 %v802
        %v991 = vunpack.c.l.b16 %v803
        %v992 = vunpack.c.h.b16 %v803
        %v993 = vunpack.c.l.b16 %v804
        %v994 = vunpack.c.h.b16 %v804
        %v995 = vunpack.c.l.b16 %v805
        %v996 = vunpack.c.h.b16 %v805
        %v997 = vunpack.c.l.b16 %v806
        %v998 = vunpack.c.h.b16 %v806
        %v999 = vunpack.c.l.b16 %v807
        %v1000 = vunpack.c.h.b16 %v807
        %v1001 = vunpack.c.l.b16 %v808
        %v1002 = vunpack.c.h.b16 %v808
        %v1003 = vunpack.c.l.b16 %v809
        %v1004 = vunpack.c.h.b16 %v809
        %v1005 = vunpack.c.l.b16 %v810
        %v1006 = vunpack.c.h.b16 %v810
        %v1007 = vunpack.c.l.b16 %v811
        %v1008 = vunpack.c.h.b16 %v811
        %v1009 = vunpack.c.l.b16 %v812
        %v1010 = vunpack.c.h.b16 %v812
        %v1011 = vunpack.c.l.b16 %v813
        %v1012 = vunpack.c.h.b16 %v813
        %v1013 = vunpack.c.l.b16 %v814
        %v1014 = vunpack.c.h.b16 %v814
        %v1015 = vunpack.c.l.b16 %v815
        %v1016 = vunpack.c.h.b16 %v815
        %v1017 = vunpack.c.l.b16 %v816
        %v1018 = vunpack.c.h.b16 %v816
        %v1019 = vunpack.c.l.b16 %v817
        %v1020 = vunpack.c.h.b16 %v817
        %v1021 = vunpack.c.l.b16 %v818
        %v1022 = vunpack.c.h.b16 %v818
        %v1023 = vunpack.c.l.b16 %v819
        %v1024 = vunpack.c.h.b16 %v819
        %v1025 = vunpack.c.l.b16 %v820
        %v1026 = vunpack.c.h.b16 %v820
        %v1027 = vunpack.c.l.b16 %v821
        %v1028 = vunpack.c.h.b16 %v821
        %v1029 = vunpack.c.l.b16 %v822
        %v1030 = vunpack.c.h.b16 %v822
        %v1031 = vunpack.c.l.b16 %v823
        %v1032 = vunpack.c.h.b16 %v823
        %v1033 = vunpack.c.l.b16 %v824
        %v1034 = vunpack.c.h.b16 %v824
        %v1035 = vunpack.c.l.b16 %v825
        %v1036 = vunpack.c.h.b16 %v825
        %v1037 = vunpack.c.l.b16 %v826
        %v1038 = vunpack.c.h.b16 %v826
        %v1039 = vunpack.c.l.b16 %v827
        %v1040 = vunpack.c.h.b16 %v827
        %v1041 = vunpack.c.l.b16 %v828
        %v1042 = vunpack.c.h.b16 %v828
        %v1043 = vpack.c.b16 %v919, %v915
        %v1044 = vpack.c.b16 %v920, %v916
        %v1045 = vpack.c.b16 %v921, %v917
        %v1046 = vpack.c.b16 %v922, %v918
        %v1047 = vpack.c.b16 %v927, %v923
        %v1048 = vpack.c.b16 %v928, %v924
        %v1049 = vpack.c.b16 %v929, %v925
        %v1050 = vpack.c.b16 %v930, %v926
        %v1051 = vpack.c.b16 %v935, %v931
        %v1052 = vpack.c.b16 %v936, %v932
        %v1053 = vpack.c.b16 %v937, %v933
        %v1054 = vpack.c.b16 %v938, %v934
        %v1055 = vpack.c.b16 %v943, %v939
        %v1056 = vpack.c.b16 %v944, %v940
        %v1057 = vpack.c.b16 %v945, %v941
        %v1058 = vpack.c.b16 %v946, %v942
        %v1059 = vpack.c.b16 %v951, %v947
        %v1060 = vpack.c.b16 %v952, %v948
        %v1061 = vpack.c.b16 %v953, %v949
        %v1062 = vpack.c.b16 %v954, %v950
        %v1063 = vpack.c.b16 %v959, %v955
        %v1064 = vpack.c.b16 %v960, %v956
        %v1065 = vpack.c.b16 %v961, %v957
        %v1066 = vpack.c.b16 %v962, %v958
        %v1067 = vpack.c.b16 %v967, %v963
        %v1068 = vpack.c.b16 %v968, %v964
        %v1069 = vpack.c.b16 %v969, %v965
        %v1070 = vpack.c.b16 %v970, %v966
        %v1071 = vpack.c.b16 %v975, %v971
        %v1072 = vpack.c.b16 %v976, %v972
        %v1073 = vpack.c.b16 %v977, %v973
        %v1074 = vpack.c.b16 %v978, %v974
        %v1075 = vpack.c.b16 %v983, %v979
        %v1076 = vpack.c.b16 %v984, %v980
        %v1077 = vpack.c.b16 %v985, %v981
        %v1078 = vpack.c.b16 %v986, %v982
        %v1079 = vpack.c.b16 %v991, %v987
        %v1080 = vpack.c.b16 %v992, %v988
        %v1081 = vpack.c.b16 %v993, %v989
        %v1082 = vpack.c.b16 %v994, %v990
        %v1083 = vpack.c.b16 %v999, %v995
        %v1084 = vpack.c.b16 %v1000, %v996
        %v1085 = vpack.c.b16 %v1001, %v997
        %v1086 = vpack.c.b16 %v1002, %v998
        %v1087 = vpack.c.b16 %v1007, %v1003
        %v1088 = vpack.c.b16 %v1008, %v1004
        %v1089 = vpack.c.b16 %v1009, %v1005
        %v1090 = vpack.c.b16 %v1010, %v1006
        %v1091 = vpack.c.b16 %v1015, %v1011
        %v1092 = vpack.c.b16 %v1016, %v1012
        %v1093 = vpack.c.b16 %v1017, %v1013
        %v1094 = vpack.c.b16 %v1018, %v1014
        %v1095 = vpack.c.b16 %v1023, %v1019
        %v1096 = vpack.c.b16 %v1024, %v1020
        %v1097 = vpack.c.b16 %v1025, %v1021
        %v1098 = vpack.c.b16 %v1026, %v1022
        %v1099 = vpack.c.b16 %v1031, %v1027
        %v1100 = vpack.c.b16 %v1032, %v1028
        %v1101 = vpack.c.b16 %v1033, %v1029
        %v1102 = vpack.c.b16 %v1034, %v1030
        %v1103 = vpack.c.b16 %v1039, %v1035
        %v1104 = vpack.c.b16 %v1040, %v1036
        %v1105 = vpack.c.b16 %v1041, %v1037
        %v1106 = vpack.c.b16 %v1042, %v1038
        %1171 = vmatprep.subr.bf16.mxu0 %v1072
        %1172 = vmatpush1.bf16.msra.mxu0 %v1071
        %1173 = vmatprep.subr.bf16.mxu0 %v1068
        %1174 = vmatpush1.bf16.msra.mxu0 %v1067
        %1175 = vmatprep.subr.bf16.mxu0 %v1064
        %1176 = vmatpush1.bf16.msra.mxu0 %v1063
        %1177 = vmatprep.subr.bf16.mxu0 %v1060
        %1178 = vmatpush1.bf16.msra.mxu0 %v1059
        %1179 = vmatprep.subr.bf16.mxu0 %v1056
        %1180 = vmatpush1.bf16.msra.mxu0 %v1055
        %1181 = vmatprep.subr.bf16.mxu0 %v1052
        %1182 = vmatpush1.bf16.msra.mxu0 %v1051
        %1183 = vmatprep.subr.bf16.mxu0 %v1048
        %1184 = vmatpush1.bf16.msra.mxu0 %v1047
        %1185 = vmatprep.subr.bf16.mxu0 %v1044
        %1186 = vmatpush1.bf16.msra.mxu0 %v1043
        %1187 = vmatprep.subr.bf16.mxu0 %v1104
        %1188 = vmatpush2.bf16.msra.mxu0 %v1103
        %1189 = vmatprep.subr.bf16.mxu0 %v1100
        %1190 = vmatpush2.bf16.msra.mxu0 %v1099
        %1191 = vmatprep.subr.bf16.mxu0 %v1096
        %1192 = vmatpush2.bf16.msra.mxu0 %v1095
        %1193 = vmatprep.subr.bf16.mxu0 %v1092
        %1194 = vmatpush2.bf16.msra.mxu0 %v1091
        %1195 = vmatprep.subr.bf16.mxu0 %v1088
        %1196 = vmatpush2.bf16.msra.mxu0 %v1087
        %1197 = vmatprep.subr.bf16.mxu0 %v1084
        %1198 = vmatpush2.bf16.msra.mxu0 %v1083
        %1199 = vmatprep.subr.bf16.mxu0 %v1080
        %1200 = vmatpush2.bf16.msra.mxu0 %v1079
        %1201 = vmatprep.subr.bf16.mxu0 %v1076
        %1202 = vmatpush2.bf16.msra.mxu0 %v1075
        %1203 = vmatprep.mubr.bf16.mxu0 %v764
        %1204 = vmatmul.mubr.bf16.gmra.mxu0 %v763
        %v1205 = vpop.f32.mrf.mxu0
        %v1206 = vadd.f32 %v834, %v1205
        %v1207 = vpop.f32.mrf.mxu0
        %v1208 = vadd.f32 %v838, %v1207
        %v1209 = vpop.f32.mrf.mxu0
        %v1210 = vadd.f32 %v834, %v1209
        %v1211 = vpop.f32.mrf.mxu0
        %v1212 = vadd.f32 %v838, %v1211
        %1213 = vdwg.mxu0
        %1214 = vmatprep.subr.bf16.mxu0 %v1074
        %1215 = vmatpush1.bf16.msra.mxu0 %v1073
        %1216 = vmatprep.subr.bf16.mxu0 %v1070
        %1217 = vmatpush1.bf16.msra.mxu0 %v1069
        %1218 = vmatprep.subr.bf16.mxu0 %v1066
        %1219 = vmatpush1.bf16.msra.mxu0 %v1065
        %1220 = vmatprep.subr.bf16.mxu0 %v1062
        %1221 = vmatpush1.bf16.msra.mxu0 %v1061
        %1222 = vmatprep.subr.bf16.mxu0 %v1058
        %1223 = vmatpush1.bf16.msra.mxu0 %v1057
        %1224 = vmatprep.subr.bf16.mxu0 %v1054
        %1225 = vmatpush1.bf16.msra.mxu0 %v1053
        %1226 = vmatprep.subr.bf16.mxu0 %v1050
        %1227 = vmatpush1.bf16.msra.mxu0 %v1049
        %1228 = vmatprep.subr.bf16.mxu0 %v1046
        %1229 = vmatpush1.bf16.msra.mxu0 %v1045
        %1230 = vmatprep.subr.bf16.mxu0 %v1106
        %1231 = vmatpush2.bf16.msra.mxu0 %v1105
        %1232 = vmatprep.subr.bf16.mxu0 %v1102
        %1233 = vmatpush2.bf16.msra.mxu0 %v1101
        %1234 = vmatprep.subr.bf16.mxu0 %v1098
        %1235 = vmatpush2.bf16.msra.mxu0 %v1097
        %1236 = vmatprep.subr.bf16.mxu0 %v1094
        %1237 = vmatpush2.bf16.msra.mxu0 %v1093
        %1238 = vmatprep.subr.bf16.mxu0 %v1090
        %1239 = vmatpush2.bf16.msra.mxu0 %v1089
        %1240 = vmatprep.subr.bf16.mxu0 %v1086
        %1241 = vmatpush2.bf16.msra.mxu0 %v1085
        %1242 = vmatprep.subr.bf16.mxu0 %v1082
        %1243 = vmatpush2.bf16.msra.mxu0 %v1081
        %1244 = vmatprep.subr.bf16.mxu0 %v1078
        %1245 = vmatpush2.bf16.msra.mxu0 %v1077
        %1246 = vmatprep.mubr.bf16.mxu0 %v764
        %1247 = vmatmul.mubr.bf16.gmra.mxu0 %v763
        %v1248 = vpop.f32.mrf.mxu0
        %v1249 = vadd.f32 %v842, %v1248
        %v1250 = vpop.f32.mrf.mxu0
        %v1251 = vadd.f32 %v846, %v1250
        %v1252 = vpop.f32.mrf.mxu0
        %v1253 = vadd.f32 %v842, %v1252
        %v1254 = vpop.f32.mrf.mxu0
        %v1255 = vadd.f32 %v846, %v1254
        %1256 = vdwg.mxu0
        %v1257 = vmax.f32 %v1206, 0.0
        %v1258 = vmax.f32 %v1208, 0.0
        %v1259 = vmax.f32 %v1249, 0.0
        %v1260 = vmax.f32 %v1251, 0.0
        %v1261 = vmax.f32 %v1210, 0.0
        %v1262 = vmax.f32 %v1212, 0.0
        %v1263 = vmax.f32 %v1253, 0.0
        %v1264 = vmax.f32 %v1255, 0.0
        %v1265 = vsel %vm757, 1, 0
        %v1266 = vsel %vm758, 1, 0
        %vm1267 = vcmp.eq.s32.totalorder %v1265, 1
        %vm1268 = vcmp.eq.s32.totalorder %v1266, 1
        %v1269 = vsel %vm1267, %v1257, 0.0
        %v1270 = vsel %vm1267, %v1258, 0.0
        %v1271 = vsel %vm1267, %v1259, 0.0
        %v1272 = vsel %vm1267, %v1260, 0.0
        %v1273 = vsel %vm1268, %v1261, 0.0
        %v1274 = vsel %vm1268, %v1262, 0.0
        %v1275 = vsel %vm1268, %v1263, 0.0
        %v1276 = vsel %vm1268, %v1264, 0.0
        %v1277 = vpack.c.bf16 %v1273, %v1269
        %v1278 = vpack.c.bf16 %v1274, %v1270
        %v1279 = vpack.c.bf16 %v1275, %v1271
        %v1280 = vpack.c.bf16 %v1276, %v1272
        %v1281 = vld [vmem:[#allocation10] sm:$0xff]
        %v1282 = vld [vmem:[#allocation10 + $0x8] sm:$0xff]
        %v1283 = vld [vmem:[#allocation10 + $0x10] sm:$0xff]
        %v1284 = vld [vmem:[#allocation10 + $0x18] sm:$0xff]
        %v1285 = vld [vmem:[#allocation10 + $0x20] sm:$0xff]
        %v1286 = vld [vmem:[#allocation10 + $0x28] sm:$0xff]
        %v1287 = vld [vmem:[#allocation10 + $0x30] sm:$0xff]
        %v1288 = vld [vmem:[#allocation10 + $0x38] sm:$0xff]
        %v1289 = vld [vmem:[#allocation10 + $0x40] sm:$0xff]
        %v1290 = vld [vmem:[#allocation10 + $0x48] sm:$0xff]
        %v1291 = vld [vmem:[#allocation10 + $0x50] sm:$0xff]
        %v1292 = vld [vmem:[#allocation10 + $0x58] sm:$0xff]
        %v1293 = vld [vmem:[#allocation10 + $0x60] sm:$0xff]
        %v1294 = vld [vmem:[#allocation10 + $0x68] sm:$0xff]
        %v1295 = vld [vmem:[#allocation10 + $0x70] sm:$0xff]
        %v1296 = vld [vmem:[#allocation10 + $0x78] sm:$0xff]
        %v1297 = vld [vmem:[#allocation10 + $0x80] sm:$0xff]
        %v1298 = vld [vmem:[#allocation10 + $0x88] sm:$0xff]
        %v1299 = vld [vmem:[#allocation10 + $0x90] sm:$0xff]
        %v1300 = vld [vmem:[#allocation10 + $0x98] sm:$0xff]
        %v1301 = vld [vmem:[#allocation10 + $0xa0] sm:$0xff]
        %v1302 = vld [vmem:[#allocation10 + $0xa8] sm:$0xff]
        %v1303 = vld [vmem:[#allocation10 + $0xb0] sm:$0xff]
        %v1304 = vld [vmem:[#allocation10 + $0xb8] sm:$0xff]
        %v1305 = vld [vmem:[#allocation10 + $0xc0] sm:$0xff]
        %v1306 = vld [vmem:[#allocation10 + $0xc8] sm:$0xff]
        %v1307 = vld [vmem:[#allocation10 + $0xd0] sm:$0xff]
        %v1308 = vld [vmem:[#allocation10 + $0xd8] sm:$0xff]
        %v1309 = vld [vmem:[#allocation10 + $0xe0] sm:$0xff]
        %v1310 = vld [vmem:[#allocation10 + $0xe8] sm:$0xff]
        %v1311 = vld [vmem:[#allocation10 + $0xf0] sm:$0xff]
        %v1312 = vld [vmem:[#allocation10 + $0xf8] sm:$0xff]
        %v1313 = vld [vmem:[#allocation10 + $0x100] sm:$0xff]
        %v1314 = vld [vmem:[#allocation10 + $0x108] sm:$0xff]
        %v1315 = vld [vmem:[#allocation10 + $0x110] sm:$0xff]
        %v1316 = vld [vmem:[#allocation10 + $0x118] sm:$0xff]
        %v1317 = vld [vmem:[#allocation10 + $0x120] sm:$0xff]
        %v1318 = vld [vmem:[#allocation10 + $0x128] sm:$0xff]
        %v1319 = vld [vmem:[#allocation10 + $0x130] sm:$0xff]
        %v1320 = vld [vmem:[#allocation10 + $0x138] sm:$0xff]
        %v1321 = vld [vmem:[#allocation10 + $0x140] sm:$0xff]
        %v1322 = vld [vmem:[#allocation10 + $0x148] sm:$0xff]
        %v1323 = vld [vmem:[#allocation10 + $0x150] sm:$0xff]
        %v1324 = vld [vmem:[#allocation10 + $0x158] sm:$0xff]
        %v1325 = vld [vmem:[#allocation10 + $0x160] sm:$0xff]
        %v1326 = vld [vmem:[#allocation10 + $0x168] sm:$0xff]
        %v1327 = vld [vmem:[#allocation10 + $0x170] sm:$0xff]
        %v1328 = vld [vmem:[#allocation10 + $0x178] sm:$0xff]
        %v1329 = vld [vmem:[#allocation10 + $0x180] sm:$0xff]
        %v1330 = vld [vmem:[#allocation10 + $0x188] sm:$0xff]
        %v1331 = vld [vmem:[#allocation10 + $0x190] sm:$0xff]
        %v1332 = vld [vmem:[#allocation10 + $0x198] sm:$0xff]
        %v1333 = vld [vmem:[#allocation10 + $0x1a0] sm:$0xff]
        %v1334 = vld [vmem:[#allocation10 + $0x1a8] sm:$0xff]
        %v1335 = vld [vmem:[#allocation10 + $0x1b0] sm:$0xff]
        %v1336 = vld [vmem:[#allocation10 + $0x1b8] sm:$0xff]
        %v1337 = vld [vmem:[#allocation10 + $0x1c0] sm:$0xff]
        %v1338 = vld [vmem:[#allocation10 + $0x1c8] sm:$0xff]
        %v1339 = vld [vmem:[#allocation10 + $0x1d0] sm:$0xff]
        %v1340 = vld [vmem:[#allocation10 + $0x1d8] sm:$0xff]
        %v1341 = vld [vmem:[#allocation10 + $0x1e0] sm:$0xff]
        %v1342 = vld [vmem:[#allocation10 + $0x1e8] sm:$0xff]
        %v1343 = vld [vmem:[#allocation10 + $0x1f0] sm:$0xff]
        %v1344 = vld [vmem:[#allocation10 + $0x1f8] sm:$0xff]
        %v1345 = vld [vmem:[#allocation10 + $0x200] sm:$0xff]
        %v1346 = vld [vmem:[#allocation10 + $0x208] sm:$0xff]
        %v1347 = vld [vmem:[#allocation10 + $0x210] sm:$0xff]
        %v1348 = vld [vmem:[#allocation10 + $0x218] sm:$0xff]
        %v1349 = vld [vmem:[#allocation10 + $0x220] sm:$0xff]
        %v1350 = vld [vmem:[#allocation10 + $0x228] sm:$0xff]
        %v1351 = vld [vmem:[#allocation10 + $0x230] sm:$0xff]
        %v1352 = vld [vmem:[#allocation10 + $0x238] sm:$0xff]
        %v1353 = vld [vmem:[#allocation10 + $0x240] sm:$0xff]
        %v1354 = vld [vmem:[#allocation10 + $0x248] sm:$0xff]
        %v1355 = vld [vmem:[#allocation10 + $0x250] sm:$0xff]
        %v1356 = vld [vmem:[#allocation10 + $0x258] sm:$0xff]
        %v1357 = vld [vmem:[#allocation10 + $0x260] sm:$0xff]
        %v1358 = vld [vmem:[#allocation10 + $0x268] sm:$0xff]
        %v1359 = vld [vmem:[#allocation10 + $0x270] sm:$0xff]
        %v1360 = vld [vmem:[#allocation10 + $0x278] sm:$0xff]
        %v1361 = vld [vmem:[#allocation10 + $0x280] sm:$0xff]
        %v1362 = vld [vmem:[#allocation10 + $0x288] sm:$0xff]
        %v1363 = vld [vmem:[#allocation10 + $0x290] sm:$0xff]
        %v1364 = vld [vmem:[#allocation10 + $0x298] sm:$0xff]
        %v1365 = vld [vmem:[#allocation10 + $0x2a0] sm:$0xff]
        %v1366 = vld [vmem:[#allocation10 + $0x2a8] sm:$0xff]
        %v1367 = vld [vmem:[#allocation10 + $0x2b0] sm:$0xff]
        %v1368 = vld [vmem:[#allocation10 + $0x2b8] sm:$0xff]
        %v1369 = vld [vmem:[#allocation10 + $0x2c0] sm:$0xff]
        %v1370 = vld [vmem:[#allocation10 + $0x2c8] sm:$0xff]
        %v1371 = vld [vmem:[#allocation10 + $0x2d0] sm:$0xff]
        %v1372 = vld [vmem:[#allocation10 + $0x2d8] sm:$0xff]
        %v1373 = vld [vmem:[#allocation10 + $0x2e0] sm:$0xff]
        %v1374 = vld [vmem:[#allocation10 + $0x2e8] sm:$0xff]
        %v1375 = vld [vmem:[#allocation10 + $0x2f0] sm:$0xff]
        %v1376 = vld [vmem:[#allocation10 + $0x2f8] sm:$0xff]
        %v1377 = vld [vmem:[#allocation10 + $0x300] sm:$0xff]
        %v1378 = vld [vmem:[#allocation10 + $0x308] sm:$0xff]
        %v1379 = vld [vmem:[#allocation10 + $0x310] sm:$0xff]
        %v1380 = vld [vmem:[#allocation10 + $0x318] sm:$0xff]
        %v1381 = vld [vmem:[#allocation10 + $0x320] sm:$0xff]
        %v1382 = vld [vmem:[#allocation10 + $0x328] sm:$0xff]
        %v1383 = vld [vmem:[#allocation10 + $0x330] sm:$0xff]
        %v1384 = vld [vmem:[#allocation10 + $0x338] sm:$0xff]
        %v1385 = vld [vmem:[#allocation10 + $0x340] sm:$0xff]
        %v1386 = vld [vmem:[#allocation10 + $0x348] sm:$0xff]
        %v1387 = vld [vmem:[#allocation10 + $0x350] sm:$0xff]
        %v1388 = vld [vmem:[#allocation10 + $0x358] sm:$0xff]
        %v1389 = vld [vmem:[#allocation10 + $0x360] sm:$0xff]
        %v1390 = vld [vmem:[#allocation10 + $0x368] sm:$0xff]
        %v1391 = vld [vmem:[#allocation10 + $0x370] sm:$0xff]
        %v1392 = vld [vmem:[#allocation10 + $0x378] sm:$0xff]
        %v1393 = vld [vmem:[#allocation10 + $0x380] sm:$0xff]
        %v1394 = vld [vmem:[#allocation10 + $0x388] sm:$0xff]
        %v1395 = vld [vmem:[#allocation10 + $0x390] sm:$0xff]
        %v1396 = vld [vmem:[#allocation10 + $0x398] sm:$0xff]
        %v1397 = vld [vmem:[#allocation10 + $0x3a0] sm:$0xff]
        %v1398 = vld [vmem:[#allocation10 + $0x3a8] sm:$0xff]
        %v1399 = vld [vmem:[#allocation10 + $0x3b0] sm:$0xff]
        %v1400 = vld [vmem:[#allocation10 + $0x3b8] sm:$0xff]
        %v1401 = vld [vmem:[#allocation10 + $0x3c0] sm:$0xff]
        %v1402 = vld [vmem:[#allocation10 + $0x3c8] sm:$0xff]
        %v1403 = vld [vmem:[#allocation10 + $0x3d0] sm:$0xff]
        %v1404 = vld [vmem:[#allocation10 + $0x3d8] sm:$0xff]
        %v1405 = vld [vmem:[#allocation10 + $0x3e0] sm:$0xff]
        %v1406 = vld [vmem:[#allocation10 + $0x3e8] sm:$0xff]
        %v1407 = vld [vmem:[#allocation10 + $0x3f0] sm:$0xff]
        %v1408 = vld [vmem:[#allocation10 + $0x3f8] sm:$0xff]
        %v1409 = vld [vmem:[%s5] sm:$0xf]
        %v1411 = vlaneseq
        %v1412 = vshrl.u32 %v1411, 7
        %v1413 = vsub.s32 0, %v1412
        %v1414 = vrot.slane %v1409, %v1413
        %v1415 = vlaneseq
        %v1416 = vshrl.u32 %v1415, 7
        %v1417 = vsub.s32 1, %v1416
        %v1418 = vrot.slane %v1409, %v1417
        %v1419 = vlaneseq
        %v1420 = vshrl.u32 %v1419, 7
        %v1421 = vsub.s32 2, %v1420
        %v1422 = vrot.slane %v1409, %v1421
        %v1423 = vlaneseq
        %v1424 = vshrl.u32 %v1423, 7
        %v1425 = vsub.s32 3, %v1424
        %v1426 = vrot.slane %v1409, %v1425
        %v1559 = vunpack.c.l.b16 %v1281
        %v1560 = vunpack.c.h.b16 %v1281
        %v1561 = vunpack.c.l.b16 %v1282
        %v1562 = vunpack.c.h.b16 %v1282
        %v1563 = vunpack.c.l.b16 %v1283
        %v1564 = vunpack.c.h.b16 %v1283
        %v1565 = vunpack.c.l.b16 %v1284
        %v1566 = vunpack.c.h.b16 %v1284
        %v1567 = vunpack.c.l.b16 %v1285
        %v1568 = vunpack.c.h.b16 %v1285
        %v1569 = vunpack.c.l.b16 %v1286
        %v1570 = vunpack.c.h.b16 %v1286
        %v1571 = vunpack.c.l.b16 %v1287
        %v1572 = vunpack.c.h.b16 %v1287
        %v1573 = vunpack.c.l.b16 %v1288
        %v1574 = vunpack.c.h.b16 %v1288
        %v1575 = vunpack.c.l.b16 %v1289
        %v1576 = vunpack.c.h.b16 %v1289
        %v1577 = vunpack.c.l.b16 %v1290
        %v1578 = vunpack.c.h.b16 %v1290
        %v1579 = vunpack.c.l.b16 %v1291
        %v1580 = vunpack.c.h.b16 %v1291
        %v1581 = vunpack.c.l.b16 %v1292
        %v1582 = vunpack.c.h.b16 %v1292
        %v1583 = vunpack.c.l.b16 %v1293
        %v1584 = vunpack.c.h.b16 %v1293
        %v1585 = vunpack.c.l.b16 %v1294
        %v1586 = vunpack.c.h.b16 %v1294
        %v1587 = vunpack.c.l.b16 %v1295
        %v1588 = vunpack.c.h.b16 %v1295
        %v1589 = vunpack.c.l.b16 %v1296
        %v1590 = vunpack.c.h.b16 %v1296
        %v1591 = vunpack.c.l.b16 %v1297
        %v1592 = vunpack.c.h.b16 %v1297
        %v1593 = vunpack.c.l.b16 %v1298
        %v1594 = vunpack.c.h.b16 %v1298
        %v1595 = vunpack.c.l.b16 %v1299
        %v1596 = vunpack.c.h.b16 %v1299
        %v1597 = vunpack.c.l.b16 %v1300
        %v1598 = vunpack.c.h.b16 %v1300
        %v1599 = vunpack.c.l.b16 %v1301
        %v1600 = vunpack.c.h.b16 %v1301
        %v1601 = vunpack.c.l.b16 %v1302
        %v1602 = vunpack.c.h.b16 %v1302
        %v1603 = vunpack.c.l.b16 %v1303
        %v1604 = vunpack.c.h.b16 %v1303
        %v1605 = vunpack.c.l.b16 %v1304
        %v1606 = vunpack.c.h.b16 %v1304
        %v1607 = vunpack.c.l.b16 %v1305
        %v1608 = vunpack.c.h.b16 %v1305
        %v1609 = vunpack.c.l.b16 %v1306
        %v1610 = vunpack.c.h.b16 %v1306
        %v1611 = vunpack.c.l.b16 %v1307
        %v1612 = vunpack.c.h.b16 %v1307
        %v1613 = vunpack.c.l.b16 %v1308
        %v1614 = vunpack.c.h.b16 %v1308
        %v1615 = vunpack.c.l.b16 %v1309
        %v1616 = vunpack.c.h.b16 %v1309
        %v1617 = vunpack.c.l.b16 %v1310
        %v1618 = vunpack.c.h.b16 %v1310
        %v1619 = vunpack.c.l.b16 %v1311
        %v1620 = vunpack.c.h.b16 %v1311
        %v1621 = vunpack.c.l.b16 %v1312
        %v1622 = vunpack.c.h.b16 %v1312
        %v1623 = vunpack.c.l.b16 %v1313
        %v1624 = vunpack.c.h.b16 %v1313
        %v1625 = vunpack.c.l.b16 %v1314
        %v1626 = vunpack.c.h.b16 %v1314
        %v1627 = vunpack.c.l.b16 %v1315
        %v1628 = vunpack.c.h.b16 %v1315
        %v1629 = vunpack.c.l.b16 %v1316
        %v1630 = vunpack.c.h.b16 %v1316
        %v1631 = vunpack.c.l.b16 %v1317
        %v1632 = vunpack.c.h.b16 %v1317
        %v1633 = vunpack.c.l.b16 %v1318
        %v1634 = vunpack.c.h.b16 %v1318
        %v1635 = vunpack.c.l.b16 %v1319
        %v1636 = vunpack.c.h.b16 %v1319
        %v1637 = vunpack.c.l.b16 %v1320
        %v1638 = vunpack.c.h.b16 %v1320
        %v1639 = vunpack.c.l.b16 %v1321
        %v1640 = vunpack.c.h.b16 %v1321
        %v1641 = vunpack.c.l.b16 %v1322
        %v1642 = vunpack.c.h.b16 %v1322
        %v1643 = vunpack.c.l.b16 %v1323
        %v1644 = vunpack.c.h.b16 %v1323
        %v1645 = vunpack.c.l.b16 %v1324
        %v1646 = vunpack.c.h.b16 %v1324
        %v1647 = vunpack.c.l.b16 %v1325
        %v1648 = vunpack.c.h.b16 %v1325
        %v1649 = vunpack.c.l.b16 %v1326
        %v1650 = vunpack.c.h.b16 %v1326
        %v1651 = vunpack.c.l.b16 %v1327
        %v1652 = vunpack.c.h.b16 %v1327
        %v1653 = vunpack.c.l.b16 %v1328
        %v1654 = vunpack.c.h.b16 %v1328
        %v1655 = vunpack.c.l.b16 %v1329
        %v1656 = vunpack.c.h.b16 %v1329
        %v1657 = vunpack.c.l.b16 %v1330
        %v1658 = vunpack.c.h.b16 %v1330
        %v1659 = vunpack.c.l.b16 %v1331
        %v1660 = vunpack.c.h.b16 %v1331
        %v1661 = vunpack.c.l.b16 %v1332
        %v1662 = vunpack.c.h.b16 %v1332
        %v1663 = vunpack.c.l.b16 %v1333
        %v1664 = vunpack.c.h.b16 %v1333
        %v1665 = vunpack.c.l.b16 %v1334
        %v1666 = vunpack.c.h.b16 %v1334
        %v1667 = vunpack.c.l.b16 %v1335
        %v1668 = vunpack.c.h.b16 %v1335
        %v1669 = vunpack.c.l.b16 %v1336
        %v1670 = vunpack.c.h.b16 %v1336
        %v1671 = vunpack.c.l.b16 %v1337
        %v1672 = vunpack.c.h.b16 %v1337
        %v1673 = vunpack.c.l.b16 %v1338
        %v1674 = vunpack.c.h.b16 %v1338
        %v1675 = vunpack.c.l.b16 %v1339
        %v1676 = vunpack.c.h.b16 %v1339
        %v1677 = vunpack.c.l.b16 %v1340
        %v1678 = vunpack.c.h.b16 %v1340
        %v1679 = vunpack.c.l.b16 %v1341
        %v1680 = vunpack.c.h.b16 %v1341
        %v1681 = vunpack.c.l.b16 %v1342
        %v1682 = vunpack.c.h.b16 %v1342
        %v1683 = vunpack.c.l.b16 %v1343
        %v1684 = vunpack.c.h.b16 %v1343
        %v1685 = vunpack.c.l.b16 %v1344
        %v1686 = vunpack.c.h.b16 %v1344
        %v1687 = vunpack.c.l.b16 %v1345
        %v1688 = vunpack.c.h.b16 %v1345
        %v1689 = vunpack.c.l.b16 %v1346
        %v1690 = vunpack.c.h.b16 %v1346
        %v1691 = vunpack.c.l.b16 %v1347
        %v1692 = vunpack.c.h.b16 %v1347
        %v1693 = vunpack.c.l.b16 %v1348
        %v1694 = vunpack.c.h.b16 %v1348
        %v1695 = vunpack.c.l.b16 %v1349
        %v1696 = vunpack.c.h.b16 %v1349
        %v1697 = vunpack.c.l.b16 %v1350
        %v1698 = vunpack.c.h.b16 %v1350
        %v1699 = vunpack.c.l.b16 %v1351
        %v1700 = vunpack.c.h.b16 %v1351
        %v1701 = vunpack.c.l.b16 %v1352
        %v1702 = vunpack.c.h.b16 %v1352
        %v1703 = vunpack.c.l.b16 %v1353
        %v1704 = vunpack.c.h.b16 %v1353
        %v1705 = vunpack.c.l.b16 %v1354
        %v1706 = vunpack.c.h.b16 %v1354
        %v1707 = vunpack.c.l.b16 %v1355
        %v1708 = vunpack.c.h.b16 %v1355
        %v1709 = vunpack.c.l.b16 %v1356
        %v1710 = vunpack.c.h.b16 %v1356
        %v1711 = vunpack.c.l.b16 %v1357
        %v1712 = vunpack.c.h.b16 %v1357
        %v1713 = vunpack.c.l.b16 %v1358
        %v1714 = vunpack.c.h.b16 %v1358
        %v1715 = vunpack.c.l.b16 %v1359
        %v1716 = vunpack.c.h.b16 %v1359
        %v1717 = vunpack.c.l.b16 %v1360
        %v1718 = vunpack.c.h.b16 %v1360
        %v1719 = vunpack.c.l.b16 %v1361
        %v1720 = vunpack.c.h.b16 %v1361
        %v1721 = vunpack.c.l.b16 %v1362
        %v1722 = vunpack.c.h.b16 %v1362
        %v1723 = vunpack.c.l.b16 %v1363
        %v1724 = vunpack.c.h.b16 %v1363
        %v1725 = vunpack.c.l.b16 %v1364
        %v1726 = vunpack.c.h.b16 %v1364
        %v1727 = vunpack.c.l.b16 %v1365
        %v1728 = vunpack.c.h.b16 %v1365
        %v1729 = vunpack.c.l.b16 %v1366
        %v1730 = vunpack.c.h.b16 %v1366
        %v1731 = vunpack.c.l.b16 %v1367
        %v1732 = vunpack.c.h.b16 %v1367
        %v1733 = vunpack.c.l.b16 %v1368
        %v1734 = vunpack.c.h.b16 %v1368
        %v1735 = vunpack.c.l.b16 %v1369
        %v1736 = vunpack.c.h.b16 %v1369
        %v1737 = vunpack.c.l.b16 %v1370
        %v1738 = vunpack.c.h.b16 %v1370
        %v1739 = vunpack.c.l.b16 %v1371
        %v1740 = vunpack.c.h.b16 %v1371
        %v1741 = vunpack.c.l.b16 %v1372
        %v1742 = vunpack.c.h.b16 %v1372
        %v1743 = vunpack.c.l.b16 %v1373
        %v1744 = vunpack.c.h.b16 %v1373
        %v1745 = vunpack.c.l.b16 %v1374
        %v1746 = vunpack.c.h.b16 %v1374
        %v1747 = vunpack.c.l.b16 %v1375
        %v1748 = vunpack.c.h.b16 %v1375
        %v1749 = vunpack.c.l.b16 %v1376
        %v1750 = vunpack.c.h.b16 %v1376
        %v1751 = vunpack.c.l.b16 %v1377
        %v1752 = vunpack.c.h.b16 %v1377
        %v1753 = vunpack.c.l.b16 %v1378
        %v1754 = vunpack.c.h.b16 %v1378
        %v1755 = vunpack.c.l.b16 %v1379
        %v1756 = vunpack.c.h.b16 %v1379
        %v1757 = vunpack.c.l.b16 %v1380
        %v1758 = vunpack.c.h.b16 %v1380
        %v1759 = vunpack.c.l.b16 %v1381
        %v1760 = vunpack.c.h.b16 %v1381
        %v1761 = vunpack.c.l.b16 %v1382
        %v1762 = vunpack.c.h.b16 %v1382
        %v1763 = vunpack.c.l.b16 %v1383
        %v1764 = vunpack.c.h.b16 %v1383
        %v1765 = vunpack.c.l.b16 %v1384
        %v1766 = vunpack.c.h.b16 %v1384
        %v1767 = vunpack.c.l.b16 %v1385
        %v1768 = vunpack.c.h.b16 %v1385
        %v1769 = vunpack.c.l.b16 %v1386
        %v1770 = vunpack.c.h.b16 %v1386
        %v1771 = vunpack.c.l.b16 %v1387
        %v1772 = vunpack.c.h.b16 %v1387
        %v1773 = vunpack.c.l.b16 %v1388
        %v1774 = vunpack.c.h.b16 %v1388
        %v1775 = vunpack.c.l.b16 %v1389
        %v1776 = vunpack.c.h.b16 %v1389
        %v1777 = vunpack.c.l.b16 %v1390
        %v1778 = vunpack.c.h.b16 %v1390
        %v1779 = vunpack.c.l.b16 %v1391
        %v1780 = vunpack.c.h.b16 %v1391
        %v1781 = vunpack.c.l.b16 %v1392
        %v1782 = vunpack.c.h.b16 %v1392
        %v1783 = vunpack.c.l.b16 %v1393
        %v1784 = vunpack.c.h.b16 %v1393
        %v1785 = vunpack.c.l.b16 %v1394
        %v1786 = vunpack.c.h.b16 %v1394
        %v1787 = vunpack.c.l.b16 %v1395
        %v1788 = vunpack.c.h.b16 %v1395
        %v1789 = vunpack.c.l.b16 %v1396
        %v1790 = vunpack.c.h.b16 %v1396
        %v1791 = vunpack.c.l.b16 %v1397
        %v1792 = vunpack.c.h.b16 %v1397
        %v1793 = vunpack.c.l.b16 %v1398
        %v1794 = vunpack.c.h.b16 %v1398
        %v1795 = vunpack.c.l.b16 %v1399
        %v1796 = vunpack.c.h.b16 %v1399
        %v1797 = vunpack.c.l.b16 %v1400
        %v1798 = vunpack.c.h.b16 %v1400
        %v1799 = vunpack.c.l.b16 %v1401
        %v1800 = vunpack.c.h.b16 %v1401
        %v1801 = vunpack.c.l.b16 %v1402
        %v1802 = vunpack.c.h.b16 %v1402
        %v1803 = vunpack.c.l.b16 %v1403
        %v1804 = vunpack.c.h.b16 %v1403
        %v1805 = vunpack.c.l.b16 %v1404
        %v1806 = vunpack.c.h.b16 %v1404
        %v1807 = vunpack.c.l.b16 %v1405
        %v1808 = vunpack.c.h.b16 %v1405
        %v1809 = vunpack.c.l.b16 %v1406
        %v1810 = vunpack.c.h.b16 %v1406
        %v1811 = vunpack.c.l.b16 %v1407
        %v1812 = vunpack.c.h.b16 %v1407
        %v1813 = vunpack.c.l.b16 %v1408
        %v1814 = vunpack.c.h.b16 %v1408
        %v1815 = vpack.c.b16 %v1563, %v1559
        %v1816 = vpack.c.b16 %v1564, %v1560
        %v1817 = vpack.c.b16 %v1565, %v1561
        %v1818 = vpack.c.b16 %v1566, %v1562
        %v1819 = vpack.c.b16 %v1571, %v1567
        %v1820 = vpack.c.b16 %v1572, %v1568
        %v1821 = vpack.c.b16 %v1573, %v1569
        %v1822 = vpack.c.b16 %v1574, %v1570
        %v1823 = vpack.c.b16 %v1579, %v1575
        %v1824 = vpack.c.b16 %v1580, %v1576
        %v1825 = vpack.c.b16 %v1581, %v1577
        %v1826 = vpack.c.b16 %v1582, %v1578
        %v1827 = vpack.c.b16 %v1587, %v1583
        %v1828 = vpack.c.b16 %v1588, %v1584
        %v1829 = vpack.c.b16 %v1589, %v1585
        %v1830 = vpack.c.b16 %v1590, %v1586
        %v1831 = vpack.c.b16 %v1595, %v1591
        %v1832 = vpack.c.b16 %v1596, %v1592
        %v1833 = vpack.c.b16 %v1597, %v1593
        %v1834 = vpack.c.b16 %v1598, %v1594
        %v1835 = vpack.c.b16 %v1603, %v1599
        %v1836 = vpack.c.b16 %v1604, %v1600
        %v1837 = vpack.c.b16 %v1605, %v1601
        %v1838 = vpack.c.b16 %v1606, %v1602
        %v1839 = vpack.c.b16 %v1611, %v1607
        %v1840 = vpack.c.b16 %v1612, %v1608
        %v1841 = vpack.c.b16 %v1613, %v1609
        %v1842 = vpack.c.b16 %v1614, %v1610
        %v1843 = vpack.c.b16 %v1619, %v1615
        %v1844 = vpack.c.b16 %v1620, %v1616
        %v1845 = vpack.c.b16 %v1621, %v1617
        %v1846 = vpack.c.b16 %v1622, %v1618
        %v1847 = vpack.c.b16 %v1627, %v1623
        %v1848 = vpack.c.b16 %v1628, %v1624
        %v1849 = vpack.c.b16 %v1629, %v1625
        %v1850 = vpack.c.b16 %v1630, %v1626
        %v1851 = vpack.c.b16 %v1635, %v1631
        %v1852 = vpack.c.b16 %v1636, %v1632
        %v1853 = vpack.c.b16 %v1637, %v1633
        %v1854 = vpack.c.b16 %v1638, %v1634
        %v1855 = vpack.c.b16 %v1643, %v1639
        %v1856 = vpack.c.b16 %v1644, %v1640
        %v1857 = vpack.c.b16 %v1645, %v1641
        %v1858 = vpack.c.b16 %v1646, %v1642
        %v1859 = vpack.c.b16 %v1651, %v1647
        %v1860 = vpack.c.b16 %v1652, %v1648
        %v1861 = vpack.c.b16 %v1653, %v1649
        %v1862 = vpack.c.b16 %v1654, %v1650
        %v1863 = vpack.c.b16 %v1659, %v1655
        %v1864 = vpack.c.b16 %v1660, %v1656
        %v1865 = vpack.c.b16 %v1661, %v1657
        %v1866 = vpack.c.b16 %v1662, %v1658
        %v1867 = vpack.c.b16 %v1667, %v1663
        %v1868 = vpack.c.b16 %v1668, %v1664
        %v1869 = vpack.c.b16 %v1669, %v1665
        %v1870 = vpack.c.b16 %v1670, %v1666
        %v1871 = vpack.c.b16 %v1675, %v1671
        %v1872 = vpack.c.b16 %v1676, %v1672
        %v1873 = vpack.c.b16 %v1677, %v1673
        %v1874 = vpack.c.b16 %v1678, %v1674
        %v1875 = vpack.c.b16 %v1683, %v1679
        %v1876 = vpack.c.b16 %v1684, %v1680
        %v1877 = vpack.c.b16 %v1685, %v1681
        %v1878 = vpack.c.b16 %v1686, %v1682
        %v1879 = vpack.c.b16 %v1691, %v1687
        %v1880 = vpack.c.b16 %v1692, %v1688
        %v1881 = vpack.c.b16 %v1693, %v1689
        %v1882 = vpack.c.b16 %v1694, %v1690
        %v1883 = vpack.c.b16 %v1699, %v1695
        %v1884 = vpack.c.b16 %v1700, %v1696
        %v1885 = vpack.c.b16 %v1701, %v1697
        %v1886 = vpack.c.b16 %v1702, %v1698
        %v1887 = vpack.c.b16 %v1707, %v1703
        %v1888 = vpack.c.b16 %v1708, %v1704
        %v1889 = vpack.c.b16 %v1709, %v1705
        %v1890 = vpack.c.b16 %v1710, %v1706
        %v1891 = vpack.c.b16 %v1715, %v1711
        %v1892 = vpack.c.b16 %v1716, %v1712
        %v1893 = vpack.c.b16 %v1717, %v1713
        %v1894 = vpack.c.b16 %v1718, %v1714
        %v1895 = vpack.c.b16 %v1723, %v1719
        %v1896 = vpack.c.b16 %v1724, %v1720
        %v1897 = vpack.c.b16 %v1725, %v1721
        %v1898 = vpack.c.b16 %v1726, %v1722
        %v1899 = vpack.c.b16 %v1731, %v1727
        %v1900 = vpack.c.b16 %v1732, %v1728
        %v1901 = vpack.c.b16 %v1733, %v1729
        %v1902 = vpack.c.b16 %v1734, %v1730
        %v1903 = vpack.c.b16 %v1739, %v1735
        %v1904 = vpack.c.b16 %v1740, %v1736
        %v1905 = vpack.c.b16 %v1741, %v1737
        %v1906 = vpack.c.b16 %v1742, %v1738
        %v1907 = vpack.c.b16 %v1747, %v1743
        %v1908 = vpack.c.b16 %v1748, %v1744
        %v1909 = vpack.c.b16 %v1749, %v1745
        %v1910 = vpack.c.b16 %v1750, %v1746
        %v1911 = vpack.c.b16 %v1755, %v1751
        %v1912 = vpack.c.b16 %v1756, %v1752
        %v1913 = vpack.c.b16 %v1757, %v1753
        %v1914 = vpack.c.b16 %v1758, %v1754
        %v1915 = vpack.c.b16 %v1763, %v1759
        %v1916 = vpack.c.b16 %v1764, %v1760
        %v1917 = vpack.c.b16 %v1765, %v1761
        %v1918 = vpack.c.b16 %v1766, %v1762
        %v1919 = vpack.c.b16 %v1771, %v1767
        %v1920 = vpack.c.b16 %v1772, %v1768
        %v1921 = vpack.c.b16 %v1773, %v1769
        %v1922 = vpack.c.b16 %v1774, %v1770
        %v1923 = vpack.c.b16 %v1779, %v1775
        %v1924 = vpack.c.b16 %v1780, %v1776
        %v1925 = vpack.c.b16 %v1781, %v1777
        %v1926 = vpack.c.b16 %v1782, %v1778
        %v1927 = vpack.c.b16 %v1787, %v1783
        %v1928 = vpack.c.b16 %v1788, %v1784
        %v1929 = vpack.c.b16 %v1789, %v1785
        %v1930 = vpack.c.b16 %v1790, %v1786
        %v1931 = vpack.c.b16 %v1795, %v1791
        %v1932 = vpack.c.b16 %v1796, %v1792
        %v1933 = vpack.c.b16 %v1797, %v1793
        %v1934 = vpack.c.b16 %v1798, %v1794
        %v1935 = vpack.c.b16 %v1803, %v1799
        %v1936 = vpack.c.b16 %v1804, %v1800
        %v1937 = vpack.c.b16 %v1805, %v1801
        %v1938 = vpack.c.b16 %v1806, %v1802
        %v1939 = vpack.c.b16 %v1811, %v1807
        %v1940 = vpack.c.b16 %v1812, %v1808
        %v1941 = vpack.c.b16 %v1813, %v1809
        %v1942 = vpack.c.b16 %v1814, %v1810
        %2071 = vmatprep.subr.bf16.mxu0 %v1844
        %2072 = vmatpush1.bf16.msra.mxu0 %v1843
        %2073 = vmatprep.subr.bf16.mxu0 %v1840
        %2074 = vmatpush1.bf16.msra.mxu0 %v1839
        %2075 = vmatprep.subr.bf16.mxu0 %v1836
        %2076 = vmatpush1.bf16.msra.mxu0 %v1835
        %2077 = vmatprep.subr.bf16.mxu0 %v1832
        %2078 = vmatpush1.bf16.msra.mxu0 %v1831
        %2079 = vmatprep.subr.bf16.mxu0 %v1828
        %2080 = vmatpush1.bf16.msra.mxu0 %v1827
        %2081 = vmatprep.subr.bf16.mxu0 %v1824
        %2082 = vmatpush1.bf16.msra.mxu0 %v1823
        %2083 = vmatprep.subr.bf16.mxu0 %v1820
        %2084 = vmatpush1.bf16.msra.mxu0 %v1819
        %2085 = vmatprep.subr.bf16.mxu0 %v1816
        %2086 = vmatpush1.bf16.msra.mxu0 %v1815
        %2087 = vmatprep.subr.bf16.mxu0 %v1876
        %2088 = vmatpush2.bf16.msra.mxu0 %v1875
        %2089 = vmatprep.subr.bf16.mxu0 %v1872
        %2090 = vmatpush2.bf16.msra.mxu0 %v1871
        %2091 = vmatprep.subr.bf16.mxu0 %v1868
        %2092 = vmatpush2.bf16.msra.mxu0 %v1867
        %2093 = vmatprep.subr.bf16.mxu0 %v1864
        %2094 = vmatpush2.bf16.msra.mxu0 %v1863
        %2095 = vmatprep.subr.bf16.mxu0 %v1860
        %2096 = vmatpush2.bf16.msra.mxu0 %v1859
        %2097 = vmatprep.subr.bf16.mxu0 %v1856
        %2098 = vmatpush2.bf16.msra.mxu0 %v1855
        %2099 = vmatprep.subr.bf16.mxu0 %v1852
        %2100 = vmatpush2.bf16.msra.mxu0 %v1851
        %2101 = vmatprep.subr.bf16.mxu0 %v1848
        %2102 = vmatpush2.bf16.msra.mxu0 %v1847
        %2103 = vmatprep.mubr.bf16.mxu0 %v1278
        %2104 = vmatmul.mubr.bf16.gmra.mxu0 %v1277
        %v2105 = vpop.f32.mrf.mxu0
        %v2106 = vadd.f32 %v1414, %v2105
        %v2107 = vpop.f32.mrf.mxu0
        %v2108 = vadd.f32 %v1418, %v2107
        %v2109 = vpop.f32.mrf.mxu0
        %v2110 = vadd.f32 %v1414, %v2109
        %v2111 = vpop.f32.mrf.mxu0
        %v2112 = vadd.f32 %v1418, %v2111
        %2113 = vdwg.mxu0
        %2114 = vmatprep.subr.bf16.mxu0 %v1908
        %2115 = vmatpush1.bf16.msra.mxu0 %v1907
        %2116 = vmatprep.subr.bf16.mxu0 %v1904
        %2117 = vmatpush1.bf16.msra.mxu0 %v1903
        %2118 = vmatprep.subr.bf16.mxu0 %v1900
        %2119 = vmatpush1.bf16.msra.mxu0 %v1899
        %2120 = vmatprep.subr.bf16.mxu0 %v1896
        %2121 = vmatpush1.bf16.msra.mxu0 %v1895
        %2122 = vmatprep.subr.bf16.mxu0 %v1892
        %2123 = vmatpush1.bf16.msra.mxu0 %v1891
        %2124 = vmatprep.subr.bf16.mxu0 %v1888
        %2125 = vmatpush1.bf16.msra.mxu0 %v1887
        %2126 = vmatprep.subr.bf16.mxu0 %v1884
        %2127 = vmatpush1.bf16.msra.mxu0 %v1883
        %2128 = vmatprep.subr.bf16.mxu0 %v1880
        %2129 = vmatpush1.bf16.msra.mxu0 %v1879
        %2130 = vmatprep.subr.bf16.mxu0 %v1940
        %2131 = vmatpush2.bf16.msra.mxu0 %v1939
        %2132 = vmatprep.subr.bf16.mxu0 %v1936
        %2133 = vmatpush2.bf16.msra.mxu0 %v1935
        %2134 = vmatprep.subr.bf16.mxu0 %v1932
        %2135 = vmatpush2.bf16.msra.mxu0 %v1931
        %2136 = vmatprep.subr.bf16.mxu0 %v1928
        %2137 = vmatpush2.bf16.msra.mxu0 %v1927
        %2138 = vmatprep.subr.bf16.mxu0 %v1924
        %2139 = vmatpush2.bf16.msra.mxu0 %v1923
        %2140 = vmatprep.subr.bf16.mxu0 %v1920
        %2141 = vmatpush2.bf16.msra.mxu0 %v1919
        %2142 = vmatprep.subr.bf16.mxu0 %v1916
        %2143 = vmatpush2.bf16.msra.mxu0 %v1915
        %2144 = vmatprep.subr.bf16.mxu0 %v1912
        %2145 = vmatpush2.bf16.msra.mxu0 %v1911
        %2146 = vmatprep.mubr.bf16.mxu0 %v1280
        %2147 = vmatmul.mubr.bf16.gmra.mxu0 %v1279
        %v2148 = vpop.f32.mrf.mxu0
        %v2149 = vadd.f32 %v2106, %v2148
        %v2150 = vpop.f32.mrf.mxu0
        %v2151 = vadd.f32 %v2108, %v2150
        %v2152 = vpop.f32.mrf.mxu0
        %v2153 = vadd.f32 %v2110, %v2152
        %v2154 = vpop.f32.mrf.mxu0
        %v2155 = vadd.f32 %v2112, %v2154
        %2156 = vdwg.mxu0
        %2157 = vmatprep.subr.bf16.mxu0 %v1846
        %2158 = vmatpush1.bf16.msra.mxu0 %v1845
        %2159 = vmatprep.subr.bf16.mxu0 %v1842
        %2160 = vmatpush1.bf16.msra.mxu0 %v1841
        %2161 = vmatprep.subr.bf16.mxu0 %v1838
        %2162 = vmatpush1.bf16.msra.mxu0 %v1837
        %2163 = vmatprep.subr.bf16.mxu0 %v1834
        %2164 = vmatpush1.bf16.msra.mxu0 %v1833
        %2165 = vmatprep.subr.bf16.mxu0 %v1830
        %2166 = vmatpush1.bf16.msra.mxu0 %v1829
        %2167 = vmatprep.subr.bf16.mxu0 %v1826
        %2168 = vmatpush1.bf16.msra.mxu0 %v1825
        %2169 = vmatprep.subr.bf16.mxu0 %v1822
        %2170 = vmatpush1.bf16.msra.mxu0 %v1821
        %2171 = vmatprep.subr.bf16.mxu0 %v1818
        %2172 = vmatpush1.bf16.msra.mxu0 %v1817
        %2173 = vmatprep.subr.bf16.mxu0 %v1878
        %2174 = vmatpush2.bf16.msra.mxu0 %v1877
        %2175 = vmatprep.subr.bf16.mxu0 %v1874
        %2176 = vmatpush2.bf16.msra.mxu0 %v1873
        %2177 = vmatprep.subr.bf16.mxu0 %v1870
        %2178 = vmatpush2.bf16.msra.mxu0 %v1869
        %2179 = vmatprep.subr.bf16.mxu0 %v1866
        %2180 = vmatpush2.bf16.msra.mxu0 %v1865
        %2181 = vmatprep.subr.bf16.mxu0 %v1862
        %2182 = vmatpush2.bf16.msra.mxu0 %v1861
        %2183 = vmatprep.subr.bf16.mxu0 %v1858
        %2184 = vmatpush2.bf16.msra.mxu0 %v1857
        %2185 = vmatprep.subr.bf16.mxu0 %v1854
        %2186 = vmatpush2.bf16.msra.mxu0 %v1853
        %2187 = vmatprep.subr.bf16.mxu0 %v1850
        %2188 = vmatpush2.bf16.msra.mxu0 %v1849
        %2189 = vmatprep.mubr.bf16.mxu0 %v1278
        %2190 = vmatmul.mubr.bf16.gmra.mxu0 %v1277
        %v2191 = vpop.f32.mrf.mxu0
        %v2192 = vadd.f32 %v1422, %v2191
        %v2193 = vpop.f32.mrf.mxu0
        %v2194 = vadd.f32 %v1426, %v2193
        %v2195 = vpop.f32.mrf.mxu0
        %v2196 = vadd.f32 %v1422, %v2195
        %v2197 = vpop.f32.mrf.mxu0
        %v2198 = vadd.f32 %v1426, %v2197
        %2199 = vdwg.mxu0
        %2200 = vmatprep.subr.bf16.mxu0 %v1910
        %2201 = vmatpush1.bf16.msra.mxu0 %v1909
        %2202 = vmatprep.subr.bf16.mxu0 %v1906
        %2203 = vmatpush1.bf16.msra.mxu0 %v1905
        %2204 = vmatprep.subr.bf16.mxu0 %v1902
        %2205 = vmatpush1.bf16.msra.mxu0 %v1901
        %2206 = vmatprep.subr.bf16.mxu0 %v1898
        %2207 = vmatpush1.bf16.msra.mxu0 %v1897
        %2208 = vmatprep.subr.bf16.mxu0 %v1894
        %2209 = vmatpush1.bf16.msra.mxu0 %v1893
        %2210 = vmatprep.subr.bf16.mxu0 %v1890
        %2211 = vmatpush1.bf16.msra.mxu0 %v1889
        %2212 = vmatprep.subr.bf16.mxu0 %v1886
        %2213 = vmatpush1.bf16.msra.mxu0 %v1885
        %2214 = vmatprep.subr.bf16.mxu0 %v1882
        %2215 = vmatpush1.bf16.msra.mxu0 %v1881
        %2216 = vmatprep.subr.bf16.mxu0 %v1942
        %2217 = vmatpush2.bf16.msra.mxu0 %v1941
        %2218 = vmatprep.subr.bf16.mxu0 %v1938
        %2219 = vmatpush2.bf16.msra.mxu0 %v1937
        %2220 = vmatprep.subr.bf16.mxu0 %v1934
        %2221 = vmatpush2.bf16.msra.mxu0 %v1933
        %2222 = vmatprep.subr.bf16.mxu0 %v1930
        %2223 = vmatpush2.bf16.msra.mxu0 %v1929
        %2224 = vmatprep.subr.bf16.mxu0 %v1926
        %2225 = vmatpush2.bf16.msra.mxu0 %v1925
        %2226 = vmatprep.subr.bf16.mxu0 %v1922
        %2227 = vmatpush2.bf16.msra.mxu0 %v1921
        %2228 = vmatprep.subr.bf16.mxu0 %v1918
        %2229 = vmatpush2.bf16.msra.mxu0 %v1917
        %2230 = vmatprep.subr.bf16.mxu0 %v1914
        %2231 = vmatpush2.bf16.msra.mxu0 %v1913
        %2232 = vmatprep.mubr.bf16.mxu0 %v1280
        %2233 = vmatmul.mubr.bf16.gmra.mxu0 %v1279
        %v2234 = vpop.f32.mrf.mxu0
        %v2235 = vadd.f32 %v2192, %v2234
        %v2236 = vpop.f32.mrf.mxu0
        %v2237 = vadd.f32 %v2194, %v2236
        %v2238 = vpop.f32.mrf.mxu0
        %v2239 = vadd.f32 %v2196, %v2238
        %v2240 = vpop.f32.mrf.mxu0
        %v2241 = vadd.f32 %v2198, %v2240
        %2242 = vdwg.mxu0
        %v2243 = vtanh.pop %v2149
        %v2244 = vtanh.pop %v2151
        %v2245 = vtanh.pop %v2153
        %v2246 = vtanh.pop %v2155
        %v2247 = vxor.u32 %v2235, 2147483648
        %v2248 = vxor.u32 %v2237, 2147483648
        %v2249 = vxor.u32 %v2239, 2147483648
        %v2250 = vxor.u32 %v2241, 2147483648
        %v2251 = vmul.f32 %v2247, 1.442695
        %v2252 = vpow.pop %v2251
        %v2253 = vmul.f32 %v2248, 1.442695
        %v2254 = vpow.pop %v2253
        %v2255 = vmul.f32 %v2249, 1.442695
        %v2256 = vpow.pop %v2255
        %v2257 = vmul.f32 %v2250, 1.442695
        %v2258 = vpow.pop %v2257
        %v2259 = vadd.f32 %v2252, 1.0
        %v2260 = vadd.f32 %v2254, 1.0
        %v2261 = vadd.f32 %v2256, 1.0
        %v2262 = vadd.f32 %v2258, 1.0
        %v2263 = vrcp.pop %v2259
        %v2264 = vmul.f32 1.0, %v2263
        %v2265 = vrcp.pop %v2260
        %v2266 = vmul.f32 1.0, %v2265
        %v2267 = vrcp.pop %v2261
        %v2268 = vmul.f32 1.0, %v2267
        %v2269 = vrcp.pop %v2262
        %v2270 = vmul.f32 1.0, %v2269
        %v2271 = vmul.f32 %v2243, %v2264
        %v2272 = vmul.f32 %v2244, %v2266
        %v2273 = vmul.f32 %v2245, %v2268
        %v2274 = vmul.f32 %v2246, %v2270
        %v2275 = vld [vmem:[%s6] sm:$0x3]
        %v2277 = vlaneseq
        %v2278 = vshrl.u32 %v2277, 7
        %v2279 = vsub.s32 0, %v2278
        %v2280 = vrot.slane %v2275, %v2279
        %v2281 = vlaneseq
        %v2282 = vshrl.u32 %v2281, 7
        %v2283 = vsub.s32 1, %v2282
        %v2284 = vrot.slane %v2275, %v2283
        %v2287 = vmul.f32 %v2271, %v2280
        %v2288 = vmul.f32 %v2272, %v2284
        %v2289 = vmul.f32 %v2273, %v2280
        %v2290 = vmul.f32 %v2274, %v2284
        %v2291 = vadd.f32 %v2287, %v2288
        %2292 = vadd.xlane.f32.xlu0 %v2291
        %v2293 = vpop.xlane.xlu0 %2292
        %v2294 = vadd.f32 %v2289, %v2290
        %2295 = vadd.xlane.f32.xlu0 %v2294
        %v2296 = vpop.xlane.xlu0 %2295
        %v2297 = vld [vmem:[#allocation5] sm:$0x1]
        %v2299 = vlaneseq
        %v2300 = vshrl.u32 %v2299, 7
        %v2301 = vsub.s32 0, %v2300
        %v2302 = vrot.slane %v2297, %v2301
        %v2304 = vadd.f32 %v2293, %v2302
        %v2305 = vadd.f32 %v2296, %v2302
        %v2306 = vsel %vm757, %v2304, -1e+30
        %v2307 = vsel %vm758, %v2305, -1e+30
        %v2308 = vld [vmem:[#allocation2] sm:$0x1]
        %vm2309 = vcmask 7168
        %v2310 = vsel %vm2309, %v2306, -inf
        %v2311 = vsel %vm2309, %v2307, -inf
        %v2312 = vmax.f32 %v2310, %v2311
        %v2313 = vrot.slane %v2312, 4
        %v2314 = vmax.f32 %v2312, %v2313
        %v2315 = vrot.slane %v2314, 2
        %v2316 = vmax.f32 %v2314, %v2315
        %v2317 = vrot.slane %v2316, 1
        %v2318 = vmax.f32 %v2316, %v2317
        %v2319 = vmax.f32 %v2308, %v2318
        %v2320 = vsub.f32 %v2308, %v2319
        %v2321 = vmul.f32 %v2320, 1.442695
        %v2322 = vpow.pop %v2321
        %v2324 = vlaneseq
        %v2325 = vshrl.u32 %v2324, 7
        %v2326 = vsub.s32 0, %v2325
        %v2327 = vrot.slane %v2319, %v2326
        %v2329 = vsub.f32 %v2306, %v2327
        %v2330 = vsub.f32 %v2307, %v2327
        %v2331 = vmul.f32 %v2329, 1.442695
        %v2332 = vpow.pop %v2331
        %v2333 = vmul.f32 %v2330, 1.442695
        %v2334 = vpow.pop %v2333
        %v2335 = vld [vmem:[#allocation3] sm:$0x1]
        %v2336 = vmul.f32 %v2322, %v2335
        %v2337 = vsel %vm2309, %v2332, 0.0
        %v2338 = vsel %vm2309, %v2334, 0.0
        %v2339 = vadd.f32 %v2337, %v2338
        %v2340 = vrot.slane %v2339, 4
        %v2341 = vadd.f32 %v2339, %v2340
        %v2342 = vrot.slane %v2341, 2
        %v2343 = vadd.f32 %v2341, %v2342
        %v2344 = vrot.slane %v2343, 1
        %v2345 = vadd.f32 %v2343, %v2344
        %v2346 = vadd.f32 %v2336, %v2345
        %vm2347 = vcmask 0
        %2348 = vst.msk [vmem:[#allocation3] sm:$0x1] %vm2347, %v2346
        %v2349 = vld [vmem:[#allocation4] sm:$0xf]
        %2351 = vset.pattern.permute.xlu0 0
        %2352 = vperm.xlu0 %2351, %v2322
        %v2353 = vpop.permute.xlu0 %2352
        %v2355 = vlaneseq
        %v2356 = vshrl.u32 %v2355, 7
        %v2357 = vsub.s32 0, %v2356
        %v2358 = vrot.slane %v2353, %v2357
        %v2359 = vmul.f32 %v2358, %v2349
        %2361 = vset.pattern.permute.xlu0 0
        %2362 = vperm.xlu0 %2361, %v2332
        %v2363 = vpop.permute.xlu0 %2362
        %2366 = vset.pattern.permute.xlu0 0
        %2367 = vperm.xlu0 %2366, %v2334
        %v2368 = vpop.permute.xlu0 %2367
        %v2370 = vmul.f32 %v2363, %v1269
        %v2371 = vmul.f32 %v2363, %v1270
        %v2372 = vmul.f32 %v2363, %v1271
        %v2373 = vmul.f32 %v2363, %v1272
        %v2374 = vmul.f32 %v2368, %v1273
        %v2375 = vmul.f32 %v2368, %v1274
        %v2376 = vmul.f32 %v2368, %v1275
        %v2377 = vmul.f32 %v2368, %v1276
        %v2378 = vadd.f32 %v2370, %v2374
        %v2379 = vrot.slane %v2378, 4
        %v2380 = vadd.f32 %v2378, %v2379
        %v2381 = vrot.slane %v2380, 2
        %v2382 = vadd.f32 %v2380, %v2381
        %v2383 = vrot.slane %v2382, 1
        %v2384 = vadd.f32 %v2382, %v2383
        %v2385 = vadd.f32 %v2371, %v2375
        %v2386 = vrot.slane %v2385, 4
        %v2387 = vadd.f32 %v2385, %v2386
        %v2388 = vrot.slane %v2387, 2
        %v2389 = vadd.f32 %v2387, %v2388
        %v2390 = vrot.slane %v2389, 1
        %v2391 = vadd.f32 %v2389, %v2390
        %v2392 = vadd.f32 %v2372, %v2376
        %v2393 = vrot.slane %v2392, 4
        %v2394 = vadd.f32 %v2392, %v2393
        %v2395 = vrot.slane %v2394, 2
        %v2396 = vadd.f32 %v2394, %v2395
        %v2397 = vrot.slane %v2396, 1
        %v2398 = vadd.f32 %v2396, %v2397
        %v2399 = vadd.f32 %v2373, %v2377
        %v2400 = vrot.slane %v2399, 4
        %v2401 = vadd.f32 %v2399, %v2400
        %v2402 = vrot.slane %v2401, 2
        %v2403 = vadd.f32 %v2401, %v2402
        %v2404 = vrot.slane %v2403, 1
        %v2405 = vadd.f32 %v2403, %v2404
        %v2410 = vcombine.low %v2384, %v2391
        %v2411 = vcombine.low %v2398, %v2405
        %v2413 = vunpack.c.l.s4 1966171168
        %v2414 = vunpack.c.0.s8 %v2413
        %v2415 = vlaneseq
        %v2416 = vshrl.u32 %v2415, 7
        %v2417 = vsub.s32 %v2414, %v2416
        %v2418 = vrot.slane %v2410, %v2417
        %v2420 = vunpack.c.l.s4 1966171168
        %v2421 = vunpack.c.0.s8 %v2420
        %v2422 = vlaneseq
        %v2423 = vshrl.u32 %v2422, 7
        %v2424 = vsub.s32 %v2421, %v2423
        %v2425 = vrot.slane %v2411, %v2424
        %v2426 = vcombine.low %v2418, %v2425
        %v2428 = vunpack.c.l.s4 1966171168
        %v2429 = vunpack.c.0.s8 %v2428
        %v2430 = vlaneseq
        %v2431 = vshrl.u32 %v2430, 7
        %v2432 = vsub.s32 %v2429, %v2431
        %v2433 = vrot.slane %v2426, %v2432
        %v2435 = vadd.f32 %v2359, %v2433
        %v2436 = vlaneseq
        %vm2437 = vcmp.ge.s32.totalorder %v2436, 0
        %vm2438 = vcmp.lt.s32.totalorder %v2436, 512
        %vm2439 = vmand %vm2437, %vm2438
        %2440 = vst.msk [vmem:[#allocation4] sm:$0xf] %vm2439, %v2435
        %2441 = vst.msk [vmem:[#allocation2] sm:$0x1] %vm2347, %v2319
        %p2442 = scmp.eq.s32.totalorder %s42, 2
        // Predicated region
        $region125: #{ppmil_forward.1} parent=95 // pred_check
          %p2443 = pneg %p2442
        $region126: #{ppmil_forward.1} parent=95 // pred_check_branch
          %2445 = sbr.rel (%p2443) target = $region128
        $region127: #{ppmil_forward.1} parent=95 // pred_region
          %v2446 = vld [vmem:[#allocation4] sm:$0xf]
          %v2447 = vld [vmem:[#allocation3] sm:$0x1]
          %2449 = vset.pattern.permute.xlu0 0
          %2450 = vperm.xlu0 %2449, %v2447
          %v2451 = vpop.permute.xlu0 %2450
          %v2453 = vlaneseq
          %v2454 = vshrl.u32 %v2453, 7
          %v2455 = vsub.s32 0, %v2454
          %v2456 = vrot.slane %v2451, %v2455
          %v2457 = vrcp.pop %v2456
          %v2458 = vmul.f32 %v2446, %v2457
          %v2459 = vld [vmem:[%s1] sm:$0xff]
          %v2460 = vld [vmem:[%s1 + $0x8] sm:$0xff]
          %v2461 = vld [vmem:[%s1 + $0x10] sm:$0xf]
          %v2462 = vld [vmem:[%s1 + $0x18] sm:$0xf]
          %v2463 = vpack.c.bf16 %v2461, %v2459
          %v2464 = vpack.c.bf16 %v2462, %v2460
          %v2465 = vld [vmem:[#allocation12] sm:$0xff]
          %v2466 = vld [vmem:[#allocation12 + $0x8] sm:$0xff]
          %v2467 = vld [vmem:[#allocation12 + $0x10] sm:$0xff]
          %v2468 = vld [vmem:[#allocation12 + $0x18] sm:$0xff]
          %v2469 = vld [vmem:[#allocation12 + $0x20] sm:$0xff]
          %v2470 = vld [vmem:[#allocation12 + $0x28] sm:$0xff]
          %v2471 = vld [vmem:[#allocation12 + $0x30] sm:$0xff]
          %v2472 = vld [vmem:[#allocation12 + $0x38] sm:$0xff]
          %v2473 = vld [vmem:[#allocation12 + $0x40] sm:$0xff]
          %v2474 = vld [vmem:[#allocation12 + $0x48] sm:$0xff]
          %v2475 = vld [vmem:[#allocation12 + $0x50] sm:$0xff]
          %v2476 = vld [vmem:[#allocation12 + $0x58] sm:$0xff]
          %v2477 = vld [vmem:[#allocation12 + $0x60] sm:$0xff]
          %v2478 = vld [vmem:[#allocation12 + $0x68] sm:$0xff]
          %v2479 = vld [vmem:[#allocation12 + $0x70] sm:$0xff]
          %v2480 = vld [vmem:[#allocation12 + $0x78] sm:$0xff]
          %v2481 = vld [vmem:[#allocation12 + $0x80] sm:$0xff]
          %v2482 = vld [vmem:[#allocation12 + $0x88] sm:$0xff]
          %v2483 = vld [vmem:[#allocation12 + $0x90] sm:$0xff]
          %v2484 = vld [vmem:[#allocation12 + $0x98] sm:$0xff]
          %v2485 = vld [vmem:[#allocation12 + $0xa0] sm:$0xff]
          %v2486 = vld [vmem:[#allocation12 + $0xa8] sm:$0xff]
          %v2487 = vld [vmem:[#allocation12 + $0xb0] sm:$0xff]
          %v2488 = vld [vmem:[#allocation12 + $0xb8] sm:$0xff]
          %v2489 = vld [vmem:[#allocation12 + $0xc0] sm:$0xff]
          %v2490 = vld [vmem:[#allocation12 + $0xc8] sm:$0xff]
          %v2491 = vld [vmem:[#allocation12 + $0xd0] sm:$0xff]
          %v2492 = vld [vmem:[#allocation12 + $0xd8] sm:$0xff]
          %v2493 = vld [vmem:[#allocation12 + $0xe0] sm:$0xff]
          %v2494 = vld [vmem:[#allocation12 + $0xe8] sm:$0xff]
          %v2495 = vld [vmem:[#allocation12 + $0xf0] sm:$0xff]
          %v2496 = vld [vmem:[#allocation12 + $0xf8] sm:$0xff]
          %v2497 = vld [vmem:[#allocation12 + $0x100] sm:$0xff]
          %v2498 = vld [vmem:[#allocation12 + $0x108] sm:$0xff]
          %v2499 = vld [vmem:[#allocation12 + $0x110] sm:$0xff]
          %v2500 = vld [vmem:[#allocation12 + $0x118] sm:$0xff]
          %v2501 = vld [vmem:[#allocation12 + $0x120] sm:$0xff]
          %v2502 = vld [vmem:[#allocation12 + $0x128] sm:$0xff]
          %v2503 = vld [vmem:[#allocation12 + $0x130] sm:$0xff]
          %v2504 = vld [vmem:[#allocation12 + $0x138] sm:$0xff]
          %v2505 = vld [vmem:[#allocation12 + $0x140] sm:$0xff]
          %v2506 = vld [vmem:[#allocation12 + $0x148] sm:$0xff]
          %v2507 = vld [vmem:[#allocation12 + $0x150] sm:$0xff]
          %v2508 = vld [vmem:[#allocation12 + $0x158] sm:$0xff]
          %v2509 = vld [vmem:[#allocation12 + $0x160] sm:$0xff]
          %v2510 = vld [vmem:[#allocation12 + $0x168] sm:$0xff]
          %v2511 = vld [vmem:[#allocation12 + $0x170] sm:$0xff]
          %v2512 = vld [vmem:[#allocation12 + $0x178] sm:$0xff]
          %v2513 = vld [vmem:[#allocation12 + $0x180] sm:$0xff]
          %v2514 = vld [vmem:[#allocation12 + $0x188] sm:$0xff]
          %v2515 = vld [vmem:[#allocation12 + $0x190] sm:$0xff]
          %v2516 = vld [vmem:[#allocation12 + $0x198] sm:$0xff]
          %v2517 = vld [vmem:[#allocation12 + $0x1a0] sm:$0xff]
          %v2518 = vld [vmem:[#allocation12 + $0x1a8] sm:$0xff]
          %v2519 = vld [vmem:[#allocation12 + $0x1b0] sm:$0xff]
          %v2520 = vld [vmem:[#allocation12 + $0x1b8] sm:$0xff]
          %v2521 = vld [vmem:[#allocation12 + $0x1c0] sm:$0xff]
          %v2522 = vld [vmem:[#allocation12 + $0x1c8] sm:$0xff]
          %v2523 = vld [vmem:[#allocation12 + $0x1d0] sm:$0xff]
          %v2524 = vld [vmem:[#allocation12 + $0x1d8] sm:$0xff]
          %v2525 = vld [vmem:[#allocation12 + $0x1e0] sm:$0xff]
          %v2526 = vld [vmem:[#allocation12 + $0x1e8] sm:$0xff]
          %v2527 = vld [vmem:[#allocation12 + $0x1f0] sm:$0xff]
          %v2528 = vld [vmem:[#allocation12 + $0x1f8] sm:$0xff]
          %v2529 = vld [vmem:[%s9] sm:$0xf]
          %v2531 = vlaneseq
          %v2532 = vshrl.u32 %v2531, 7
          %v2533 = vsub.s32 0, %v2532
          %v2534 = vrot.slane %v2529, %v2533
          %v2535 = vlaneseq
          %v2536 = vshrl.u32 %v2535, 7
          %v2537 = vsub.s32 1, %v2536
          %v2538 = vrot.slane %v2529, %v2537
          %v2539 = vlaneseq
          %v2540 = vshrl.u32 %v2539, 7
          %v2541 = vsub.s32 2, %v2540
          %v2542 = vrot.slane %v2529, %v2541
          %v2543 = vlaneseq
          %v2544 = vshrl.u32 %v2543, 7
          %v2545 = vsub.s32 3, %v2544
          %v2546 = vrot.slane %v2529, %v2545
          %v2615 = vunpack.c.l.b16 %v2465
          %v2616 = vunpack.c.h.b16 %v2465
          %v2617 = vunpack.c.l.b16 %v2466
          %v2618 = vunpack.c.h.b16 %v2466
          %v2619 = vunpack.c.l.b16 %v2467
          %v2620 = vunpack.c.h.b16 %v2467
          %v2621 = vunpack.c.l.b16 %v2468
          %v2622 = vunpack.c.h.b16 %v2468
          %v2623 = vunpack.c.l.b16 %v2469
          %v2624 = vunpack.c.h.b16 %v2469
          %v2625 = vunpack.c.l.b16 %v2470
          %v2626 = vunpack.c.h.b16 %v2470
          %v2627 = vunpack.c.l.b16 %v2471
          %v2628 = vunpack.c.h.b16 %v2471
          %v2629 = vunpack.c.l.b16 %v2472
          %v2630 = vunpack.c.h.b16 %v2472
          %v2631 = vunpack.c.l.b16 %v2473
          %v2632 = vunpack.c.h.b16 %v2473
          %v2633 = vunpack.c.l.b16 %v2474
          %v2634 = vunpack.c.h.b16 %v2474
          %v2635 = vunpack.c.l.b16 %v2475
          %v2636 = vunpack.c.h.b16 %v2475
          %v2637 = vunpack.c.l.b16 %v2476
          %v2638 = vunpack.c.h.b16 %v2476
          %v2639 = vunpack.c.l.b16 %v2477
          %v2640 = vunpack.c.h.b16 %v2477
          %v2641 = vunpack.c.l.b16 %v2478
          %v2642 = vunpack.c.h.b16 %v2478
          %v2643 = vunpack.c.l.b16 %v2479
          %v2644 = vunpack.c.h.b16 %v2479
          %v2645 = vunpack.c.l.b16 %v2480
          %v2646 = vunpack.c.h.b16 %v2480
          %v2647 = vunpack.c.l.b16 %v2481
          %v2648 = vunpack.c.h.b16 %v2481
          %v2649 = vunpack.c.l.b16 %v2482
          %v2650 = vunpack.c.h.b16 %v2482
          %v2651 = vunpack.c.l.b16 %v2483
          %v2652 = vunpack.c.h.b16 %v2483
          %v2653 = vunpack.c.l.b16 %v2484
          %v2654 = vunpack.c.h.b16 %v2484
          %v2655 = vunpack.c.l.b16 %v2485
          %v2656 = vunpack.c.h.b16 %v2485
          %v2657 = vunpack.c.l.b16 %v2486
          %v2658 = vunpack.c.h.b16 %v2486
          %v2659 = vunpack.c.l.b16 %v2487
          %v2660 = vunpack.c.h.b16 %v2487
          %v2661 = vunpack.c.l.b16 %v2488
          %v2662 = vunpack.c.h.b16 %v2488
          %v2663 = vunpack.c.l.b16 %v2489
          %v2664 = vunpack.c.h.b16 %v2489
          %v2665 = vunpack.c.l.b16 %v2490
          %v2666 = vunpack.c.h.b16 %v2490
          %v2667 = vunpack.c.l.b16 %v2491
          %v2668 = vunpack.c.h.b16 %v2491
          %v2669 = vunpack.c.l.b16 %v2492
          %v2670 = vunpack.c.h.b16 %v2492
          %v2671 = vunpack.c.l.b16 %v2493
          %v2672 = vunpack.c.h.b16 %v2493
          %v2673 = vunpack.c.l.b16 %v2494
          %v2674 = vunpack.c.h.b16 %v2494
          %v2675 = vunpack.c.l.b16 %v2495
          %v2676 = vunpack.c.h.b16 %v2495
          %v2677 = vunpack.c.l.b16 %v2496
          %v2678 = vunpack.c.h.b16 %v2496
          %v2679 = vunpack.c.l.b16 %v2497
          %v2680 = vunpack.c.h.b16 %v2497
          %v2681 = vunpack.c.l.b16 %v2498
          %v2682 = vunpack.c.h.b16 %v2498
          %v2683 = vunpack.c.l.b16 %v2499
          %v2684 = vunpack.c.h.b16 %v2499
          %v2685 = vunpack.c.l.b16 %v2500
          %v2686 = vunpack.c.h.b16 %v2500
          %v2687 = vunpack.c.l.b16 %v2501
          %v2688 = vunpack.c.h.b16 %v2501
          %v2689 = vunpack.c.l.b16 %v2502
          %v2690 = vunpack.c.h.b16 %v2502
          %v2691 = vunpack.c.l.b16 %v2503
          %v2692 = vunpack.c.h.b16 %v2503
          %v2693 = vunpack.c.l.b16 %v2504
          %v2694 = vunpack.c.h.b16 %v2504
          %v2695 = vunpack.c.l.b16 %v2505
          %v2696 = vunpack.c.h.b16 %v2505
          %v2697 = vunpack.c.l.b16 %v2506
          %v2698 = vunpack.c.h.b16 %v2506
          %v2699 = vunpack.c.l.b16 %v2507
          %v2700 = vunpack.c.h.b16 %v2507
          %v2701 = vunpack.c.l.b16 %v2508
          %v2702 = vunpack.c.h.b16 %v2508
          %v2703 = vunpack.c.l.b16 %v2509
          %v2704 = vunpack.c.h.b16 %v2509
          %v2705 = vunpack.c.l.b16 %v2510
          %v2706 = vunpack.c.h.b16 %v2510
          %v2707 = vunpack.c.l.b16 %v2511
          %v2708 = vunpack.c.h.b16 %v2511
          %v2709 = vunpack.c.l.b16 %v2512
          %v2710 = vunpack.c.h.b16 %v2512
          %v2711 = vunpack.c.l.b16 %v2513
          %v2712 = vunpack.c.h.b16 %v2513
          %v2713 = vunpack.c.l.b16 %v2514
          %v2714 = vunpack.c.h.b16 %v2514
          %v2715 = vunpack.c.l.b16 %v2515
          %v2716 = vunpack.c.h.b16 %v2515
          %v2717 = vunpack.c.l.b16 %v2516
          %v2718 = vunpack.c.h.b16 %v2516
          %v2719 = vunpack.c.l.b16 %v2517
          %v2720 = vunpack.c.h.b16 %v2517
          %v2721 = vunpack.c.l.b16 %v2518
          %v2722 = vunpack.c.h.b16 %v2518
          %v2723 = vunpack.c.l.b16 %v2519
          %v2724 = vunpack.c.h.b16 %v2519
          %v2725 = vunpack.c.l.b16 %v2520
          %v2726 = vunpack.c.h.b16 %v2520
          %v2727 = vunpack.c.l.b16 %v2521
          %v2728 = vunpack.c.h.b16 %v2521
          %v2729 = vunpack.c.l.b16 %v2522
          %v2730 = vunpack.c.h.b16 %v2522
          %v2731 = vunpack.c.l.b16 %v2523
          %v2732 = vunpack.c.h.b16 %v2523
          %v2733 = vunpack.c.l.b16 %v2524
          %v2734 = vunpack.c.h.b16 %v2524
          %v2735 = vunpack.c.l.b16 %v2525
          %v2736 = vunpack.c.h.b16 %v2525
          %v2737 = vunpack.c.l.b16 %v2526
          %v2738 = vunpack.c.h.b16 %v2526
          %v2739 = vunpack.c.l.b16 %v2527
          %v2740 = vunpack.c.h.b16 %v2527
          %v2741 = vunpack.c.l.b16 %v2528
          %v2742 = vunpack.c.h.b16 %v2528
          %v2743 = vpack.c.b16 %v2619, %v2615
          %v2744 = vpack.c.b16 %v2620, %v2616
          %v2745 = vpack.c.b16 %v2621, %v2617
          %v2746 = vpack.c.b16 %v2622, %v2618
          %v2747 = vpack.c.b16 %v2627, %v2623
          %v2748 = vpack.c.b16 %v2628, %v2624
          %v2749 = vpack.c.b16 %v2629, %v2625
          %v2750 = vpack.c.b16 %v2630, %v2626
          %v2751 = vpack.c.b16 %v2635, %v2631
          %v2752 = vpack.c.b16 %v2636, %v2632
          %v2753 = vpack.c.b16 %v2637, %v2633
          %v2754 = vpack.c.b16 %v2638, %v2634
          %v2755 = vpack.c.b16 %v2643, %v2639
          %v2756 = vpack.c.b16 %v2644, %v2640
          %v2757 = vpack.c.b16 %v2645, %v2641
          %v2758 = vpack.c.b16 %v2646, %v2642
          %v2759 = vpack.c.b16 %v2651, %v2647
          %v2760 = vpack.c.b16 %v2652, %v2648
          %v2761 = vpack.c.b16 %v2653, %v2649
          %v2762 = vpack.c.b16 %v2654, %v2650
          %v2763 = vpack.c.b16 %v2659, %v2655
          %v2764 = vpack.c.b16 %v2660, %v2656
          %v2765 = vpack.c.b16 %v2661, %v2657
          %v2766 = vpack.c.b16 %v2662, %v2658
          %v2767 = vpack.c.b16 %v2667, %v2663
          %v2768 = vpack.c.b16 %v2668, %v2664
          %v2769 = vpack.c.b16 %v2669, %v2665
          %v2770 = vpack.c.b16 %v2670, %v2666
          %v2771 = vpack.c.b16 %v2675, %v2671
          %v2772 = vpack.c.b16 %v2676, %v2672
          %v2773 = vpack.c.b16 %v2677, %v2673
          %v2774 = vpack.c.b16 %v2678, %v2674
          %v2775 = vpack.c.b16 %v2683, %v2679
          %v2776 = vpack.c.b16 %v2684, %v2680
          %v2777 = vpack.c.b16 %v2685, %v2681
          %v2778 = vpack.c.b16 %v2686, %v2682
          %v2779 = vpack.c.b16 %v2691, %v2687
          %v2780 = vpack.c.b16 %v2692, %v2688
          %v2781 = vpack.c.b16 %v2693, %v2689
          %v2782 = vpack.c.b16 %v2694, %v2690
          %v2783 = vpack.c.b16 %v2699, %v2695
          %v2784 = vpack.c.b16 %v2700, %v2696
          %v2785 = vpack.c.b16 %v2701, %v2697
          %v2786 = vpack.c.b16 %v2702, %v2698
          %v2787 = vpack.c.b16 %v2707, %v2703
          %v2788 = vpack.c.b16 %v2708, %v2704
          %v2789 = vpack.c.b16 %v2709, %v2705
          %v2790 = vpack.c.b16 %v2710, %v2706
          %v2791 = vpack.c.b16 %v2715, %v2711
          %v2792 = vpack.c.b16 %v2716, %v2712
          %v2793 = vpack.c.b16 %v2717, %v2713
          %v2794 = vpack.c.b16 %v2718, %v2714
          %v2795 = vpack.c.b16 %v2723, %v2719
          %v2796 = vpack.c.b16 %v2724, %v2720
          %v2797 = vpack.c.b16 %v2725, %v2721
          %v2798 = vpack.c.b16 %v2726, %v2722
          %v2799 = vpack.c.b16 %v2731, %v2727
          %v2800 = vpack.c.b16 %v2732, %v2728
          %v2801 = vpack.c.b16 %v2733, %v2729
          %v2802 = vpack.c.b16 %v2734, %v2730
          %v2803 = vpack.c.b16 %v2739, %v2735
          %v2804 = vpack.c.b16 %v2740, %v2736
          %v2805 = vpack.c.b16 %v2741, %v2737
          %v2806 = vpack.c.b16 %v2742, %v2738
          %2871 = vmatprep.subr.bf16.mxu0 %v2772
          %2872 = vmatpush1.bf16.msra.mxu0 %v2771
          %2873 = vmatprep.subr.bf16.mxu0 %v2768
          %2874 = vmatpush1.bf16.msra.mxu0 %v2767
          %2875 = vmatprep.subr.bf16.mxu0 %v2764
          %2876 = vmatpush1.bf16.msra.mxu0 %v2763
          %2877 = vmatprep.subr.bf16.mxu0 %v2760
          %2878 = vmatpush1.bf16.msra.mxu0 %v2759
          %2879 = vmatprep.subr.bf16.mxu0 %v2756
          %2880 = vmatpush1.bf16.msra.mxu0 %v2755
          %2881 = vmatprep.subr.bf16.mxu0 %v2752
          %2882 = vmatpush1.bf16.msra.mxu0 %v2751
          %2883 = vmatprep.subr.bf16.mxu0 %v2748
          %2884 = vmatpush1.bf16.msra.mxu0 %v2747
          %2885 = vmatprep.subr.bf16.mxu0 %v2744
          %2886 = vmatpush1.bf16.msra.mxu0 %v2743
          %2887 = vmatprep.subr.bf16.mxu0 %v2804
          %2888 = vmatpush2.bf16.msra.mxu0 %v2803
          %2889 = vmatprep.subr.bf16.mxu0 %v2800
          %2890 = vmatpush2.bf16.msra.mxu0 %v2799
          %2891 = vmatprep.subr.bf16.mxu0 %v2796
          %2892 = vmatpush2.bf16.msra.mxu0 %v2795
          %2893 = vmatprep.subr.bf16.mxu0 %v2792
          %2894 = vmatpush2.bf16.msra.mxu0 %v2791
          %2895 = vmatprep.subr.bf16.mxu0 %v2788
          %2896 = vmatpush2.bf16.msra.mxu0 %v2787
          %2897 = vmatprep.subr.bf16.mxu0 %v2784
          %2898 = vmatpush2.bf16.msra.mxu0 %v2783
          %2899 = vmatprep.subr.bf16.mxu0 %v2780
          %2900 = vmatpush2.bf16.msra.mxu0 %v2779
          %2901 = vmatprep.subr.bf16.mxu0 %v2776
          %2902 = vmatpush2.bf16.msra.mxu0 %v2775
          %2903 = vmatprep.mubr.bf16.mxu0 %v2464
          %2904 = vmatmul.mubr.bf16.gmra.mxu0 %v2463
          %v2905 = vpop.f32.mrf.mxu0
          %v2906 = vadd.f32 %v2534, %v2905
          %v2907 = vpop.f32.mrf.mxu0
          %v2908 = vadd.f32 %v2538, %v2907
          %v2909 = vpop.f32.mrf.mxu0
          %v2910 = vadd.f32 %v2534, %v2909
          %v2911 = vpop.f32.mrf.mxu0
          %v2912 = vadd.f32 %v2538, %v2911
          %2913 = vdwg.mxu0
          %2914 = vmatprep.subr.bf16.mxu0 %v2774
          %2915 = vmatpush1.bf16.msra.mxu0 %v2773
          %2916 = vmatprep.subr.bf16.mxu0 %v2770
          %2917 = vmatpush1.bf16.msra.mxu0 %v2769
          %2918 = vmatprep.subr.bf16.mxu0 %v2766
          %2919 = vmatpush1.bf16.msra.mxu0 %v2765
          %2920 = vmatprep.subr.bf16.mxu0 %v2762
          %2921 = vmatpush1.bf16.msra.mxu0 %v2761
          %2922 = vmatprep.subr.bf16.mxu0 %v2758
          %2923 = vmatpush1.bf16.msra.mxu0 %v2757
          %2924 = vmatprep.subr.bf16.mxu0 %v2754
          %2925 = vmatpush1.bf16.msra.mxu0 %v2753
          %2926 = vmatprep.subr.bf16.mxu0 %v2750
          %2927 = vmatpush1.bf16.msra.mxu0 %v2749
          %2928 = vmatprep.subr.bf16.mxu0 %v2746
          %2929 = vmatpush1.bf16.msra.mxu0 %v2745
          %2930 = vmatprep.subr.bf16.mxu0 %v2806
          %2931 = vmatpush2.bf16.msra.mxu0 %v2805
          %2932 = vmatprep.subr.bf16.mxu0 %v2802
          %2933 = vmatpush2.bf16.msra.mxu0 %v2801
          %2934 = vmatprep.subr.bf16.mxu0 %v2798
          %2935 = vmatpush2.bf16.msra.mxu0 %v2797
          %2936 = vmatprep.subr.bf16.mxu0 %v2794
          %2937 = vmatpush2.bf16.msra.mxu0 %v2793
          %2938 = vmatprep.subr.bf16.mxu0 %v2790
          %2939 = vmatpush2.bf16.msra.mxu0 %v2789
          %2940 = vmatprep.subr.bf16.mxu0 %v2786
          %2941 = vmatpush2.bf16.msra.mxu0 %v2785
          %2942 = vmatprep.subr.bf16.mxu0 %v2782
          %2943 = vmatpush2.bf16.msra.mxu0 %v2781
          %2944 = vmatprep.subr.bf16.mxu0 %v2778
          %2945 = vmatpush2.bf16.msra.mxu0 %v2777
          %2946 = vmatprep.mubr.bf16.mxu0 %v2464
          %2947 = vmatmul.mubr.bf16.gmra.mxu0 %v2463
          %v2948 = vpop.f32.mrf.mxu0
          %v2949 = vadd.f32 %v2542, %v2948
          %v2950 = vpop.f32.mrf.mxu0
          %v2951 = vadd.f32 %v2546, %v2950
          %v2952 = vpop.f32.mrf.mxu0
          %v2953 = vadd.f32 %v2542, %v2952
          %v2954 = vpop.f32.mrf.mxu0
          %v2955 = vadd.f32 %v2546, %v2954
          %2956 = vdwg.mxu0
          %v2957 = vmax.f32 %v2906, 0.0
          %v2958 = vmax.f32 %v2908, 0.0
          %v2959 = vmax.f32 %v2949, 0.0
          %v2960 = vmax.f32 %v2951, 0.0
          %v2961 = vmax.f32 %v2910, 0.0
          %v2962 = vmax.f32 %v2912, 0.0
          %v2963 = vmax.f32 %v2953, 0.0
          %v2964 = vmax.f32 %v2955, 0.0
          %v2965 = vpack.c.bf16 %v2961, %v2957
          %v2966 = vpack.c.bf16 %v2962, %v2958
          %v2967 = vpack.c.bf16 %v2963, %v2959
          %v2968 = vpack.c.bf16 %v2964, %v2960
          %v2969 = vld [vmem:[#allocation13] sm:$0xff]
          %v2970 = vld [vmem:[#allocation13 + $0x8] sm:$0xff]
          %v2971 = vld [vmem:[#allocation13 + $0x10] sm:$0xff]
          %v2972 = vld [vmem:[#allocation13 + $0x18] sm:$0xff]
          %v2973 = vld [vmem:[#allocation13 + $0x20] sm:$0xff]
          %v2974 = vld [vmem:[#allocation13 + $0x28] sm:$0xff]
          %v2975 = vld [vmem:[#allocation13 + $0x30] sm:$0xff]
          %v2976 = vld [vmem:[#allocation13 + $0x38] sm:$0xff]
          %v2977 = vld [vmem:[#allocation13 + $0x40] sm:$0xff]
          %v2978 = vld [vmem:[#allocation13 + $0x48] sm:$0xff]
          %v2979 = vld [vmem:[#allocation13 + $0x50] sm:$0xff]
          %v2980 = vld [vmem:[#allocation13 + $0x58] sm:$0xff]
          %v2981 = vld [vmem:[#allocation13 + $0x60] sm:$0xff]
          %v2982 = vld [vmem:[#allocation13 + $0x68] sm:$0xff]
          %v2983 = vld [vmem:[#allocation13 + $0x70] sm:$0xff]
          %v2984 = vld [vmem:[#allocation13 + $0x78] sm:$0xff]
          %v2985 = vld [vmem:[#allocation13 + $0x80] sm:$0xff]
          %v2986 = vld [vmem:[#allocation13 + $0x88] sm:$0xff]
          %v2987 = vld [vmem:[#allocation13 + $0x90] sm:$0xff]
          %v2988 = vld [vmem:[#allocation13 + $0x98] sm:$0xff]
          %v2989 = vld [vmem:[#allocation13 + $0xa0] sm:$0xff]
          %v2990 = vld [vmem:[#allocation13 + $0xa8] sm:$0xff]
          %v2991 = vld [vmem:[#allocation13 + $0xb0] sm:$0xff]
          %v2992 = vld [vmem:[#allocation13 + $0xb8] sm:$0xff]
          %v2993 = vld [vmem:[#allocation13 + $0xc0] sm:$0xff]
          %v2994 = vld [vmem:[#allocation13 + $0xc8] sm:$0xff]
          %v2995 = vld [vmem:[#allocation13 + $0xd0] sm:$0xff]
          %v2996 = vld [vmem:[#allocation13 + $0xd8] sm:$0xff]
          %v2997 = vld [vmem:[#allocation13 + $0xe0] sm:$0xff]
          %v2998 = vld [vmem:[#allocation13 + $0xe8] sm:$0xff]
          %v2999 = vld [vmem:[#allocation13 + $0xf0] sm:$0xff]
          %v3000 = vld [vmem:[#allocation13 + $0xf8] sm:$0xff]
          %v3001 = vld [vmem:[#allocation13 + $0x100] sm:$0xff]
          %v3002 = vld [vmem:[#allocation13 + $0x108] sm:$0xff]
          %v3003 = vld [vmem:[#allocation13 + $0x110] sm:$0xff]
          %v3004 = vld [vmem:[#allocation13 + $0x118] sm:$0xff]
          %v3005 = vld [vmem:[#allocation13 + $0x120] sm:$0xff]
          %v3006 = vld [vmem:[#allocation13 + $0x128] sm:$0xff]
          %v3007 = vld [vmem:[#allocation13 + $0x130] sm:$0xff]
          %v3008 = vld [vmem:[#allocation13 + $0x138] sm:$0xff]
          %v3009 = vld [vmem:[#allocation13 + $0x140] sm:$0xff]
          %v3010 = vld [vmem:[#allocation13 + $0x148] sm:$0xff]
          %v3011 = vld [vmem:[#allocation13 + $0x150] sm:$0xff]
          %v3012 = vld [vmem:[#allocation13 + $0x158] sm:$0xff]
          %v3013 = vld [vmem:[#allocation13 + $0x160] sm:$0xff]
          %v3014 = vld [vmem:[#allocation13 + $0x168] sm:$0xff]
          %v3015 = vld [vmem:[#allocation13 + $0x170] sm:$0xff]
          %v3016 = vld [vmem:[#allocation13 + $0x178] sm:$0xff]
          %v3017 = vld [vmem:[#allocation13 + $0x180] sm:$0xff]
          %v3018 = vld [vmem:[#allocation13 + $0x188] sm:$0xff]
          %v3019 = vld [vmem:[#allocation13 + $0x190] sm:$0xff]
          %v3020 = vld [vmem:[#allocation13 + $0x198] sm:$0xff]
          %v3021 = vld [vmem:[#allocation13 + $0x1a0] sm:$0xff]
          %v3022 = vld [vmem:[#allocation13 + $0x1a8] sm:$0xff]
          %v3023 = vld [vmem:[#allocation13 + $0x1b0] sm:$0xff]
          %v3024 = vld [vmem:[#allocation13 + $0x1b8] sm:$0xff]
          %v3025 = vld [vmem:[#allocation13 + $0x1c0] sm:$0xff]
          %v3026 = vld [vmem:[#allocation13 + $0x1c8] sm:$0xff]
          %v3027 = vld [vmem:[#allocation13 + $0x1d0] sm:$0xff]
          %v3028 = vld [vmem:[#allocation13 + $0x1d8] sm:$0xff]
          %v3029 = vld [vmem:[#allocation13 + $0x1e0] sm:$0xff]
          %v3030 = vld [vmem:[#allocation13 + $0x1e8] sm:$0xff]
          %v3031 = vld [vmem:[#allocation13 + $0x1f0] sm:$0xff]
          %v3032 = vld [vmem:[#allocation13 + $0x1f8] sm:$0xff]
          %v3033 = vld [vmem:[#allocation13 + $0x200] sm:$0xff]
          %v3034 = vld [vmem:[#allocation13 + $0x208] sm:$0xff]
          %v3035 = vld [vmem:[#allocation13 + $0x210] sm:$0xff]
          %v3036 = vld [vmem:[#allocation13 + $0x218] sm:$0xff]
          %v3037 = vld [vmem:[#allocation13 + $0x220] sm:$0xff]
          %v3038 = vld [vmem:[#allocation13 + $0x228] sm:$0xff]
          %v3039 = vld [vmem:[#allocation13 + $0x230] sm:$0xff]
          %v3040 = vld [vmem:[#allocation13 + $0x238] sm:$0xff]
          %v3041 = vld [vmem:[#allocation13 + $0x240] sm:$0xff]
          %v3042 = vld [vmem:[#allocation13 + $0x248] sm:$0xff]
          %v3043 = vld [vmem:[#allocation13 + $0x250] sm:$0xff]
          %v3044 = vld [vmem:[#allocation13 + $0x258] sm:$0xff]
          %v3045 = vld [vmem:[#allocation13 + $0x260] sm:$0xff]
          %v3046 = vld [vmem:[#allocation13 + $0x268] sm:$0xff]
          %v3047 = vld [vmem:[#allocation13 + $0x270] sm:$0xff]
          %v3048 = vld [vmem:[#allocation13 + $0x278] sm:$0xff]
          %v3049 = vld [vmem:[#allocation13 + $0x280] sm:$0xff]
          %v3050 = vld [vmem:[#allocation13 + $0x288] sm:$0xff]
          %v3051 = vld [vmem:[#allocation13 + $0x290] sm:$0xff]
          %v3052 = vld [vmem:[#allocation13 + $0x298] sm:$0xff]
          %v3053 = vld [vmem:[#allocation13 + $0x2a0] sm:$0xff]
          %v3054 = vld [vmem:[#allocation13 + $0x2a8] sm:$0xff]
          %v3055 = vld [vmem:[#allocation13 + $0x2b0] sm:$0xff]
          %v3056 = vld [vmem:[#allocation13 + $0x2b8] sm:$0xff]
          %v3057 = vld [vmem:[#allocation13 + $0x2c0] sm:$0xff]
          %v3058 = vld [vmem:[#allocation13 + $0x2c8] sm:$0xff]
          %v3059 = vld [vmem:[#allocation13 + $0x2d0] sm:$0xff]
          %v3060 = vld [vmem:[#allocation13 + $0x2d8] sm:$0xff]
          %v3061 = vld [vmem:[#allocation13 + $0x2e0] sm:$0xff]
          %v3062 = vld [vmem:[#allocation13 + $0x2e8] sm:$0xff]
          %v3063 = vld [vmem:[#allocation13 + $0x2f0] sm:$0xff]
          %v3064 = vld [vmem:[#allocation13 + $0x2f8] sm:$0xff]
          %v3065 = vld [vmem:[#allocation13 + $0x300] sm:$0xff]
          %v3066 = vld [vmem:[#allocation13 + $0x308] sm:$0xff]
          %v3067 = vld [vmem:[#allocation13 + $0x310] sm:$0xff]
          %v3068 = vld [vmem:[#allocation13 + $0x318] sm:$0xff]
          %v3069 = vld [vmem:[#allocation13 + $0x320] sm:$0xff]
          %v3070 = vld [vmem:[#allocation13 + $0x328] sm:$0xff]
          %v3071 = vld [vmem:[#allocation13 + $0x330] sm:$0xff]
          %v3072 = vld [vmem:[#allocation13 + $0x338] sm:$0xff]
          %v3073 = vld [vmem:[#allocation13 + $0x340] sm:$0xff]
          %v3074 = vld [vmem:[#allocation13 + $0x348] sm:$0xff]
          %v3075 = vld [vmem:[#allocation13 + $0x350] sm:$0xff]
          %v3076 = vld [vmem:[#allocation13 + $0x358] sm:$0xff]
          %v3077 = vld [vmem:[#allocation13 + $0x360] sm:$0xff]
          %v3078 = vld [vmem:[#allocation13 + $0x368] sm:$0xff]
          %v3079 = vld [vmem:[#allocation13 + $0x370] sm:$0xff]
          %v3080 = vld [vmem:[#allocation13 + $0x378] sm:$0xff]
          %v3081 = vld [vmem:[#allocation13 + $0x380] sm:$0xff]
          %v3082 = vld [vmem:[#allocation13 + $0x388] sm:$0xff]
          %v3083 = vld [vmem:[#allocation13 + $0x390] sm:$0xff]
          %v3084 = vld [vmem:[#allocation13 + $0x398] sm:$0xff]
          %v3085 = vld [vmem:[#allocation13 + $0x3a0] sm:$0xff]
          %v3086 = vld [vmem:[#allocation13 + $0x3a8] sm:$0xff]
          %v3087 = vld [vmem:[#allocation13 + $0x3b0] sm:$0xff]
          %v3088 = vld [vmem:[#allocation13 + $0x3b8] sm:$0xff]
          %v3089 = vld [vmem:[#allocation13 + $0x3c0] sm:$0xff]
          %v3090 = vld [vmem:[#allocation13 + $0x3c8] sm:$0xff]
          %v3091 = vld [vmem:[#allocation13 + $0x3d0] sm:$0xff]
          %v3092 = vld [vmem:[#allocation13 + $0x3d8] sm:$0xff]
          %v3093 = vld [vmem:[#allocation13 + $0x3e0] sm:$0xff]
          %v3094 = vld [vmem:[#allocation13 + $0x3e8] sm:$0xff]
          %v3095 = vld [vmem:[#allocation13 + $0x3f0] sm:$0xff]
          %v3096 = vld [vmem:[#allocation13 + $0x3f8] sm:$0xff]
          %v3097 = vld [vmem:[%s11] sm:$0xf]
          %v3099 = vlaneseq
          %v3100 = vshrl.u32 %v3099, 7
          %v3101 = vsub.s32 0, %v3100
          %v3102 = vrot.slane %v3097, %v3101
          %v3103 = vlaneseq
          %v3104 = vshrl.u32 %v3103, 7
          %v3105 = vsub.s32 1, %v3104
          %v3106 = vrot.slane %v3097, %v3105
          %v3107 = vlaneseq
          %v3108 = vshrl.u32 %v3107, 7
          %v3109 = vsub.s32 2, %v3108
          %v3110 = vrot.slane %v3097, %v3109
          %v3111 = vlaneseq
          %v3112 = vshrl.u32 %v3111, 7
          %v3113 = vsub.s32 3, %v3112
          %v3114 = vrot.slane %v3097, %v3113
          %v3247 = vunpack.c.l.b16 %v2969
          %v3248 = vunpack.c.h.b16 %v2969
          %v3249 = vunpack.c.l.b16 %v2970
          %v3250 = vunpack.c.h.b16 %v2970
          %v3251 = vunpack.c.l.b16 %v2971
          %v3252 = vunpack.c.h.b16 %v2971
          %v3253 = vunpack.c.l.b16 %v2972
          %v3254 = vunpack.c.h.b16 %v2972
          %v3255 = vunpack.c.l.b16 %v2973
          %v3256 = vunpack.c.h.b16 %v2973
          %v3257 = vunpack.c.l.b16 %v2974
          %v3258 = vunpack.c.h.b16 %v2974
          %v3259 = vunpack.c.l.b16 %v2975
          %v3260 = vunpack.c.h.b16 %v2975
          %v3261 = vunpack.c.l.b16 %v2976
          %v3262 = vunpack.c.h.b16 %v2976
          %v3263 = vunpack.c.l.b16 %v2977
          %v3264 = vunpack.c.h.b16 %v2977
          %v3265 = vunpack.c.l.b16 %v2978
          %v3266 = vunpack.c.h.b16 %v2978
          %v3267 = vunpack.c.l.b16 %v2979
          %v3268 = vunpack.c.h.b16 %v2979
          %v3269 = vunpack.c.l.b16 %v2980
          %v3270 = vunpack.c.h.b16 %v2980
          %v3271 = vunpack.c.l.b16 %v2981
          %v3272 = vunpack.c.h.b16 %v2981
          %v3273 = vunpack.c.l.b16 %v2982
          %v3274 = vunpack.c.h.b16 %v2982
          %v3275 = vunpack.c.l.b16 %v2983
          %v3276 = vunpack.c.h.b16 %v2983
          %v3277 = vunpack.c.l.b16 %v2984
          %v3278 = vunpack.c.h.b16 %v2984
          %v3279 = vunpack.c.l.b16 %v2985
          %v3280 = vunpack.c.h.b16 %v2985
          %v3281 = vunpack.c.l.b16 %v2986
          %v3282 = vunpack.c.h.b16 %v2986
          %v3283 = vunpack.c.l.b16 %v2987
          %v3284 = vunpack.c.h.b16 %v2987
          %v3285 = vunpack.c.l.b16 %v2988
          %v3286 = vunpack.c.h.b16 %v2988
          %v3287 = vunpack.c.l.b16 %v2989
          %v3288 = vunpack.c.h.b16 %v2989
          %v3289 = vunpack.c.l.b16 %v2990
          %v3290 = vunpack.c.h.b16 %v2990
          %v3291 = vunpack.c.l.b16 %v2991
          %v3292 = vunpack.c.h.b16 %v2991
          %v3293 = vunpack.c.l.b16 %v2992
          %v3294 = vunpack.c.h.b16 %v2992
          %v3295 = vunpack.c.l.b16 %v2993
          %v3296 = vunpack.c.h.b16 %v2993
          %v3297 = vunpack.c.l.b16 %v2994
          %v3298 = vunpack.c.h.b16 %v2994
          %v3299 = vunpack.c.l.b16 %v2995
          %v3300 = vunpack.c.h.b16 %v2995
          %v3301 = vunpack.c.l.b16 %v2996
          %v3302 = vunpack.c.h.b16 %v2996
          %v3303 = vunpack.c.l.b16 %v2997
          %v3304 = vunpack.c.h.b16 %v2997
          %v3305 = vunpack.c.l.b16 %v2998
          %v3306 = vunpack.c.h.b16 %v2998
          %v3307 = vunpack.c.l.b16 %v2999
          %v3308 = vunpack.c.h.b16 %v2999
          %v3309 = vunpack.c.l.b16 %v3000
          %v3310 = vunpack.c.h.b16 %v3000
          %v3311 = vunpack.c.l.b16 %v3001
          %v3312 = vunpack.c.h.b16 %v3001
          %v3313 = vunpack.c.l.b16 %v3002
          %v3314 = vunpack.c.h.b16 %v3002
          %v3315 = vunpack.c.l.b16 %v3003
          %v3316 = vunpack.c.h.b16 %v3003
          %v3317 = vunpack.c.l.b16 %v3004
          %v3318 = vunpack.c.h.b16 %v3004
          %v3319 = vunpack.c.l.b16 %v3005
          %v3320 = vunpack.c.h.b16 %v3005
          %v3321 = vunpack.c.l.b16 %v3006
          %v3322 = vunpack.c.h.b16 %v3006
          %v3323 = vunpack.c.l.b16 %v3007
          %v3324 = vunpack.c.h.b16 %v3007
          %v3325 = vunpack.c.l.b16 %v3008
          %v3326 = vunpack.c.h.b16 %v3008
          %v3327 = vunpack.c.l.b16 %v3009
          %v3328 = vunpack.c.h.b16 %v3009
          %v3329 = vunpack.c.l.b16 %v3010
          %v3330 = vunpack.c.h.b16 %v3010
          %v3331 = vunpack.c.l.b16 %v3011
          %v3332 = vunpack.c.h.b16 %v3011
          %v3333 = vunpack.c.l.b16 %v3012
          %v3334 = vunpack.c.h.b16 %v3012
          %v3335 = vunpack.c.l.b16 %v3013
          %v3336 = vunpack.c.h.b16 %v3013
          %v3337 = vunpack.c.l.b16 %v3014
          %v3338 = vunpack.c.h.b16 %v3014
          %v3339 = vunpack.c.l.b16 %v3015
          %v3340 = vunpack.c.h.b16 %v3015
          %v3341 = vunpack.c.l.b16 %v3016
          %v3342 = vunpack.c.h.b16 %v3016
          %v3343 = vunpack.c.l.b16 %v3017
          %v3344 = vunpack.c.h.b16 %v3017
          %v3345 = vunpack.c.l.b16 %v3018
          %v3346 = vunpack.c.h.b16 %v3018
          %v3347 = vunpack.c.l.b16 %v3019
          %v3348 = vunpack.c.h.b16 %v3019
          %v3349 = vunpack.c.l.b16 %v3020
          %v3350 = vunpack.c.h.b16 %v3020
          %v3351 = vunpack.c.l.b16 %v3021
          %v3352 = vunpack.c.h.b16 %v3021
          %v3353 = vunpack.c.l.b16 %v3022
          %v3354 = vunpack.c.h.b16 %v3022
          %v3355 = vunpack.c.l.b16 %v3023
          %v3356 = vunpack.c.h.b16 %v3023
          %v3357 = vunpack.c.l.b16 %v3024
          %v3358 = vunpack.c.h.b16 %v3024
          %v3359 = vunpack.c.l.b16 %v3025
          %v3360 = vunpack.c.h.b16 %v3025
          %v3361 = vunpack.c.l.b16 %v3026
          %v3362 = vunpack.c.h.b16 %v3026
          %v3363 = vunpack.c.l.b16 %v3027
          %v3364 = vunpack.c.h.b16 %v3027
          %v3365 = vunpack.c.l.b16 %v3028
          %v3366 = vunpack.c.h.b16 %v3028
          %v3367 = vunpack.c.l.b16 %v3029
          %v3368 = vunpack.c.h.b16 %v3029
          %v3369 = vunpack.c.l.b16 %v3030
          %v3370 = vunpack.c.h.b16 %v3030
          %v3371 = vunpack.c.l.b16 %v3031
          %v3372 = vunpack.c.h.b16 %v3031
          %v3373 = vunpack.c.l.b16 %v3032
          %v3374 = vunpack.c.h.b16 %v3032
          %v3375 = vunpack.c.l.b16 %v3033
          %v3376 = vunpack.c.h.b16 %v3033
          %v3377 = vunpack.c.l.b16 %v3034
          %v3378 = vunpack.c.h.b16 %v3034
          %v3379 = vunpack.c.l.b16 %v3035
          %v3380 = vunpack.c.h.b16 %v3035
          %v3381 = vunpack.c.l.b16 %v3036
          %v3382 = vunpack.c.h.b16 %v3036
          %v3383 = vunpack.c.l.b16 %v3037
          %v3384 = vunpack.c.h.b16 %v3037
          %v3385 = vunpack.c.l.b16 %v3038
          %v3386 = vunpack.c.h.b16 %v3038
          %v3387 = vunpack.c.l.b16 %v3039
          %v3388 = vunpack.c.h.b16 %v3039
          %v3389 = vunpack.c.l.b16 %v3040
          %v3390 = vunpack.c.h.b16 %v3040
          %v3391 = vunpack.c.l.b16 %v3041
          %v3392 = vunpack.c.h.b16 %v3041
          %v3393 = vunpack.c.l.b16 %v3042
          %v3394 = vunpack.c.h.b16 %v3042
          %v3395 = vunpack.c.l.b16 %v3043
          %v3396 = vunpack.c.h.b16 %v3043
          %v3397 = vunpack.c.l.b16 %v3044
          %v3398 = vunpack.c.h.b16 %v3044
          %v3399 = vunpack.c.l.b16 %v3045
          %v3400 = vunpack.c.h.b16 %v3045
          %v3401 = vunpack.c.l.b16 %v3046
          %v3402 = vunpack.c.h.b16 %v3046
          %v3403 = vunpack.c.l.b16 %v3047
          %v3404 = vunpack.c.h.b16 %v3047
          %v3405 = vunpack.c.l.b16 %v3048
          %v3406 = vunpack.c.h.b16 %v3048
          %v3407 = vunpack.c.l.b16 %v3049
          %v3408 = vunpack.c.h.b16 %v3049
          %v3409 = vunpack.c.l.b16 %v3050
          %v3410 = vunpack.c.h.b16 %v3050
          %v3411 = vunpack.c.l.b16 %v3051
          %v3412 = vunpack.c.h.b16 %v3051
          %v3413 = vunpack.c.l.b16 %v3052
          %v3414 = vunpack.c.h.b16 %v3052
          %v3415 = vunpack.c.l.b16 %v3053
          %v3416 = vunpack.c.h.b16 %v3053
          %v3417 = vunpack.c.l.b16 %v3054
          %v3418 = vunpack.c.h.b16 %v3054
          %v3419 = vunpack.c.l.b16 %v3055
          %v3420 = vunpack.c.h.b16 %v3055
          %v3421 = vunpack.c.l.b16 %v3056
          %v3422 = vunpack.c.h.b16 %v3056
          %v3423 = vunpack.c.l.b16 %v3057
          %v3424 = vunpack.c.h.b16 %v3057
          %v3425 = vunpack.c.l.b16 %v3058
          %v3426 = vunpack.c.h.b16 %v3058
          %v3427 = vunpack.c.l.b16 %v3059
          %v3428 = vunpack.c.h.b16 %v3059
          %v3429 = vunpack.c.l.b16 %v3060
          %v3430 = vunpack.c.h.b16 %v3060
          %v3431 = vunpack.c.l.b16 %v3061
          %v3432 = vunpack.c.h.b16 %v3061
          %v3433 = vunpack.c.l.b16 %v3062
          %v3434 = vunpack.c.h.b16 %v3062
          %v3435 = vunpack.c.l.b16 %v3063
          %v3436 = vunpack.c.h.b16 %v3063
          %v3437 = vunpack.c.l.b16 %v3064
          %v3438 = vunpack.c.h.b16 %v3064
          %v3439 = vunpack.c.l.b16 %v3065
          %v3440 = vunpack.c.h.b16 %v3065
          %v3441 = vunpack.c.l.b16 %v3066
          %v3442 = vunpack.c.h.b16 %v3066
          %v3443 = vunpack.c.l.b16 %v3067
          %v3444 = vunpack.c.h.b16 %v3067
          %v3445 = vunpack.c.l.b16 %v3068
          %v3446 = vunpack.c.h.b16 %v3068
          %v3447 = vunpack.c.l.b16 %v3069
          %v3448 = vunpack.c.h.b16 %v3069
          %v3449 = vunpack.c.l.b16 %v3070
          %v3450 = vunpack.c.h.b16 %v3070
          %v3451 = vunpack.c.l.b16 %v3071
          %v3452 = vunpack.c.h.b16 %v3071
          %v3453 = vunpack.c.l.b16 %v3072
          %v3454 = vunpack.c.h.b16 %v3072
          %v3455 = vunpack.c.l.b16 %v3073
          %v3456 = vunpack.c.h.b16 %v3073
          %v3457 = vunpack.c.l.b16 %v3074
          %v3458 = vunpack.c.h.b16 %v3074
          %v3459 = vunpack.c.l.b16 %v3075
          %v3460 = vunpack.c.h.b16 %v3075
          %v3461 = vunpack.c.l.b16 %v3076
          %v3462 = vunpack.c.h.b16 %v3076
          %v3463 = vunpack.c.l.b16 %v3077
          %v3464 = vunpack.c.h.b16 %v3077
          %v3465 = vunpack.c.l.b16 %v3078
          %v3466 = vunpack.c.h.b16 %v3078
          %v3467 = vunpack.c.l.b16 %v3079
          %v3468 = vunpack.c.h.b16 %v3079
          %v3469 = vunpack.c.l.b16 %v3080
          %v3470 = vunpack.c.h.b16 %v3080
          %v3471 = vunpack.c.l.b16 %v3081
          %v3472 = vunpack.c.h.b16 %v3081
          %v3473 = vunpack.c.l.b16 %v3082
          %v3474 = vunpack.c.h.b16 %v3082
          %v3475 = vunpack.c.l.b16 %v3083
          %v3476 = vunpack.c.h.b16 %v3083
          %v3477 = vunpack.c.l.b16 %v3084
          %v3478 = vunpack.c.h.b16 %v3084
          %v3479 = vunpack.c.l.b16 %v3085
          %v3480 = vunpack.c.h.b16 %v3085
          %v3481 = vunpack.c.l.b16 %v3086
          %v3482 = vunpack.c.h.b16 %v3086
          %v3483 = vunpack.c.l.b16 %v3087
          %v3484 = vunpack.c.h.b16 %v3087
          %v3485 = vunpack.c.l.b16 %v3088
          %v3486 = vunpack.c.h.b16 %v3088
          %v3487 = vunpack.c.l.b16 %v3089
          %v3488 = vunpack.c.h.b16 %v3089
          %v3489 = vunpack.c.l.b16 %v3090
          %v3490 = vunpack.c.h.b16 %v3090
          %v3491 = vunpack.c.l.b16 %v3091
          %v3492 = vunpack.c.h.b16 %v3091
          %v3493 = vunpack.c.l.b16 %v3092
          %v3494 = vunpack.c.h.b16 %v3092
          %v3495 = vunpack.c.l.b16 %v3093
          %v3496 = vunpack.c.h.b16 %v3093
          %v3497 = vunpack.c.l.b16 %v3094
          %v3498 = vunpack.c.h.b16 %v3094
          %v3499 = vunpack.c.l.b16 %v3095
          %v3500 = vunpack.c.h.b16 %v3095
          %v3501 = vunpack.c.l.b16 %v3096
          %v3502 = vunpack.c.h.b16 %v3096
          %v3503 = vpack.c.b16 %v3251, %v3247
          %v3504 = vpack.c.b16 %v3252, %v3248
          %v3505 = vpack.c.b16 %v3253, %v3249
          %v3506 = vpack.c.b16 %v3254, %v3250
          %v3507 = vpack.c.b16 %v3259, %v3255
          %v3508 = vpack.c.b16 %v3260, %v3256
          %v3509 = vpack.c.b16 %v3261, %v3257
          %v3510 = vpack.c.b16 %v3262, %v3258
          %v3511 = vpack.c.b16 %v3267, %v3263
          %v3512 = vpack.c.b16 %v3268, %v3264
          %v3513 = vpack.c.b16 %v3269, %v3265
          %v3514 = vpack.c.b16 %v3270, %v3266
          %v3515 = vpack.c.b16 %v3275, %v3271
          %v3516 = vpack.c.b16 %v3276, %v3272
          %v3517 = vpack.c.b16 %v3277, %v3273
          %v3518 = vpack.c.b16 %v3278, %v3274
          %v3519 = vpack.c.b16 %v3283, %v3279
          %v3520 = vpack.c.b16 %v3284, %v3280
          %v3521 = vpack.c.b16 %v3285, %v3281
          %v3522 = vpack.c.b16 %v3286, %v3282
          %v3523 = vpack.c.b16 %v3291, %v3287
          %v3524 = vpack.c.b16 %v3292, %v3288
          %v3525 = vpack.c.b16 %v3293, %v3289
          %v3526 = vpack.c.b16 %v3294, %v3290
          %v3527 = vpack.c.b16 %v3299, %v3295
          %v3528 = vpack.c.b16 %v3300, %v3296
          %v3529 = vpack.c.b16 %v3301, %v3297
          %v3530 = vpack.c.b16 %v3302, %v3298
          %v3531 = vpack.c.b16 %v3307, %v3303
          %v3532 = vpack.c.b16 %v3308, %v3304
          %v3533 = vpack.c.b16 %v3309, %v3305
          %v3534 = vpack.c.b16 %v3310, %v3306
          %v3535 = vpack.c.b16 %v3315, %v3311
          %v3536 = vpack.c.b16 %v3316, %v3312
          %v3537 = vpack.c.b16 %v3317, %v3313
          %v3538 = vpack.c.b16 %v3318, %v3314
          %v3539 = vpack.c.b16 %v3323, %v3319
          %v3540 = vpack.c.b16 %v3324, %v3320
          %v3541 = vpack.c.b16 %v3325, %v3321
          %v3542 = vpack.c.b16 %v3326, %v3322
          %v3543 = vpack.c.b16 %v3331, %v3327
          %v3544 = vpack.c.b16 %v3332, %v3328
          %v3545 = vpack.c.b16 %v3333, %v3329
          %v3546 = vpack.c.b16 %v3334, %v3330
          %v3547 = vpack.c.b16 %v3339, %v3335
          %v3548 = vpack.c.b16 %v3340, %v3336
          %v3549 = vpack.c.b16 %v3341, %v3337
          %v3550 = vpack.c.b16 %v3342, %v3338
          %v3551 = vpack.c.b16 %v3347, %v3343
          %v3552 = vpack.c.b16 %v3348, %v3344
          %v3553 = vpack.c.b16 %v3349, %v3345
          %v3554 = vpack.c.b16 %v3350, %v3346
          %v3555 = vpack.c.b16 %v3355, %v3351
          %v3556 = vpack.c.b16 %v3356, %v3352
          %v3557 = vpack.c.b16 %v3357, %v3353
          %v3558 = vpack.c.b16 %v3358, %v3354
          %v3559 = vpack.c.b16 %v3363, %v3359
          %v3560 = vpack.c.b16 %v3364, %v3360
          %v3561 = vpack.c.b16 %v3365, %v3361
          %v3562 = vpack.c.b16 %v3366, %v3362
          %v3563 = vpack.c.b16 %v3371, %v3367
          %v3564 = vpack.c.b16 %v3372, %v3368
          %v3565 = vpack.c.b16 %v3373, %v3369
          %v3566 = vpack.c.b16 %v3374, %v3370
          %v3567 = vpack.c.b16 %v3379, %v3375
          %v3568 = vpack.c.b16 %v3380, %v3376
          %v3569 = vpack.c.b16 %v3381, %v3377
          %v3570 = vpack.c.b16 %v3382, %v3378
          %v3571 = vpack.c.b16 %v3387, %v3383
          %v3572 = vpack.c.b16 %v3388, %v3384
          %v3573 = vpack.c.b16 %v3389, %v3385
          %v3574 = vpack.c.b16 %v3390, %v3386
          %v3575 = vpack.c.b16 %v3395, %v3391
          %v3576 = vpack.c.b16 %v3396, %v3392
          %v3577 = vpack.c.b16 %v3397, %v3393
          %v3578 = vpack.c.b16 %v3398, %v3394
          %v3579 = vpack.c.b16 %v3403, %v3399
          %v3580 = vpack.c.b16 %v3404, %v3400
          %v3581 = vpack.c.b16 %v3405, %v3401
          %v3582 = vpack.c.b16 %v3406, %v3402
          %v3583 = vpack.c.b16 %v3411, %v3407
          %v3584 = vpack.c.b16 %v3412, %v3408
          %v3585 = vpack.c.b16 %v3413, %v3409
          %v3586 = vpack.c.b16 %v3414, %v3410
          %v3587 = vpack.c.b16 %v3419, %v3415
          %v3588 = vpack.c.b16 %v3420, %v3416
          %v3589 = vpack.c.b16 %v3421, %v3417
          %v3590 = vpack.c.b16 %v3422, %v3418
          %v3591 = vpack.c.b16 %v3427, %v3423
          %v3592 = vpack.c.b16 %v3428, %v3424
          %v3593 = vpack.c.b16 %v3429, %v3425
          %v3594 = vpack.c.b16 %v3430, %v3426
          %v3595 = vpack.c.b16 %v3435, %v3431
          %v3596 = vpack.c.b16 %v3436, %v3432
          %v3597 = vpack.c.b16 %v3437, %v3433
          %v3598 = vpack.c.b16 %v3438, %v3434
          %v3599 = vpack.c.b16 %v3443, %v3439
          %v3600 = vpack.c.b16 %v3444, %v3440
          %v3601 = vpack.c.b16 %v3445, %v3441
          %v3602 = vpack.c.b16 %v3446, %v3442
          %v3603 = vpack.c.b16 %v3451, %v3447
          %v3604 = vpack.c.b16 %v3452, %v3448
          %v3605 = vpack.c.b16 %v3453, %v3449
          %v3606 = vpack.c.b16 %v3454, %v3450
          %v3607 = vpack.c.b16 %v3459, %v3455
          %v3608 = vpack.c.b16 %v3460, %v3456
          %v3609 = vpack.c.b16 %v3461, %v3457
          %v3610 = vpack.c.b16 %v3462, %v3458
          %v3611 = vpack.c.b16 %v3467, %v3463
          %v3612 = vpack.c.b16 %v3468, %v3464
          %v3613 = vpack.c.b16 %v3469, %v3465
          %v3614 = vpack.c.b16 %v3470, %v3466
          %v3615 = vpack.c.b16 %v3475, %v3471
          %v3616 = vpack.c.b16 %v3476, %v3472
          %v3617 = vpack.c.b16 %v3477, %v3473
          %v3618 = vpack.c.b16 %v3478, %v3474
          %v3619 = vpack.c.b16 %v3483, %v3479
          %v3620 = vpack.c.b16 %v3484, %v3480
          %v3621 = vpack.c.b16 %v3485, %v3481
          %v3622 = vpack.c.b16 %v3486, %v3482
          %v3623 = vpack.c.b16 %v3491, %v3487
          %v3624 = vpack.c.b16 %v3492, %v3488
          %v3625 = vpack.c.b16 %v3493, %v3489
          %v3626 = vpack.c.b16 %v3494, %v3490
          %v3627 = vpack.c.b16 %v3499, %v3495
          %v3628 = vpack.c.b16 %v3500, %v3496
          %v3629 = vpack.c.b16 %v3501, %v3497
          %v3630 = vpack.c.b16 %v3502, %v3498
          %3759 = vmatprep.subr.bf16.mxu0 %v3532
          %3760 = vmatpush1.bf16.msra.mxu0 %v3531
          %3761 = vmatprep.subr.bf16.mxu0 %v3528
          %3762 = vmatpush1.bf16.msra.mxu0 %v3527
          %3763 = vmatprep.subr.bf16.mxu0 %v3524
          %3764 = vmatpush1.bf16.msra.mxu0 %v3523
          %3765 = vmatprep.subr.bf16.mxu0 %v3520
          %3766 = vmatpush1.bf16.msra.mxu0 %v3519
          %3767 = vmatprep.subr.bf16.mxu0 %v3516
          %3768 = vmatpush1.bf16.msra.mxu0 %v3515
          %3769 = vmatprep.subr.bf16.mxu0 %v3512
          %3770 = vmatpush1.bf16.msra.mxu0 %v3511
          %3771 = vmatprep.subr.bf16.mxu0 %v3508
          %3772 = vmatpush1.bf16.msra.mxu0 %v3507
          %3773 = vmatprep.subr.bf16.mxu0 %v3504
          %3774 = vmatpush1.bf16.msra.mxu0 %v3503
          %3775 = vmatprep.subr.bf16.mxu0 %v3564
          %3776 = vmatpush2.bf16.msra.mxu0 %v3563
          %3777 = vmatprep.subr.bf16.mxu0 %v3560
          %3778 = vmatpush2.bf16.msra.mxu0 %v3559
          %3779 = vmatprep.subr.bf16.mxu0 %v3556
          %3780 = vmatpush2.bf16.msra.mxu0 %v3555
          %3781 = vmatprep.subr.bf16.mxu0 %v3552
          %3782 = vmatpush2.bf16.msra.mxu0 %v3551
          %3783 = vmatprep.subr.bf16.mxu0 %v3548
          %3784 = vmatpush2.bf16.msra.mxu0 %v3547
          %3785 = vmatprep.subr.bf16.mxu0 %v3544
          %3786 = vmatpush2.bf16.msra.mxu0 %v3543
          %3787 = vmatprep.subr.bf16.mxu0 %v3540
          %3788 = vmatpush2.bf16.msra.mxu0 %v3539
          %3789 = vmatprep.subr.bf16.mxu0 %v3536
          %3790 = vmatpush2.bf16.msra.mxu0 %v3535
          %3791 = vmatprep.mubr.bf16.mxu0 %v2966
          %3792 = vmatmul.mubr.bf16.gmra.mxu0 %v2965
          %v3793 = vpop.f32.mrf.mxu0
          %v3794 = vadd.f32 %v3102, %v3793
          %v3795 = vpop.f32.mrf.mxu0
          %v3796 = vadd.f32 %v3106, %v3795
          %v3797 = vpop.f32.mrf.mxu0
          %v3798 = vadd.f32 %v3102, %v3797
          %v3799 = vpop.f32.mrf.mxu0
          %v3800 = vadd.f32 %v3106, %v3799
          %3801 = vdwg.mxu0
          %3802 = vmatprep.subr.bf16.mxu0 %v3596
          %3803 = vmatpush1.bf16.msra.mxu0 %v3595
          %3804 = vmatprep.subr.bf16.mxu0 %v3592
          %3805 = vmatpush1.bf16.msra.mxu0 %v3591
          %3806 = vmatprep.subr.bf16.mxu0 %v3588
          %3807 = vmatpush1.bf16.msra.mxu0 %v3587
          %3808 = vmatprep.subr.bf16.mxu0 %v3584
          %3809 = vmatpush1.bf16.msra.mxu0 %v3583
          %3810 = vmatprep.subr.bf16.mxu0 %v3580
          %3811 = vmatpush1.bf16.msra.mxu0 %v3579
          %3812 = vmatprep.subr.bf16.mxu0 %v3576
          %3813 = vmatpush1.bf16.msra.mxu0 %v3575
          %3814 = vmatprep.subr.bf16.mxu0 %v3572
          %3815 = vmatpush1.bf16.msra.mxu0 %v3571
          %3816 = vmatprep.subr.bf16.mxu0 %v3568
          %3817 = vmatpush1.bf16.msra.mxu0 %v3567
          %3818 = vmatprep.subr.bf16.mxu0 %v3628
          %3819 = vmatpush2.bf16.msra.mxu0 %v3627
          %3820 = vmatprep.subr.bf16.mxu0 %v3624
          %3821 = vmatpush2.bf16.msra.mxu0 %v3623
          %3822 = vmatprep.subr.bf16.mxu0 %v3620
          %3823 = vmatpush2.bf16.msra.mxu0 %v3619
          %3824 = vmatprep.subr.bf16.mxu0 %v3616
          %3825 = vmatpush2.bf16.msra.mxu0 %v3615
          %3826 = vmatprep.subr.bf16.mxu0 %v3612
          %3827 = vmatpush2.bf16.msra.mxu0 %v3611
          %3828 = vmatprep.subr.bf16.mxu0 %v3608
          %3829 = vmatpush2.bf16.msra.mxu0 %v3607
          %3830 = vmatprep.subr.bf16.mxu0 %v3604
          %3831 = vmatpush2.bf16.msra.mxu0 %v3603
          %3832 = vmatprep.subr.bf16.mxu0 %v3600
          %3833 = vmatpush2.bf16.msra.mxu0 %v3599
          %3834 = vmatprep.mubr.bf16.mxu0 %v2968
          %3835 = vmatmul.mubr.bf16.gmra.mxu0 %v2967
          %v3836 = vpop.f32.mrf.mxu0
          %v3837 = vadd.f32 %v3794, %v3836
          %v3838 = vpop.f32.mrf.mxu0
          %v3839 = vadd.f32 %v3796, %v3838
          %v3840 = vpop.f32.mrf.mxu0
          %v3841 = vadd.f32 %v3798, %v3840
          %v3842 = vpop.f32.mrf.mxu0
          %v3843 = vadd.f32 %v3800, %v3842
          %3844 = vdwg.mxu0
          %3845 = vmatprep.subr.bf16.mxu0 %v3534
          %3846 = vmatpush1.bf16.msra.mxu0 %v3533
          %3847 = vmatprep.subr.bf16.mxu0 %v3530
          %3848 = vmatpush1.bf16.msra.mxu0 %v3529
          %3849 = vmatprep.subr.bf16.mxu0 %v3526
          %3850 = vmatpush1.bf16.msra.mxu0 %v3525
          %3851 = vmatprep.subr.bf16.mxu0 %v3522
          %3852 = vmatpush1.bf16.msra.mxu0 %v3521
          %3853 = vmatprep.subr.bf16.mxu0 %v3518
          %3854 = vmatpush1.bf16.msra.mxu0 %v3517
          %3855 = vmatprep.subr.bf16.mxu0 %v3514
          %3856 = vmatpush1.bf16.msra.mxu0 %v3513
          %3857 = vmatprep.subr.bf16.mxu0 %v3510
          %3858 = vmatpush1.bf16.msra.mxu0 %v3509
          %3859 = vmatprep.subr.bf16.mxu0 %v3506
          %3860 = vmatpush1.bf16.msra.mxu0 %v3505
          %3861 = vmatprep.subr.bf16.mxu0 %v3566
          %3862 = vmatpush2.bf16.msra.mxu0 %v3565
          %3863 = vmatprep.subr.bf16.mxu0 %v3562
          %3864 = vmatpush2.bf16.msra.mxu0 %v3561
          %3865 = vmatprep.subr.bf16.mxu0 %v3558
          %3866 = vmatpush2.bf16.msra.mxu0 %v3557
          %3867 = vmatprep.subr.bf16.mxu0 %v3554
          %3868 = vmatpush2.bf16.msra.mxu0 %v3553
          %3869 = vmatprep.subr.bf16.mxu0 %v3550
          %3870 = vmatpush2.bf16.msra.mxu0 %v3549
          %3871 = vmatprep.subr.bf16.mxu0 %v3546
          %3872 = vmatpush2.bf16.msra.mxu0 %v3545
          %3873 = vmatprep.subr.bf16.mxu0 %v3542
          %3874 = vmatpush2.bf16.msra.mxu0 %v3541
          %3875 = vmatprep.subr.bf16.mxu0 %v3538
          %3876 = vmatpush2.bf16.msra.mxu0 %v3537
          %3877 = vmatprep.mubr.bf16.mxu0 %v2966
          %3878 = vmatmul.mubr.bf16.gmra.mxu0 %v2965
          %v3879 = vpop.f32.mrf.mxu0
          %v3880 = vadd.f32 %v3110, %v3879
          %v3881 = vpop.f32.mrf.mxu0
          %v3882 = vadd.f32 %v3114, %v3881
          %v3883 = vpop.f32.mrf.mxu0
          %v3884 = vadd.f32 %v3110, %v3883
          %v3885 = vpop.f32.mrf.mxu0
          %v3886 = vadd.f32 %v3114, %v3885
          %3887 = vdwg.mxu0
          %3888 = vmatprep.subr.bf16.mxu0 %v3598
          %3889 = vmatpush1.bf16.msra.mxu0 %v3597
          %3890 = vmatprep.subr.bf16.mxu0 %v3594
          %3891 = vmatpush1.bf16.msra.mxu0 %v3593
          %3892 = vmatprep.subr.bf16.mxu0 %v3590
          %3893 = vmatpush1.bf16.msra.mxu0 %v3589
          %3894 = vmatprep.subr.bf16.mxu0 %v3586
          %3895 = vmatpush1.bf16.msra.mxu0 %v3585
          %3896 = vmatprep.subr.bf16.mxu0 %v3582
          %3897 = vmatpush1.bf16.msra.mxu0 %v3581
          %3898 = vmatprep.subr.bf16.mxu0 %v3578
          %3899 = vmatpush1.bf16.msra.mxu0 %v3577
          %3900 = vmatprep.subr.bf16.mxu0 %v3574
          %3901 = vmatpush1.bf16.msra.mxu0 %v3573
          %3902 = vmatprep.subr.bf16.mxu0 %v3570
          %3903 = vmatpush1.bf16.msra.mxu0 %v3569
          %3904 = vmatprep.subr.bf16.mxu0 %v3630
          %3905 = vmatpush2.bf16.msra.mxu0 %v3629
          %3906 = vmatprep.subr.bf16.mxu0 %v3626
          %3907 = vmatpush2.bf16.msra.mxu0 %v3625
          %3908 = vmatprep.subr.bf16.mxu0 %v3622
          %3909 = vmatpush2.bf16.msra.mxu0 %v3621
          %3910 = vmatprep.subr.bf16.mxu0 %v3618
          %3911 = vmatpush2.bf16.msra.mxu0 %v3617
          %3912 = vmatprep.subr.bf16.mxu0 %v3614
          %3913 = vmatpush2.bf16.msra.mxu0 %v3613
          %3914 = vmatprep.subr.bf16.mxu0 %v3610
          %3915 = vmatpush2.bf16.msra.mxu0 %v3609
          %3916 = vmatprep.subr.bf16.mxu0 %v3606
          %3917 = vmatpush2.bf16.msra.mxu0 %v3605
          %3918 = vmatprep.subr.bf16.mxu0 %v3602
          %3919 = vmatpush2.bf16.msra.mxu0 %v3601
          %3920 = vmatprep.mubr.bf16.mxu0 %v2968
          %3921 = vmatmul.mubr.bf16.gmra.mxu0 %v2967
          %v3922 = vpop.f32.mrf.mxu0
          %v3923 = vadd.f32 %v3880, %v3922
          %v3924 = vpop.f32.mrf.mxu0
          %v3925 = vadd.f32 %v3882, %v3924
          %v3926 = vpop.f32.mrf.mxu0
          %v3927 = vadd.f32 %v3884, %v3926
          %v3928 = vpop.f32.mrf.mxu0
          %v3929 = vadd.f32 %v3886, %v3928
          %3930 = vdwg.mxu0
          %v3931 = vtanh.pop %v3837
          %v3932 = vtanh.pop %v3839
          %v3933 = vtanh.pop %v3841
          %v3934 = vtanh.pop %v3843
          %v3935 = vxor.u32 %v3923, 2147483648
          %v3936 = vxor.u32 %v3925, 2147483648
          %v3937 = vxor.u32 %v3927, 2147483648
          %v3938 = vxor.u32 %v3929, 2147483648
          %v3939 = vmul.f32 %v3935, 1.442695
          %v3940 = vpow.pop %v3939
          %v3941 = vmul.f32 %v3936, 1.442695
          %v3942 = vpow.pop %v3941
          %v3943 = vmul.f32 %v3937, 1.442695
          %v3944 = vpow.pop %v3943
          %v3945 = vmul.f32 %v3938, 1.442695
          %v3946 = vpow.pop %v3945
          %v3947 = vadd.f32 %v3940, 1.0
          %v3948 = vadd.f32 %v3942, 1.0
          %v3949 = vadd.f32 %v3944, 1.0
          %v3950 = vadd.f32 %v3946, 1.0
          %v3951 = vrcp.pop %v3947
          %v3952 = vmul.f32 1.0, %v3951
          %v3953 = vrcp.pop %v3948
          %v3954 = vmul.f32 1.0, %v3953
          %v3955 = vrcp.pop %v3949
          %v3956 = vmul.f32 1.0, %v3955
          %v3957 = vrcp.pop %v3950
          %v3958 = vmul.f32 1.0, %v3957
          %v3959 = vmul.f32 %v3931, %v3952
          %v3960 = vmul.f32 %v3932, %v3954
          %v3961 = vmul.f32 %v3933, %v3956
          %v3962 = vmul.f32 %v3934, %v3958
          %v3963 = vld [vmem:[%s12] sm:$0x3]
          %v3965 = vlaneseq
          %v3966 = vshrl.u32 %v3965, 7
          %v3967 = vsub.s32 0, %v3966
          %v3968 = vrot.slane %v3963, %v3967
          %v3969 = vlaneseq
          %v3970 = vshrl.u32 %v3969, 7
          %v3971 = vsub.s32 1, %v3970
          %v3972 = vrot.slane %v3963, %v3971
          %v3975 = vmul.f32 %v3959, %v3968
          %v3976 = vmul.f32 %v3960, %v3972
          %v3977 = vmul.f32 %v3961, %v3968
          %v3978 = vmul.f32 %v3962, %v3972
          %v3979 = vadd.f32 %v3975, %v3976
          %3980 = vadd.xlane.f32.xlu0 %v3979
          %v3981 = vpop.xlane.xlu0 %3980
          %vm3982 = vcmask 1043456
          %v3983 = vsel %vm3982, %v3977, 0.0
          %v3984 = vsel %vm3982, %v3978, 0.0
          %v3985 = vadd.f32 %v3983, %v3984
          %3986 = vadd.xlane.f32.xlu0 %v3985
          %v3987 = vpop.xlane.xlu0 %3986
          %v3988 = vld [vmem:[#allocation6] sm:$0x1]
          %v3990 = vlaneseq
          %v3991 = vshrl.u32 %v3990, 7
          %v3992 = vsub.s32 0, %v3991
          %v3993 = vrot.slane %v3988, %v3992
          %v3995 = vadd.f32 %v3981, %v3993
          %v3996 = vadd.f32 %v3987, %v3993
          %v3997 = vsel %vm2309, %v3995, -inf
          %vm3998 = vcmask 3072
          %v3999 = vsel %vm3998, %v3996, -inf
          %v4000 = vmax.f32 %v3997, %v3999
          %v4001 = vrot.slane %v4000, 4
          %v4002 = vmax.f32 %v4000, %v4001
          %v4003 = vrot.slane %v4002, 2
          %v4004 = vmax.f32 %v4002, %v4003
          %v4005 = vrot.slane %v4004, 1
          %v4006 = vmax.f32 %v4004, %v4005
          %v4007 = vsub.f32 %v3995, %v4006
          %v4008 = vsub.f32 %v3996, %v4006
          %v4009 = vmul.f32 %v4007, 1.442695
          %v4010 = vpow.pop %v4009
          %v4011 = vmul.f32 %v4008, 1.442695
          %v4012 = vpow.pop %v4011
          %v4013 = vsel %vm2309, %v4010, 0.0
          %v4014 = vsel %vm3998, %v4012, 0.0
          %v4015 = vadd.f32 %v4013, %v4014
          %v4016 = vrot.slane %v4015, 4
          %v4017 = vadd.f32 %v4015, %v4016
          %v4018 = vrot.slane %v4017, 2
          %v4019 = vadd.f32 %v4017, %v4018
          %v4020 = vrot.slane %v4019, 1
          %v4021 = vadd.f32 %v4019, %v4020
          %v4022 = vrcp.pop %v4021
          %v4023 = vmul.f32 0.28867513, %v4022
          %v4024 = vmul.f32 %v4010, %v4023
          %v4025 = vmul.f32 %v4012, %v4023
          %4027 = vset.pattern.permute.xlu0 0
          %4028 = vperm.xlu0 %4027, %v4024
          %v4029 = vpop.permute.xlu0 %4028
          %4032 = vset.pattern.permute.xlu0 0
          %4033 = vperm.xlu0 %4032, %v4025
          %v4034 = vpop.permute.xlu0 %4033
          %v4036 = vmul.f32 %v4029, %v2957
          %v4037 = vmul.f32 %v4029, %v2958
          %v4038 = vmul.f32 %v4029, %v2959
          %v4039 = vmul.f32 %v4029, %v2960
          %v4040 = vmul.f32 %v4034, %v2961
          %v4041 = vmul.f32 %v4034, %v2962
          %v4042 = vmul.f32 %v4034, %v2963
          %v4043 = vmul.f32 %v4034, %v2964
          %v4044 = vsel %vm3982, %v4040, 0.0
          %v4045 = vadd.f32 %v4036, %v4044
          %v4046 = vrot.slane %v4045, 4
          %v4047 = vadd.f32 %v4045, %v4046
          %v4048 = vrot.slane %v4047, 2
          %v4049 = vadd.f32 %v4047, %v4048
          %v4050 = vrot.slane %v4049, 1
          %v4051 = vadd.f32 %v4049, %v4050
          %v4052 = vsel %vm3982, %v4041, 0.0
          %v4053 = vadd.f32 %v4037, %v4052
          %v4054 = vrot.slane %v4053, 4
          %v4055 = vadd.f32 %v4053, %v4054
          %v4056 = vrot.slane %v4055, 2
          %v4057 = vadd.f32 %v4055, %v4056
          %v4058 = vrot.slane %v4057, 1
          %v4059 = vadd.f32 %v4057, %v4058
          %v4060 = vsel %vm3982, %v4042, 0.0
          %v4061 = vadd.f32 %v4038, %v4060
          %v4062 = vrot.slane %v4061, 4
          %v4063 = vadd.f32 %v4061, %v4062
          %v4064 = vrot.slane %v4063, 2
          %v4065 = vadd.f32 %v4063, %v4064
          %v4066 = vrot.slane %v4065, 1
          %v4067 = vadd.f32 %v4065, %v4066
          %v4068 = vsel %vm3982, %v4043, 0.0
          %v4069 = vadd.f32 %v4039, %v4068
          %v4070 = vrot.slane %v4069, 4
          %v4071 = vadd.f32 %v4069, %v4070
          %v4072 = vrot.slane %v4071, 2
          %v4073 = vadd.f32 %v4071, %v4072
          %v4074 = vrot.slane %v4073, 1
          %v4075 = vadd.f32 %v4073, %v4074
          %4076 = vst.msk [vmem:[#allocation19] sm:$0xf] %vm2439, %v2458
          %v4081 = vcombine.low %v4051, %v4059
          %v4082 = vcombine.low %v4067, %v4075
          %v4084 = vunpack.c.l.s4 1966171168
          %v4085 = vunpack.c.0.s8 %v4084
          %v4086 = vlaneseq
          %v4087 = vshrl.u32 %v4086, 7
          %v4088 = vsub.s32 %v4085, %v4087
          %v4089 = vrot.slane %v4081, %v4088
          %v4091 = vunpack.c.l.s4 1966171168
          %v4092 = vunpack.c.0.s8 %v4091
          %v4093 = vlaneseq
          %v4094 = vshrl.u32 %v4093, 7
          %v4095 = vsub.s32 %v4092, %v4094
          %v4096 = vrot.slane %v4082, %v4095
          %v4097 = vcombine.low %v4089, %v4096
          %v4099 = vunpack.c.l.s4 1966171168
          %v4100 = vunpack.c.0.s8 %v4099
          %v4101 = vlaneseq
          %v4102 = vshrl.u32 %v4101, 7
          %v4103 = vsub.s32 %v4100, %v4102
          %v4104 = vrot.slane %v4097, %v4103
          %4106 = vst.msk [vmem:[#allocation19 + $0x4] sm:$0xf] %vm2439, %v4104
          %v4108 = vlaneseq
          %v4109 = vshrl.u32 %v4108, 7
          %v4110 = vsub.s32 0, %v4109
          %v4111 = vrot.slane %v2458, %v4110
          %v4112 = vlaneseq
          %v4113 = vshrl.u32 %v4112, 7
          %v4114 = vsub.s32 1, %v4113
          %v4115 = vrot.slane %v2458, %v4114
          %v4116 = vlaneseq
          %v4117 = vshrl.u32 %v4116, 7
          %v4118 = vsub.s32 2, %v4117
          %v4119 = vrot.slane %v2458, %v4118
          %v4120 = vlaneseq
          %v4121 = vshrl.u32 %v4120, 7
          %v4122 = vsub.s32 3, %v4121
          %v4123 = vrot.slane %v2458, %v4122
          %v4128 = vpack.c.bf16 %v4111, %v4111
          %v4129 = vpack.c.bf16 %v4115, %v4115
          %v4130 = vpack.c.bf16 %v4119, %v4119
          %v4131 = vpack.c.bf16 %v4123, %v4123
          %v4132 = vld [vmem:[#allocation15] sm:$0xff]
          %v4133 = vld [vmem:[#allocation15 + $0x8] sm:$0xff]
          %v4134 = vld [vmem:[#allocation15 + $0x10] sm:$0xff]
          %v4135 = vld [vmem:[#allocation15 + $0x18] sm:$0xff]
          %v4136 = vld [vmem:[#allocation15 + $0x20] sm:$0xff]
          %v4137 = vld [vmem:[#allocation15 + $0x28] sm:$0xff]
          %v4138 = vld [vmem:[#allocation15 + $0x30] sm:$0xff]
          %v4139 = vld [vmem:[#allocation15 + $0x38] sm:$0xff]
          %v4140 = vld [vmem:[#allocation15 + $0x40] sm:$0xff]
          %v4141 = vld [vmem:[#allocation15 + $0x48] sm:$0xff]
          %v4142 = vld [vmem:[#allocation15 + $0x50] sm:$0xff]
          %v4143 = vld [vmem:[#allocation15 + $0x58] sm:$0xff]
          %v4144 = vld [vmem:[#allocation15 + $0x60] sm:$0xff]
          %v4145 = vld [vmem:[#allocation15 + $0x68] sm:$0xff]
          %v4146 = vld [vmem:[#allocation15 + $0x70] sm:$0xff]
          %v4147 = vld [vmem:[#allocation15 + $0x78] sm:$0xff]
          %v4148 = vld [vmem:[#allocation15 + $0x80] sm:$0xff]
          %v4149 = vld [vmem:[#allocation15 + $0x88] sm:$0xff]
          %v4150 = vld [vmem:[#allocation15 + $0x90] sm:$0xff]
          %v4151 = vld [vmem:[#allocation15 + $0x98] sm:$0xff]
          %v4152 = vld [vmem:[#allocation15 + $0xa0] sm:$0xff]
          %v4153 = vld [vmem:[#allocation15 + $0xa8] sm:$0xff]
          %v4154 = vld [vmem:[#allocation15 + $0xb0] sm:$0xff]
          %v4155 = vld [vmem:[#allocation15 + $0xb8] sm:$0xff]
          %v4156 = vld [vmem:[#allocation15 + $0xc0] sm:$0xff]
          %v4157 = vld [vmem:[#allocation15 + $0xc8] sm:$0xff]
          %v4158 = vld [vmem:[#allocation15 + $0xd0] sm:$0xff]
          %v4159 = vld [vmem:[#allocation15 + $0xd8] sm:$0xff]
          %v4160 = vld [vmem:[#allocation15 + $0xe0] sm:$0xff]
          %v4161 = vld [vmem:[#allocation15 + $0xe8] sm:$0xff]
          %v4162 = vld [vmem:[#allocation15 + $0xf0] sm:$0xff]
          %v4163 = vld [vmem:[#allocation15 + $0xf8] sm:$0xff]
          %v4164 = vld [vmem:[#allocation15 + $0x100] sm:$0xff]
          %v4165 = vld [vmem:[#allocation15 + $0x108] sm:$0xff]
          %v4166 = vld [vmem:[#allocation15 + $0x110] sm:$0xff]
          %v4167 = vld [vmem:[#allocation15 + $0x118] sm:$0xff]
          %v4168 = vld [vmem:[#allocation15 + $0x120] sm:$0xff]
          %v4169 = vld [vmem:[#allocation15 + $0x128] sm:$0xff]
          %v4170 = vld [vmem:[#allocation15 + $0x130] sm:$0xff]
          %v4171 = vld [vmem:[#allocation15 + $0x138] sm:$0xff]
          %v4172 = vld [vmem:[#allocation15 + $0x140] sm:$0xff]
          %v4173 = vld [vmem:[#allocation15 + $0x148] sm:$0xff]
          %v4174 = vld [vmem:[#allocation15 + $0x150] sm:$0xff]
          %v4175 = vld [vmem:[#allocation15 + $0x158] sm:$0xff]
          %v4176 = vld [vmem:[#allocation15 + $0x160] sm:$0xff]
          %v4177 = vld [vmem:[#allocation15 + $0x168] sm:$0xff]
          %v4178 = vld [vmem:[#allocation15 + $0x170] sm:$0xff]
          %v4179 = vld [vmem:[#allocation15 + $0x178] sm:$0xff]
          %v4180 = vld [vmem:[#allocation15 + $0x180] sm:$0xff]
          %v4181 = vld [vmem:[#allocation15 + $0x188] sm:$0xff]
          %v4182 = vld [vmem:[#allocation15 + $0x190] sm:$0xff]
          %v4183 = vld [vmem:[#allocation15 + $0x198] sm:$0xff]
          %v4184 = vld [vmem:[#allocation15 + $0x1a0] sm:$0xff]
          %v4185 = vld [vmem:[#allocation15 + $0x1a8] sm:$0xff]
          %v4186 = vld [vmem:[#allocation15 + $0x1b0] sm:$0xff]
          %v4187 = vld [vmem:[#allocation15 + $0x1b8] sm:$0xff]
          %v4188 = vld [vmem:[#allocation15 + $0x1c0] sm:$0xff]
          %v4189 = vld [vmem:[#allocation15 + $0x1c8] sm:$0xff]
          %v4190 = vld [vmem:[#allocation15 + $0x1d0] sm:$0xff]
          %v4191 = vld [vmem:[#allocation15 + $0x1d8] sm:$0xff]
          %v4192 = vld [vmem:[#allocation15 + $0x1e0] sm:$0xff]
          %v4193 = vld [vmem:[#allocation15 + $0x1e8] sm:$0xff]
          %v4194 = vld [vmem:[#allocation15 + $0x1f0] sm:$0xff]
          %v4195 = vld [vmem:[#allocation15 + $0x1f8] sm:$0xff]
          %v4196 = vld [vmem:[#allocation15 + $0x200] sm:$0xff]
          %v4197 = vld [vmem:[#allocation15 + $0x208] sm:$0xff]
          %v4198 = vld [vmem:[#allocation15 + $0x210] sm:$0xff]
          %v4199 = vld [vmem:[#allocation15 + $0x218] sm:$0xff]
          %v4200 = vld [vmem:[#allocation15 + $0x220] sm:$0xff]
          %v4201 = vld [vmem:[#allocation15 + $0x228] sm:$0xff]
          %v4202 = vld [vmem:[#allocation15 + $0x230] sm:$0xff]
          %v4203 = vld [vmem:[#allocation15 + $0x238] sm:$0xff]
          %v4204 = vld [vmem:[#allocation15 + $0x240] sm:$0xff]
          %v4205 = vld [vmem:[#allocation15 + $0x248] sm:$0xff]
          %v4206 = vld [vmem:[#allocation15 + $0x250] sm:$0xff]
          %v4207 = vld [vmem:[#allocation15 + $0x258] sm:$0xff]
          %v4208 = vld [vmem:[#allocation15 + $0x260] sm:$0xff]
          %v4209 = vld [vmem:[#allocation15 + $0x268] sm:$0xff]
          %v4210 = vld [vmem:[#allocation15 + $0x270] sm:$0xff]
          %v4211 = vld [vmem:[#allocation15 + $0x278] sm:$0xff]
          %v4212 = vld [vmem:[#allocation15 + $0x280] sm:$0xff]
          %v4213 = vld [vmem:[#allocation15 + $0x288] sm:$0xff]
          %v4214 = vld [vmem:[#allocation15 + $0x290] sm:$0xff]
          %v4215 = vld [vmem:[#allocation15 + $0x298] sm:$0xff]
          %v4216 = vld [vmem:[#allocation15 + $0x2a0] sm:$0xff]
          %v4217 = vld [vmem:[#allocation15 + $0x2a8] sm:$0xff]
          %v4218 = vld [vmem:[#allocation15 + $0x2b0] sm:$0xff]
          %v4219 = vld [vmem:[#allocation15 + $0x2b8] sm:$0xff]
          %v4220 = vld [vmem:[#allocation15 + $0x2c0] sm:$0xff]
          %v4221 = vld [vmem:[#allocation15 + $0x2c8] sm:$0xff]
          %v4222 = vld [vmem:[#allocation15 + $0x2d0] sm:$0xff]
          %v4223 = vld [vmem:[#allocation15 + $0x2d8] sm:$0xff]
          %v4224 = vld [vmem:[#allocation15 + $0x2e0] sm:$0xff]
          %v4225 = vld [vmem:[#allocation15 + $0x2e8] sm:$0xff]
          %v4226 = vld [vmem:[#allocation15 + $0x2f0] sm:$0xff]
          %v4227 = vld [vmem:[#allocation15 + $0x2f8] sm:$0xff]
          %v4228 = vld [vmem:[#allocation15 + $0x300] sm:$0xff]
          %v4229 = vld [vmem:[#allocation15 + $0x308] sm:$0xff]
          %v4230 = vld [vmem:[#allocation15 + $0x310] sm:$0xff]
          %v4231 = vld [vmem:[#allocation15 + $0x318] sm:$0xff]
          %v4232 = vld [vmem:[#allocation15 + $0x320] sm:$0xff]
          %v4233 = vld [vmem:[#allocation15 + $0x328] sm:$0xff]
          %v4234 = vld [vmem:[#allocation15 + $0x330] sm:$0xff]
          %v4235 = vld [vmem:[#allocation15 + $0x338] sm:$0xff]
          %v4236 = vld [vmem:[#allocation15 + $0x340] sm:$0xff]
          %v4237 = vld [vmem:[#allocation15 + $0x348] sm:$0xff]
          %v4238 = vld [vmem:[#allocation15 + $0x350] sm:$0xff]
          %v4239 = vld [vmem:[#allocation15 + $0x358] sm:$0xff]
          %v4240 = vld [vmem:[#allocation15 + $0x360] sm:$0xff]
          %v4241 = vld [vmem:[#allocation15 + $0x368] sm:$0xff]
          %v4242 = vld [vmem:[#allocation15 + $0x370] sm:$0xff]
          %v4243 = vld [vmem:[#allocation15 + $0x378] sm:$0xff]
          %v4244 = vld [vmem:[#allocation15 + $0x380] sm:$0xff]
          %v4245 = vld [vmem:[#allocation15 + $0x388] sm:$0xff]
          %v4246 = vld [vmem:[#allocation15 + $0x390] sm:$0xff]
          %v4247 = vld [vmem:[#allocation15 + $0x398] sm:$0xff]
          %v4248 = vld [vmem:[#allocation15 + $0x3a0] sm:$0xff]
          %v4249 = vld [vmem:[#allocation15 + $0x3a8] sm:$0xff]
          %v4250 = vld [vmem:[#allocation15 + $0x3b0] sm:$0xff]
          %v4251 = vld [vmem:[#allocation15 + $0x3b8] sm:$0xff]
          %v4252 = vld [vmem:[#allocation15 + $0x3c0] sm:$0xff]
          %v4253 = vld [vmem:[#allocation15 + $0x3c8] sm:$0xff]
          %v4254 = vld [vmem:[#allocation15 + $0x3d0] sm:$0xff]
          %v4255 = vld [vmem:[#allocation15 + $0x3d8] sm:$0xff]
          %v4256 = vld [vmem:[#allocation15 + $0x3e0] sm:$0xff]
          %v4257 = vld [vmem:[#allocation15 + $0x3e8] sm:$0xff]
          %v4258 = vld [vmem:[#allocation15 + $0x3f0] sm:$0xff]
          %v4259 = vld [vmem:[#allocation15 + $0x3f8] sm:$0xff]
          %v4260 = vpack.c.bf16 %v4051, %v4051
          %v4261 = vpack.c.bf16 %v4059, %v4059
          %v4262 = vpack.c.bf16 %v4067, %v4067
          %v4263 = vpack.c.bf16 %v4075, %v4075
          %v4264 = vld [vmem:[#allocation16] sm:$0xff]
          %v4265 = vld [vmem:[#allocation16 + $0x8] sm:$0xff]
          %v4266 = vld [vmem:[#allocation16 + $0x10] sm:$0xff]
          %v4267 = vld [vmem:[#allocation16 + $0x18] sm:$0xff]
          %v4268 = vld [vmem:[#allocation16 + $0x20] sm:$0xff]
          %v4269 = vld [vmem:[#allocation16 + $0x28] sm:$0xff]
          %v4270 = vld [vmem:[#allocation16 + $0x30] sm:$0xff]
          %v4271 = vld [vmem:[#allocation16 + $0x38] sm:$0xff]
          %v4272 = vld [vmem:[#allocation16 + $0x40] sm:$0xff]
          %v4273 = vld [vmem:[#allocation16 + $0x48] sm:$0xff]
          %v4274 = vld [vmem:[#allocation16 + $0x50] sm:$0xff]
          %v4275 = vld [vmem:[#allocation16 + $0x58] sm:$0xff]
          %v4276 = vld [vmem:[#allocation16 + $0x60] sm:$0xff]
          %v4277 = vld [vmem:[#allocation16 + $0x68] sm:$0xff]
          %v4278 = vld [vmem:[#allocation16 + $0x70] sm:$0xff]
          %v4279 = vld [vmem:[#allocation16 + $0x78] sm:$0xff]
          %v4280 = vld [vmem:[#allocation16 + $0x80] sm:$0xff]
          %v4281 = vld [vmem:[#allocation16 + $0x88] sm:$0xff]
          %v4282 = vld [vmem:[#allocation16 + $0x90] sm:$0xff]
          %v4283 = vld [vmem:[#allocation16 + $0x98] sm:$0xff]
          %v4284 = vld [vmem:[#allocation16 + $0xa0] sm:$0xff]
          %v4285 = vld [vmem:[#allocation16 + $0xa8] sm:$0xff]
          %v4286 = vld [vmem:[#allocation16 + $0xb0] sm:$0xff]
          %v4287 = vld [vmem:[#allocation16 + $0xb8] sm:$0xff]
          %v4288 = vld [vmem:[#allocation16 + $0xc0] sm:$0xff]
          %v4289 = vld [vmem:[#allocation16 + $0xc8] sm:$0xff]
          %v4290 = vld [vmem:[#allocation16 + $0xd0] sm:$0xff]
          %v4291 = vld [vmem:[#allocation16 + $0xd8] sm:$0xff]
          %v4292 = vld [vmem:[#allocation16 + $0xe0] sm:$0xff]
          %v4293 = vld [vmem:[#allocation16 + $0xe8] sm:$0xff]
          %v4294 = vld [vmem:[#allocation16 + $0xf0] sm:$0xff]
          %v4295 = vld [vmem:[#allocation16 + $0xf8] sm:$0xff]
          %v4296 = vld [vmem:[#allocation16 + $0x100] sm:$0xff]
          %v4297 = vld [vmem:[#allocation16 + $0x108] sm:$0xff]
          %v4298 = vld [vmem:[#allocation16 + $0x110] sm:$0xff]
          %v4299 = vld [vmem:[#allocation16 + $0x118] sm:$0xff]
          %v4300 = vld [vmem:[#allocation16 + $0x120] sm:$0xff]
          %v4301 = vld [vmem:[#allocation16 + $0x128] sm:$0xff]
          %v4302 = vld [vmem:[#allocation16 + $0x130] sm:$0xff]
          %v4303 = vld [vmem:[#allocation16 + $0x138] sm:$0xff]
          %v4304 = vld [vmem:[#allocation16 + $0x140] sm:$0xff]
          %v4305 = vld [vmem:[#allocation16 + $0x148] sm:$0xff]
          %v4306 = vld [vmem:[#allocation16 + $0x150] sm:$0xff]
          %v4307 = vld [vmem:[#allocation16 + $0x158] sm:$0xff]
          %v4308 = vld [vmem:[#allocation16 + $0x160] sm:$0xff]
          %v4309 = vld [vmem:[#allocation16 + $0x168] sm:$0xff]
          %v4310 = vld [vmem:[#allocation16 + $0x170] sm:$0xff]
          %v4311 = vld [vmem:[#allocation16 + $0x178] sm:$0xff]
          %v4312 = vld [vmem:[#allocation16 + $0x180] sm:$0xff]
          %v4313 = vld [vmem:[#allocation16 + $0x188] sm:$0xff]
          %v4314 = vld [vmem:[#allocation16 + $0x190] sm:$0xff]
          %v4315 = vld [vmem:[#allocation16 + $0x198] sm:$0xff]
          %v4316 = vld [vmem:[#allocation16 + $0x1a0] sm:$0xff]
          %v4317 = vld [vmem:[#allocation16 + $0x1a8] sm:$0xff]
          %v4318 = vld [vmem:[#allocation16 + $0x1b0] sm:$0xff]
          %v4319 = vld [vmem:[#allocation16 + $0x1b8] sm:$0xff]
          %v4320 = vld [vmem:[#allocation16 + $0x1c0] sm:$0xff]
          %v4321 = vld [vmem:[#allocation16 + $0x1c8] sm:$0xff]
          %v4322 = vld [vmem:[#allocation16 + $0x1d0] sm:$0xff]
          %v4323 = vld [vmem:[#allocation16 + $0x1d8] sm:$0xff]
          %v4324 = vld [vmem:[#allocation16 + $0x1e0] sm:$0xff]
          %v4325 = vld [vmem:[#allocation16 + $0x1e8] sm:$0xff]
          %v4326 = vld [vmem:[#allocation16 + $0x1f0] sm:$0xff]
          %v4327 = vld [vmem:[#allocation16 + $0x1f8] sm:$0xff]
          %v4328 = vld [vmem:[#allocation16 + $0x200] sm:$0xff]
          %v4329 = vld [vmem:[#allocation16 + $0x208] sm:$0xff]
          %v4330 = vld [vmem:[#allocation16 + $0x210] sm:$0xff]
          %v4331 = vld [vmem:[#allocation16 + $0x218] sm:$0xff]
          %v4332 = vld [vmem:[#allocation16 + $0x220] sm:$0xff]
          %v4333 = vld [vmem:[#allocation16 + $0x228] sm:$0xff]
          %v4334 = vld [vmem:[#allocation16 + $0x230] sm:$0xff]
          %v4335 = vld [vmem:[#allocation16 + $0x238] sm:$0xff]
          %v4336 = vld [vmem:[#allocation16 + $0x240] sm:$0xff]
          %v4337 = vld [vmem:[#allocation16 + $0x248] sm:$0xff]
          %v4338 = vld [vmem:[#allocation16 + $0x250] sm:$0xff]
          %v4339 = vld [vmem:[#allocation16 + $0x258] sm:$0xff]
          %v4340 = vld [vmem:[#allocation16 + $0x260] sm:$0xff]
          %v4341 = vld [vmem:[#allocation16 + $0x268] sm:$0xff]
          %v4342 = vld [vmem:[#allocation16 + $0x270] sm:$0xff]
          %v4343 = vld [vmem:[#allocation16 + $0x278] sm:$0xff]
          %v4344 = vld [vmem:[#allocation16 + $0x280] sm:$0xff]
          %v4345 = vld [vmem:[#allocation16 + $0x288] sm:$0xff]
          %v4346 = vld [vmem:[#allocation16 + $0x290] sm:$0xff]
          %v4347 = vld [vmem:[#allocation16 + $0x298] sm:$0xff]
          %v4348 = vld [vmem:[#allocation16 + $0x2a0] sm:$0xff]
          %v4349 = vld [vmem:[#allocation16 + $0x2a8] sm:$0xff]
          %v4350 = vld [vmem:[#allocation16 + $0x2b0] sm:$0xff]
          %v4351 = vld [vmem:[#allocation16 + $0x2b8] sm:$0xff]
          %v4352 = vld [vmem:[#allocation16 + $0x2c0] sm:$0xff]
          %v4353 = vld [vmem:[#allocation16 + $0x2c8] sm:$0xff]
          %v4354 = vld [vmem:[#allocation16 + $0x2d0] sm:$0xff]
          %v4355 = vld [vmem:[#allocation16 + $0x2d8] sm:$0xff]
          %v4356 = vld [vmem:[#allocation16 + $0x2e0] sm:$0xff]
          %v4357 = vld [vmem:[#allocation16 + $0x2e8] sm:$0xff]
          %v4358 = vld [vmem:[#allocation16 + $0x2f0] sm:$0xff]
          %v4359 = vld [vmem:[#allocation16 + $0x2f8] sm:$0xff]
          %v4360 = vld [vmem:[#allocation16 + $0x300] sm:$0xff]
          %v4361 = vld [vmem:[#allocation16 + $0x308] sm:$0xff]
          %v4362 = vld [vmem:[#allocation16 + $0x310] sm:$0xff]
          %v4363 = vld [vmem:[#allocation16 + $0x318] sm:$0xff]
          %v4364 = vld [vmem:[#allocation16 + $0x320] sm:$0xff]
          %v4365 = vld [vmem:[#allocation16 + $0x328] sm:$0xff]
          %v4366 = vld [vmem:[#allocation16 + $0x330] sm:$0xff]
          %v4367 = vld [vmem:[#allocation16 + $0x338] sm:$0xff]
          %v4368 = vld [vmem:[#allocation16 + $0x340] sm:$0xff]
          %v4369 = vld [vmem:[#allocation16 + $0x348] sm:$0xff]
          %v4370 = vld [vmem:[#allocation16 + $0x350] sm:$0xff]
          %v4371 = vld [vmem:[#allocation16 + $0x358] sm:$0xff]
          %v4372 = vld [vmem:[#allocation16 + $0x360] sm:$0xff]
          %v4373 = vld [vmem:[#allocation16 + $0x368] sm:$0xff]
          %v4374 = vld [vmem:[#allocation16 + $0x370] sm:$0xff]
          %v4375 = vld [vmem:[#allocation16 + $0x378] sm:$0xff]
          %v4376 = vld [vmem:[#allocation16 + $0x380] sm:$0xff]
          %v4377 = vld [vmem:[#allocation16 + $0x388] sm:$0xff]
          %v4378 = vld [vmem:[#allocation16 + $0x390] sm:$0xff]
          %v4379 = vld [vmem:[#allocation16 + $0x398] sm:$0xff]
          %v4380 = vld [vmem:[#allocation16 + $0x3a0] sm:$0xff]
          %v4381 = vld [vmem:[#allocation16 + $0x3a8] sm:$0xff]
          %v4382 = vld [vmem:[#allocation16 + $0x3b0] sm:$0xff]
          %v4383 = vld [vmem:[#allocation16 + $0x3b8] sm:$0xff]
          %v4384 = vld [vmem:[#allocation16 + $0x3c0] sm:$0xff]
          %v4385 = vld [vmem:[#allocation16 + $0x3c8] sm:$0xff]
          %v4386 = vld [vmem:[#allocation16 + $0x3d0] sm:$0xff]
          %v4387 = vld [vmem:[#allocation16 + $0x3d8] sm:$0xff]
          %v4388 = vld [vmem:[#allocation16 + $0x3e0] sm:$0xff]
          %v4389 = vld [vmem:[#allocation16 + $0x3e8] sm:$0xff]
          %v4390 = vld [vmem:[#allocation16 + $0x3f0] sm:$0xff]
          %v4391 = vld [vmem:[#allocation16 + $0x3f8] sm:$0xff]
          %v4520 = vunpack.c.l.b16 %v4264
          %v4521 = vunpack.c.h.b16 %v4264
          %v4522 = vunpack.c.l.b16 %v4265
          %v4523 = vunpack.c.h.b16 %v4265
          %v4524 = vunpack.c.l.b16 %v4266
          %v4525 = vunpack.c.h.b16 %v4266
          %v4526 = vunpack.c.l.b16 %v4267
          %v4527 = vunpack.c.h.b16 %v4267
          %v4528 = vunpack.c.l.b16 %v4268
          %v4529 = vunpack.c.h.b16 %v4268
          %v4530 = vunpack.c.l.b16 %v4269
          %v4531 = vunpack.c.h.b16 %v4269
          %v4532 = vunpack.c.l.b16 %v4270
          %v4533 = vunpack.c.h.b16 %v4270
          %v4534 = vunpack.c.l.b16 %v4271
          %v4535 = vunpack.c.h.b16 %v4271
          %v4536 = vunpack.c.l.b16 %v4272
          %v4537 = vunpack.c.h.b16 %v4272
          %v4538 = vunpack.c.l.b16 %v4273
          %v4539 = vunpack.c.h.b16 %v4273
          %v4540 = vunpack.c.l.b16 %v4274
          %v4541 = vunpack.c.h.b16 %v4274
          %v4542 = vunpack.c.l.b16 %v4275
          %v4543 = vunpack.c.h.b16 %v4275
          %v4544 = vunpack.c.l.b16 %v4276
          %v4545 = vunpack.c.h.b16 %v4276
          %v4546 = vunpack.c.l.b16 %v4277
          %v4547 = vunpack.c.h.b16 %v4277
          %v4548 = vunpack.c.l.b16 %v4278
          %v4549 = vunpack.c.h.b16 %v4278
          %v4550 = vunpack.c.l.b16 %v4279
          %v4551 = vunpack.c.h.b16 %v4279
          %v4552 = vunpack.c.l.b16 %v4280
          %v4553 = vunpack.c.h.b16 %v4280
          %v4554 = vunpack.c.l.b16 %v4281
          %v4555 = vunpack.c.h.b16 %v4281
          %v4556 = vunpack.c.l.b16 %v4282
          %v4557 = vunpack.c.h.b16 %v4282
          %v4558 = vunpack.c.l.b16 %v4283
          %v4559 = vunpack.c.h.b16 %v4283
          %v4560 = vunpack.c.l.b16 %v4284
          %v4561 = vunpack.c.h.b16 %v4284
          %v4562 = vunpack.c.l.b16 %v4285
          %v4563 = vunpack.c.h.b16 %v4285
          %v4564 = vunpack.c.l.b16 %v4286
          %v4565 = vunpack.c.h.b16 %v4286
          %v4566 = vunpack.c.l.b16 %v4287
          %v4567 = vunpack.c.h.b16 %v4287
          %v4568 = vunpack.c.l.b16 %v4288
          %v4569 = vunpack.c.h.b16 %v4288
          %v4570 = vunpack.c.l.b16 %v4289
          %v4571 = vunpack.c.h.b16 %v4289
          %v4572 = vunpack.c.l.b16 %v4290
          %v4573 = vunpack.c.h.b16 %v4290
          %v4574 = vunpack.c.l.b16 %v4291
          %v4575 = vunpack.c.h.b16 %v4291
          %v4576 = vunpack.c.l.b16 %v4292
          %v4577 = vunpack.c.h.b16 %v4292
          %v4578 = vunpack.c.l.b16 %v4293
          %v4579 = vunpack.c.h.b16 %v4293
          %v4580 = vunpack.c.l.b16 %v4294
          %v4581 = vunpack.c.h.b16 %v4294
          %v4582 = vunpack.c.l.b16 %v4295
          %v4583 = vunpack.c.h.b16 %v4295
          %v4584 = vunpack.c.l.b16 %v4296
          %v4585 = vunpack.c.h.b16 %v4296
          %v4586 = vunpack.c.l.b16 %v4297
          %v4587 = vunpack.c.h.b16 %v4297
          %v4588 = vunpack.c.l.b16 %v4298
          %v4589 = vunpack.c.h.b16 %v4298
          %v4590 = vunpack.c.l.b16 %v4299
          %v4591 = vunpack.c.h.b16 %v4299
          %v4592 = vunpack.c.l.b16 %v4300
          %v4593 = vunpack.c.h.b16 %v4300
          %v4594 = vunpack.c.l.b16 %v4301
          %v4595 = vunpack.c.h.b16 %v4301
          %v4596 = vunpack.c.l.b16 %v4302
          %v4597 = vunpack.c.h.b16 %v4302
          %v4598 = vunpack.c.l.b16 %v4303
          %v4599 = vunpack.c.h.b16 %v4303
          %v4600 = vunpack.c.l.b16 %v4304
          %v4601 = vunpack.c.h.b16 %v4304
          %v4602 = vunpack.c.l.b16 %v4305
          %v4603 = vunpack.c.h.b16 %v4305
          %v4604 = vunpack.c.l.b16 %v4306
          %v4605 = vunpack.c.h.b16 %v4306
          %v4606 = vunpack.c.l.b16 %v4307
          %v4607 = vunpack.c.h.b16 %v4307
          %v4608 = vunpack.c.l.b16 %v4308
          %v4609 = vunpack.c.h.b16 %v4308
          %v4610 = vunpack.c.l.b16 %v4309
          %v4611 = vunpack.c.h.b16 %v4309
          %v4612 = vunpack.c.l.b16 %v4310
          %v4613 = vunpack.c.h.b16 %v4310
          %v4614 = vunpack.c.l.b16 %v4311
          %v4615 = vunpack.c.h.b16 %v4311
          %v4616 = vunpack.c.l.b16 %v4312
          %v4617 = vunpack.c.h.b16 %v4312
          %v4618 = vunpack.c.l.b16 %v4313
          %v4619 = vunpack.c.h.b16 %v4313
          %v4620 = vunpack.c.l.b16 %v4314
          %v4621 = vunpack.c.h.b16 %v4314
          %v4622 = vunpack.c.l.b16 %v4315
          %v4623 = vunpack.c.h.b16 %v4315
          %v4624 = vunpack.c.l.b16 %v4316
          %v4625 = vunpack.c.h.b16 %v4316
          %v4626 = vunpack.c.l.b16 %v4317
          %v4627 = vunpack.c.h.b16 %v4317
          %v4628 = vunpack.c.l.b16 %v4318
          %v4629 = vunpack.c.h.b16 %v4318
          %v4630 = vunpack.c.l.b16 %v4319
          %v4631 = vunpack.c.h.b16 %v4319
          %v4632 = vunpack.c.l.b16 %v4320
          %v4633 = vunpack.c.h.b16 %v4320
          %v4634 = vunpack.c.l.b16 %v4321
          %v4635 = vunpack.c.h.b16 %v4321
          %v4636 = vunpack.c.l.b16 %v4322
          %v4637 = vunpack.c.h.b16 %v4322
          %v4638 = vunpack.c.l.b16 %v4323
          %v4639 = vunpack.c.h.b16 %v4323
          %v4640 = vunpack.c.l.b16 %v4324
          %v4641 = vunpack.c.h.b16 %v4324
          %v4642 = vunpack.c.l.b16 %v4325
          %v4643 = vunpack.c.h.b16 %v4325
          %v4644 = vunpack.c.l.b16 %v4326
          %v4645 = vunpack.c.h.b16 %v4326
          %v4646 = vunpack.c.l.b16 %v4327
          %v4647 = vunpack.c.h.b16 %v4327
          %v4648 = vunpack.c.l.b16 %v4328
          %v4649 = vunpack.c.h.b16 %v4328
          %v4650 = vunpack.c.l.b16 %v4329
          %v4651 = vunpack.c.h.b16 %v4329
          %v4652 = vunpack.c.l.b16 %v4330
          %v4653 = vunpack.c.h.b16 %v4330
          %v4654 = vunpack.c.l.b16 %v4331
          %v4655 = vunpack.c.h.b16 %v4331
          %v4656 = vunpack.c.l.b16 %v4332
          %v4657 = vunpack.c.h.b16 %v4332
          %v4658 = vunpack.c.l.b16 %v4333
          %v4659 = vunpack.c.h.b16 %v4333
          %v4660 = vunpack.c.l.b16 %v4334
          %v4661 = vunpack.c.h.b16 %v4334
          %v4662 = vunpack.c.l.b16 %v4335
          %v4663 = vunpack.c.h.b16 %v4335
          %v4664 = vunpack.c.l.b16 %v4336
          %v4665 = vunpack.c.h.b16 %v4336
          %v4666 = vunpack.c.l.b16 %v4337
          %v4667 = vunpack.c.h.b16 %v4337
          %v4668 = vunpack.c.l.b16 %v4338
          %v4669 = vunpack.c.h.b16 %v4338
          %v4670 = vunpack.c.l.b16 %v4339
          %v4671 = vunpack.c.h.b16 %v4339
          %v4672 = vunpack.c.l.b16 %v4340
          %v4673 = vunpack.c.h.b16 %v4340
          %v4674 = vunpack.c.l.b16 %v4341
          %v4675 = vunpack.c.h.b16 %v4341
          %v4676 = vunpack.c.l.b16 %v4342
          %v4677 = vunpack.c.h.b16 %v4342
          %v4678 = vunpack.c.l.b16 %v4343
          %v4679 = vunpack.c.h.b16 %v4343
          %v4680 = vunpack.c.l.b16 %v4344
          %v4681 = vunpack.c.h.b16 %v4344
          %v4682 = vunpack.c.l.b16 %v4345
          %v4683 = vunpack.c.h.b16 %v4345
          %v4684 = vunpack.c.l.b16 %v4346
          %v4685 = vunpack.c.h.b16 %v4346
          %v4686 = vunpack.c.l.b16 %v4347
          %v4687 = vunpack.c.h.b16 %v4347
          %v4688 = vunpack.c.l.b16 %v4348
          %v4689 = vunpack.c.h.b16 %v4348
          %v4690 = vunpack.c.l.b16 %v4349
          %v4691 = vunpack.c.h.b16 %v4349
          %v4692 = vunpack.c.l.b16 %v4350
          %v4693 = vunpack.c.h.b16 %v4350
          %v4694 = vunpack.c.l.b16 %v4351
          %v4695 = vunpack.c.h.b16 %v4351
          %v4696 = vunpack.c.l.b16 %v4352
          %v4697 = vunpack.c.h.b16 %v4352
          %v4698 = vunpack.c.l.b16 %v4353
          %v4699 = vunpack.c.h.b16 %v4353
          %v4700 = vunpack.c.l.b16 %v4354
          %v4701 = vunpack.c.h.b16 %v4354
          %v4702 = vunpack.c.l.b16 %v4355
          %v4703 = vunpack.c.h.b16 %v4355
          %v4704 = vunpack.c.l.b16 %v4356
          %v4705 = vunpack.c.h.b16 %v4356
          %v4706 = vunpack.c.l.b16 %v4357
          %v4707 = vunpack.c.h.b16 %v4357
          %v4708 = vunpack.c.l.b16 %v4358
          %v4709 = vunpack.c.h.b16 %v4358
          %v4710 = vunpack.c.l.b16 %v4359
          %v4711 = vunpack.c.h.b16 %v4359
          %v4712 = vunpack.c.l.b16 %v4360
          %v4713 = vunpack.c.h.b16 %v4360
          %v4714 = vunpack.c.l.b16 %v4361
          %v4715 = vunpack.c.h.b16 %v4361
          %v4716 = vunpack.c.l.b16 %v4362
          %v4717 = vunpack.c.h.b16 %v4362
          %v4718 = vunpack.c.l.b16 %v4363
          %v4719 = vunpack.c.h.b16 %v4363
          %v4720 = vunpack.c.l.b16 %v4364
          %v4721 = vunpack.c.h.b16 %v4364
          %v4722 = vunpack.c.l.b16 %v4365
          %v4723 = vunpack.c.h.b16 %v4365
          %v4724 = vunpack.c.l.b16 %v4366
          %v4725 = vunpack.c.h.b16 %v4366
          %v4726 = vunpack.c.l.b16 %v4367
          %v4727 = vunpack.c.h.b16 %v4367
          %v4728 = vunpack.c.l.b16 %v4368
          %v4729 = vunpack.c.h.b16 %v4368
          %v4730 = vunpack.c.l.b16 %v4369
          %v4731 = vunpack.c.h.b16 %v4369
          %v4732 = vunpack.c.l.b16 %v4370
          %v4733 = vunpack.c.h.b16 %v4370
          %v4734 = vunpack.c.l.b16 %v4371
          %v4735 = vunpack.c.h.b16 %v4371
          %v4736 = vunpack.c.l.b16 %v4372
          %v4737 = vunpack.c.h.b16 %v4372
          %v4738 = vunpack.c.l.b16 %v4373
          %v4739 = vunpack.c.h.b16 %v4373
          %v4740 = vunpack.c.l.b16 %v4374
          %v4741 = vunpack.c.h.b16 %v4374
          %v4742 = vunpack.c.l.b16 %v4375
          %v4743 = vunpack.c.h.b16 %v4375
          %v4744 = vunpack.c.l.b16 %v4376
          %v4745 = vunpack.c.h.b16 %v4376
          %v4746 = vunpack.c.l.b16 %v4377
          %v4747 = vunpack.c.h.b16 %v4377
          %v4748 = vunpack.c.l.b16 %v4378
          %v4749 = vunpack.c.h.b16 %v4378
          %v4750 = vunpack.c.l.b16 %v4379
          %v4751 = vunpack.c.h.b16 %v4379
          %v4752 = vunpack.c.l.b16 %v4380
          %v4753 = vunpack.c.h.b16 %v4380
          %v4754 = vunpack.c.l.b16 %v4381
          %v4755 = vunpack.c.h.b16 %v4381
          %v4756 = vunpack.c.l.b16 %v4382
          %v4757 = vunpack.c.h.b16 %v4382
          %v4758 = vunpack.c.l.b16 %v4383
          %v4759 = vunpack.c.h.b16 %v4383
          %v4760 = vunpack.c.l.b16 %v4384
          %v4761 = vunpack.c.h.b16 %v4384
          %v4762 = vunpack.c.l.b16 %v4385
          %v4763 = vunpack.c.h.b16 %v4385
          %v4764 = vunpack.c.l.b16 %v4386
          %v4765 = vunpack.c.h.b16 %v4386
          %v4766 = vunpack.c.l.b16 %v4387
          %v4767 = vunpack.c.h.b16 %v4387
          %v4768 = vunpack.c.l.b16 %v4388
          %v4769 = vunpack.c.h.b16 %v4388
          %v4770 = vunpack.c.l.b16 %v4389
          %v4771 = vunpack.c.h.b16 %v4389
          %v4772 = vunpack.c.l.b16 %v4390
          %v4773 = vunpack.c.h.b16 %v4390
          %v4774 = vunpack.c.l.b16 %v4391
          %v4775 = vunpack.c.h.b16 %v4391
          %v4776 = vpack.c.b16 %v4524, %v4520
          %v4777 = vpack.c.b16 %v4525, %v4521
          %v4778 = vpack.c.b16 %v4526, %v4522
          %v4779 = vpack.c.b16 %v4527, %v4523
          %v4780 = vpack.c.b16 %v4532, %v4528
          %v4781 = vpack.c.b16 %v4533, %v4529
          %v4782 = vpack.c.b16 %v4534, %v4530
          %v4783 = vpack.c.b16 %v4535, %v4531
          %v4784 = vpack.c.b16 %v4540, %v4536
          %v4785 = vpack.c.b16 %v4541, %v4537
          %v4786 = vpack.c.b16 %v4542, %v4538
          %v4787 = vpack.c.b16 %v4543, %v4539
          %v4788 = vpack.c.b16 %v4548, %v4544
          %v4789 = vpack.c.b16 %v4549, %v4545
          %v4790 = vpack.c.b16 %v4550, %v4546
          %v4791 = vpack.c.b16 %v4551, %v4547
          %v4792 = vpack.c.b16 %v4556, %v4552
          %v4793 = vpack.c.b16 %v4557, %v4553
          %v4794 = vpack.c.b16 %v4558, %v4554
          %v4795 = vpack.c.b16 %v4559, %v4555
          %v4796 = vpack.c.b16 %v4564, %v4560
          %v4797 = vpack.c.b16 %v4565, %v4561
          %v4798 = vpack.c.b16 %v4566, %v4562
          %v4799 = vpack.c.b16 %v4567, %v4563
          %v4800 = vpack.c.b16 %v4572, %v4568
          %v4801 = vpack.c.b16 %v4573, %v4569
          %v4802 = vpack.c.b16 %v4574, %v4570
          %v4803 = vpack.c.b16 %v4575, %v4571
          %v4804 = vpack.c.b16 %v4580, %v4576
          %v4805 = vpack.c.b16 %v4581, %v4577
          %v4806 = vpack.c.b16 %v4582, %v4578
          %v4807 = vpack.c.b16 %v4583, %v4579
          %v4808 = vpack.c.b16 %v4588, %v4584
          %v4809 = vpack.c.b16 %v4589, %v4585
          %v4810 = vpack.c.b16 %v4590, %v4586
          %v4811 = vpack.c.b16 %v4591, %v4587
          %v4812 = vpack.c.b16 %v4596, %v4592
          %v4813 = vpack.c.b16 %v4597, %v4593
          %v4814 = vpack.c.b16 %v4598, %v4594
          %v4815 = vpack.c.b16 %v4599, %v4595
          %v4816 = vpack.c.b16 %v4604, %v4600
          %v4817 = vpack.c.b16 %v4605, %v4601
          %v4818 = vpack.c.b16 %v4606, %v4602
          %v4819 = vpack.c.b16 %v4607, %v4603
          %v4820 = vpack.c.b16 %v4612, %v4608
          %v4821 = vpack.c.b16 %v4613, %v4609
          %v4822 = vpack.c.b16 %v4614, %v4610
          %v4823 = vpack.c.b16 %v4615, %v4611
          %v4824 = vpack.c.b16 %v4620, %v4616
          %v4825 = vpack.c.b16 %v4621, %v4617
          %v4826 = vpack.c.b16 %v4622, %v4618
          %v4827 = vpack.c.b16 %v4623, %v4619
          %v4828 = vpack.c.b16 %v4628, %v4624
          %v4829 = vpack.c.b16 %v4629, %v4625
          %v4830 = vpack.c.b16 %v4630, %v4626
          %v4831 = vpack.c.b16 %v4631, %v4627
          %v4832 = vpack.c.b16 %v4636, %v4632
          %v4833 = vpack.c.b16 %v4637, %v4633
          %v4834 = vpack.c.b16 %v4638, %v4634
          %v4835 = vpack.c.b16 %v4639, %v4635
          %v4836 = vpack.c.b16 %v4644, %v4640
          %v4837 = vpack.c.b16 %v4645, %v4641
          %v4838 = vpack.c.b16 %v4646, %v4642
          %v4839 = vpack.c.b16 %v4647, %v4643
          %v4840 = vpack.c.b16 %v4652, %v4648
          %v4841 = vpack.c.b16 %v4653, %v4649
          %v4842 = vpack.c.b16 %v4654, %v4650
          %v4843 = vpack.c.b16 %v4655, %v4651
          %v4844 = vpack.c.b16 %v4660, %v4656
          %v4845 = vpack.c.b16 %v4661, %v4657
          %v4846 = vpack.c.b16 %v4662, %v4658
          %v4847 = vpack.c.b16 %v4663, %v4659
          %v4848 = vpack.c.b16 %v4668, %v4664
          %v4849 = vpack.c.b16 %v4669, %v4665
          %v4850 = vpack.c.b16 %v4670, %v4666
          %v4851 = vpack.c.b16 %v4671, %v4667
          %v4852 = vpack.c.b16 %v4676, %v4672
          %v4853 = vpack.c.b16 %v4677, %v4673
          %v4854 = vpack.c.b16 %v4678, %v4674
          %v4855 = vpack.c.b16 %v4679, %v4675
          %v4856 = vpack.c.b16 %v4684, %v4680
          %v4857 = vpack.c.b16 %v4685, %v4681
          %v4858 = vpack.c.b16 %v4686, %v4682
          %v4859 = vpack.c.b16 %v4687, %v4683
          %v4860 = vpack.c.b16 %v4692, %v4688
          %v4861 = vpack.c.b16 %v4693, %v4689
          %v4862 = vpack.c.b16 %v4694, %v4690
          %v4863 = vpack.c.b16 %v4695, %v4691
          %v4864 = vpack.c.b16 %v4700, %v4696
          %v4865 = vpack.c.b16 %v4701, %v4697
          %v4866 = vpack.c.b16 %v4702, %v4698
          %v4867 = vpack.c.b16 %v4703, %v4699
          %v4868 = vpack.c.b16 %v4708, %v4704
          %v4869 = vpack.c.b16 %v4709, %v4705
          %v4870 = vpack.c.b16 %v4710, %v4706
          %v4871 = vpack.c.b16 %v4711, %v4707
          %v4872 = vpack.c.b16 %v4716, %v4712
          %v4873 = vpack.c.b16 %v4717, %v4713
          %v4874 = vpack.c.b16 %v4718, %v4714
          %v4875 = vpack.c.b16 %v4719, %v4715
          %v4876 = vpack.c.b16 %v4724, %v4720
          %v4877 = vpack.c.b16 %v4725, %v4721
          %v4878 = vpack.c.b16 %v4726, %v4722
          %v4879 = vpack.c.b16 %v4727, %v4723
          %v4880 = vpack.c.b16 %v4732, %v4728
          %v4881 = vpack.c.b16 %v4733, %v4729
          %v4882 = vpack.c.b16 %v4734, %v4730
          %v4883 = vpack.c.b16 %v4735, %v4731
          %v4884 = vpack.c.b16 %v4740, %v4736
          %v4885 = vpack.c.b16 %v4741, %v4737
          %v4886 = vpack.c.b16 %v4742, %v4738
          %v4887 = vpack.c.b16 %v4743, %v4739
          %v4888 = vpack.c.b16 %v4748, %v4744
          %v4889 = vpack.c.b16 %v4749, %v4745
          %v4890 = vpack.c.b16 %v4750, %v4746
          %v4891 = vpack.c.b16 %v4751, %v4747
          %v4892 = vpack.c.b16 %v4756, %v4752
          %v4893 = vpack.c.b16 %v4757, %v4753
          %v4894 = vpack.c.b16 %v4758, %v4754
          %v4895 = vpack.c.b16 %v4759, %v4755
          %v4896 = vpack.c.b16 %v4764, %v4760
          %v4897 = vpack.c.b16 %v4765, %v4761
          %v4898 = vpack.c.b16 %v4766, %v4762
          %v4899 = vpack.c.b16 %v4767, %v4763
          %v4900 = vpack.c.b16 %v4772, %v4768
          %v4901 = vpack.c.b16 %v4773, %v4769
          %v4902 = vpack.c.b16 %v4774, %v4770
          %v4903 = vpack.c.b16 %v4775, %v4771
          %5032 = vmatprep.subr.bf16.mxu0 %v4805
          %5033 = vmatpush1.bf16.msra.mxu0 %v4804
          %5034 = vmatprep.subr.bf16.mxu0 %v4801
          %5035 = vmatpush1.bf16.msra.mxu0 %v4800
          %5036 = vmatprep.subr.bf16.mxu0 %v4797
          %5037 = vmatpush1.bf16.msra.mxu0 %v4796
          %5038 = vmatprep.subr.bf16.mxu0 %v4793
          %5039 = vmatpush1.bf16.msra.mxu0 %v4792
          %5040 = vmatprep.subr.bf16.mxu0 %v4789
          %5041 = vmatpush1.bf16.msra.mxu0 %v4788
          %5042 = vmatprep.subr.bf16.mxu0 %v4785
          %5043 = vmatpush1.bf16.msra.mxu0 %v4784
          %5044 = vmatprep.subr.bf16.mxu0 %v4781
          %5045 = vmatpush1.bf16.msra.mxu0 %v4780
          %5046 = vmatprep.subr.bf16.mxu0 %v4777
          %5047 = vmatpush1.bf16.msra.mxu0 %v4776
          %5048 = vmatprep.subr.bf16.mxu0 %v4837
          %5049 = vmatpush2.bf16.msra.mxu0 %v4836
          %5050 = vmatprep.subr.bf16.mxu0 %v4833
          %5051 = vmatpush2.bf16.msra.mxu0 %v4832
          %5052 = vmatprep.subr.bf16.mxu0 %v4829
          %5053 = vmatpush2.bf16.msra.mxu0 %v4828
          %5054 = vmatprep.subr.bf16.mxu0 %v4825
          %5055 = vmatpush2.bf16.msra.mxu0 %v4824
          %5056 = vmatprep.subr.bf16.mxu0 %v4821
          %5057 = vmatpush2.bf16.msra.mxu0 %v4820
          %5058 = vmatprep.subr.bf16.mxu0 %v4817
          %5059 = vmatpush2.bf16.msra.mxu0 %v4816
          %5060 = vmatprep.subr.bf16.mxu0 %v4813
          %5061 = vmatpush2.bf16.msra.mxu0 %v4812
          %5062 = vmatprep.subr.bf16.mxu0 %v4809
          %5063 = vmatpush2.bf16.msra.mxu0 %v4808
          %5064 = vmatprep.mubr.bf16.mxu0 %v4261
          %5065 = vmatmul.mubr.bf16.gmra.mxu0 %v4260
          %v5066 = vpop.f32.mrf.mxu0
          %v5067 = vadd.f32 0.0, %v5066
          %v5068 = vpop.f32.mrf.mxu0
          %v5069 = vadd.f32 0.0, %v5068
          %v5070 = vpop.f32.mrf.mxu0
          %v5071 = vpop.f32.mrf.mxu0
          %5072 = vdwg.mxu0
          %5073 = vmatprep.subr.bf16.mxu0 %v4869
          %5074 = vmatpush1.bf16.msra.mxu0 %v4868
          %5075 = vmatprep.subr.bf16.mxu0 %v4865
          %5076 = vmatpush1.bf16.msra.mxu0 %v4864
          %5077 = vmatprep.subr.bf16.mxu0 %v4861
          %5078 = vmatpush1.bf16.msra.mxu0 %v4860
          %5079 = vmatprep.subr.bf16.mxu0 %v4857
          %5080 = vmatpush1.bf16.msra.mxu0 %v4856
          %5081 = vmatprep.subr.bf16.mxu0 %v4853
          %5082 = vmatpush1.bf16.msra.mxu0 %v4852
          %5083 = vmatprep.subr.bf16.mxu0 %v4849
          %5084 = vmatpush1.bf16.msra.mxu0 %v4848
          %5085 = vmatprep.subr.bf16.mxu0 %v4845
          %5086 = vmatpush1.bf16.msra.mxu0 %v4844
          %5087 = vmatprep.subr.bf16.mxu0 %v4841
          %5088 = vmatpush1.bf16.msra.mxu0 %v4840
          %5089 = vmatprep.subr.bf16.mxu0 %v4901
          %5090 = vmatpush2.bf16.msra.mxu0 %v4900
          %5091 = vmatprep.subr.bf16.mxu0 %v4897
          %5092 = vmatpush2.bf16.msra.mxu0 %v4896
          %5093 = vmatprep.subr.bf16.mxu0 %v4893
          %5094 = vmatpush2.bf16.msra.mxu0 %v4892
          %5095 = vmatprep.subr.bf16.mxu0 %v4889
          %5096 = vmatpush2.bf16.msra.mxu0 %v4888
          %5097 = vmatprep.subr.bf16.mxu0 %v4885
          %5098 = vmatpush2.bf16.msra.mxu0 %v4884
          %5099 = vmatprep.subr.bf16.mxu0 %v4881
          %5100 = vmatpush2.bf16.msra.mxu0 %v4880
          %5101 = vmatprep.subr.bf16.mxu0 %v4877
          %5102 = vmatpush2.bf16.msra.mxu0 %v4876
          %5103 = vmatprep.subr.bf16.mxu0 %v4873
          %5104 = vmatpush2.bf16.msra.mxu0 %v4872
          %5105 = vmatprep.mubr.bf16.mxu0 %v4263
          %5106 = vmatmul.mubr.bf16.gmra.mxu0 %v4262
          %v5107 = vpop.f32.mrf.mxu0
          %v5108 = vadd.f32 %v5067, %v5107
          %v5109 = vpop.f32.mrf.mxu0
          %v5110 = vadd.f32 %v5069, %v5109
          %v5111 = vpop.f32.mrf.mxu0
          %v5112 = vpop.f32.mrf.mxu0
          %5113 = vdwg.mxu0
          %5114 = vmatprep.subr.bf16.mxu0 %v4807
          %5115 = vmatpush1.bf16.msra.mxu0 %v4806
          %5116 = vmatprep.subr.bf16.mxu0 %v4803
          %5117 = vmatpush1.bf16.msra.mxu0 %v4802
          %5118 = vmatprep.subr.bf16.mxu0 %v4799
          %5119 = vmatpush1.bf16.msra.mxu0 %v4798
          %5120 = vmatprep.subr.bf16.mxu0 %v4795
          %5121 = vmatpush1.bf16.msra.mxu0 %v4794
          %5122 = vmatprep.subr.bf16.mxu0 %v4791
          %5123 = vmatpush1.bf16.msra.mxu0 %v4790
          %5124 = vmatprep.subr.bf16.mxu0 %v4787
          %5125 = vmatpush1.bf16.msra.mxu0 %v4786
          %5126 = vmatprep.subr.bf16.mxu0 %v4783
          %5127 = vmatpush1.bf16.msra.mxu0 %v4782
          %5128 = vmatprep.subr.bf16.mxu0 %v4779
          %5129 = vmatpush1.bf16.msra.mxu0 %v4778
          %5130 = vmatprep.subr.bf16.mxu0 %v4839
          %5131 = vmatpush2.bf16.msra.mxu0 %v4838
          %5132 = vmatprep.subr.bf16.mxu0 %v4835
          %5133 = vmatpush2.bf16.msra.mxu0 %v4834
          %5134 = vmatprep.subr.bf16.mxu0 %v4831
          %5135 = vmatpush2.bf16.msra.mxu0 %v4830
          %5136 = vmatprep.subr.bf16.mxu0 %v4827
          %5137 = vmatpush2.bf16.msra.mxu0 %v4826
          %5138 = vmatprep.subr.bf16.mxu0 %v4823
          %5139 = vmatpush2.bf16.msra.mxu0 %v4822
          %5140 = vmatprep.subr.bf16.mxu0 %v4819
          %5141 = vmatpush2.bf16.msra.mxu0 %v4818
          %5142 = vmatprep.subr.bf16.mxu0 %v4815
          %5143 = vmatpush2.bf16.msra.mxu0 %v4814
          %5144 = vmatprep.subr.bf16.mxu0 %v4811
          %5145 = vmatpush2.bf16.msra.mxu0 %v4810
          %5146 = vmatprep.mubr.bf16.mxu0 %v4261
          %5147 = vmatmul.mubr.bf16.gmra.mxu0 %v4260
          %v5148 = vpop.f32.mrf.mxu0
          %v5149 = vadd.f32 0.0, %v5148
          %v5150 = vpop.f32.mrf.mxu0
          %v5151 = vadd.f32 0.0, %v5150
          %v5152 = vpop.f32.mrf.mxu0
          %v5153 = vpop.f32.mrf.mxu0
          %5154 = vdwg.mxu0
          %5155 = vmatprep.subr.bf16.mxu0 %v4871
          %5156 = vmatpush1.bf16.msra.mxu0 %v4870
          %5157 = vmatprep.subr.bf16.mxu0 %v4867
          %5158 = vmatpush1.bf16.msra.mxu0 %v4866
          %5159 = vmatprep.subr.bf16.mxu0 %v4863
          %5160 = vmatpush1.bf16.msra.mxu0 %v4862
          %5161 = vmatprep.subr.bf16.mxu0 %v4859
          %5162 = vmatpush1.bf16.msra.mxu0 %v4858
          %5163 = vmatprep.subr.bf16.mxu0 %v4855
          %5164 = vmatpush1.bf16.msra.mxu0 %v4854
          %5165 = vmatprep.subr.bf16.mxu0 %v4851
          %5166 = vmatpush1.bf16.msra.mxu0 %v4850
          %5167 = vmatprep.subr.bf16.mxu0 %v4847
          %5168 = vmatpush1.bf16.msra.mxu0 %v4846
          %5169 = vmatprep.subr.bf16.mxu0 %v4843
          %5170 = vmatpush1.bf16.msra.mxu0 %v4842
          %5171 = vmatprep.subr.bf16.mxu0 %v4903
          %5172 = vmatpush2.bf16.msra.mxu0 %v4902
          %5173 = vmatprep.subr.bf16.mxu0 %v4899
          %5174 = vmatpush2.bf16.msra.mxu0 %v4898
          %5175 = vmatprep.subr.bf16.mxu0 %v4895
          %5176 = vmatpush2.bf16.msra.mxu0 %v4894
          %5177 = vmatprep.subr.bf16.mxu0 %v4891
          %5178 = vmatpush2.bf16.msra.mxu0 %v4890
          %5179 = vmatprep.subr.bf16.mxu0 %v4887
          %5180 = vmatpush2.bf16.msra.mxu0 %v4886
          %5181 = vmatprep.subr.bf16.mxu0 %v4883
          %5182 = vmatpush2.bf16.msra.mxu0 %v4882
          %5183 = vmatprep.subr.bf16.mxu0 %v4879
          %5184 = vmatpush2.bf16.msra.mxu0 %v4878
          %5185 = vmatprep.subr.bf16.mxu0 %v4875
          %5186 = vmatpush2.bf16.msra.mxu0 %v4874
          %5187 = vmatprep.mubr.bf16.mxu0 %v4263
          %5188 = vmatmul.mubr.bf16.gmra.mxu0 %v4262
          %v5189 = vpop.f32.mrf.mxu0
          %v5190 = vadd.f32 %v5149, %v5189
          %v5191 = vpop.f32.mrf.mxu0
          %v5192 = vadd.f32 %v5151, %v5191
          %v5193 = vpop.f32.mrf.mxu0
          %v5194 = vpop.f32.mrf.mxu0
          %5195 = vdwg.mxu0
          %v5324 = vunpack.c.l.b16 %v4132
          %v5325 = vunpack.c.h.b16 %v4132
          %v5326 = vunpack.c.l.b16 %v4133
          %v5327 = vunpack.c.h.b16 %v4133
          %v5328 = vunpack.c.l.b16 %v4134
          %v5329 = vunpack.c.h.b16 %v4134
          %v5330 = vunpack.c.l.b16 %v4135
          %v5331 = vunpack.c.h.b16 %v4135
          %v5332 = vunpack.c.l.b16 %v4136
          %v5333 = vunpack.c.h.b16 %v4136
          %v5334 = vunpack.c.l.b16 %v4137
          %v5335 = vunpack.c.h.b16 %v4137
          %v5336 = vunpack.c.l.b16 %v4138
          %v5337 = vunpack.c.h.b16 %v4138
          %v5338 = vunpack.c.l.b16 %v4139
          %v5339 = vunpack.c.h.b16 %v4139
          %v5340 = vunpack.c.l.b16 %v4140
          %v5341 = vunpack.c.h.b16 %v4140
          %v5342 = vunpack.c.l.b16 %v4141
          %v5343 = vunpack.c.h.b16 %v4141
          %v5344 = vunpack.c.l.b16 %v4142
          %v5345 = vunpack.c.h.b16 %v4142
          %v5346 = vunpack.c.l.b16 %v4143
          %v5347 = vunpack.c.h.b16 %v4143
          %v5348 = vunpack.c.l.b16 %v4144
          %v5349 = vunpack.c.h.b16 %v4144
          %v5350 = vunpack.c.l.b16 %v4145
          %v5351 = vunpack.c.h.b16 %v4145
          %v5352 = vunpack.c.l.b16 %v4146
          %v5353 = vunpack.c.h.b16 %v4146
          %v5354 = vunpack.c.l.b16 %v4147
          %v5355 = vunpack.c.h.b16 %v4147
          %v5356 = vunpack.c.l.b16 %v4148
          %v5357 = vunpack.c.h.b16 %v4148
          %v5358 = vunpack.c.l.b16 %v4149
          %v5359 = vunpack.c.h.b16 %v4149
          %v5360 = vunpack.c.l.b16 %v4150
          %v5361 = vunpack.c.h.b16 %v4150
          %v5362 = vunpack.c.l.b16 %v4151
          %v5363 = vunpack.c.h.b16 %v4151
          %v5364 = vunpack.c.l.b16 %v4152
          %v5365 = vunpack.c.h.b16 %v4152
          %v5366 = vunpack.c.l.b16 %v4153
          %v5367 = vunpack.c.h.b16 %v4153
          %v5368 = vunpack.c.l.b16 %v4154
          %v5369 = vunpack.c.h.b16 %v4154
          %v5370 = vunpack.c.l.b16 %v4155
          %v5371 = vunpack.c.h.b16 %v4155
          %v5372 = vunpack.c.l.b16 %v4156
          %v5373 = vunpack.c.h.b16 %v4156
          %v5374 = vunpack.c.l.b16 %v4157
          %v5375 = vunpack.c.h.b16 %v4157
          %v5376 = vunpack.c.l.b16 %v4158
          %v5377 = vunpack.c.h.b16 %v4158
          %v5378 = vunpack.c.l.b16 %v4159
          %v5379 = vunpack.c.h.b16 %v4159
          %v5380 = vunpack.c.l.b16 %v4160
          %v5381 = vunpack.c.h.b16 %v4160
          %v5382 = vunpack.c.l.b16 %v4161
          %v5383 = vunpack.c.h.b16 %v4161
          %v5384 = vunpack.c.l.b16 %v4162
          %v5385 = vunpack.c.h.b16 %v4162
          %v5386 = vunpack.c.l.b16 %v4163
          %v5387 = vunpack.c.h.b16 %v4163
          %v5388 = vunpack.c.l.b16 %v4164
          %v5389 = vunpack.c.h.b16 %v4164
          %v5390 = vunpack.c.l.b16 %v4165
          %v5391 = vunpack.c.h.b16 %v4165
          %v5392 = vunpack.c.l.b16 %v4166
          %v5393 = vunpack.c.h.b16 %v4166
          %v5394 = vunpack.c.l.b16 %v4167
          %v5395 = vunpack.c.h.b16 %v4167
          %v5396 = vunpack.c.l.b16 %v4168
          %v5397 = vunpack.c.h.b16 %v4168
          %v5398 = vunpack.c.l.b16 %v4169
          %v5399 = vunpack.c.h.b16 %v4169
          %v5400 = vunpack.c.l.b16 %v4170
          %v5401 = vunpack.c.h.b16 %v4170
          %v5402 = vunpack.c.l.b16 %v4171
          %v5403 = vunpack.c.h.b16 %v4171
          %v5404 = vunpack.c.l.b16 %v4172
          %v5405 = vunpack.c.h.b16 %v4172
          %v5406 = vunpack.c.l.b16 %v4173
          %v5407 = vunpack.c.h.b16 %v4173
          %v5408 = vunpack.c.l.b16 %v4174
          %v5409 = vunpack.c.h.b16 %v4174
          %v5410 = vunpack.c.l.b16 %v4175
          %v5411 = vunpack.c.h.b16 %v4175
          %v5412 = vunpack.c.l.b16 %v4176
          %v5413 = vunpack.c.h.b16 %v4176
          %v5414 = vunpack.c.l.b16 %v4177
          %v5415 = vunpack.c.h.b16 %v4177
          %v5416 = vunpack.c.l.b16 %v4178
          %v5417 = vunpack.c.h.b16 %v4178
          %v5418 = vunpack.c.l.b16 %v4179
          %v5419 = vunpack.c.h.b16 %v4179
          %v5420 = vunpack.c.l.b16 %v4180
          %v5421 = vunpack.c.h.b16 %v4180
          %v5422 = vunpack.c.l.b16 %v4181
          %v5423 = vunpack.c.h.b16 %v4181
          %v5424 = vunpack.c.l.b16 %v4182
          %v5425 = vunpack.c.h.b16 %v4182
          %v5426 = vunpack.c.l.b16 %v4183
          %v5427 = vunpack.c.h.b16 %v4183
          %v5428 = vunpack.c.l.b16 %v4184
          %v5429 = vunpack.c.h.b16 %v4184
          %v5430 = vunpack.c.l.b16 %v4185
          %v5431 = vunpack.c.h.b16 %v4185
          %v5432 = vunpack.c.l.b16 %v4186
          %v5433 = vunpack.c.h.b16 %v4186
          %v5434 = vunpack.c.l.b16 %v4187
          %v5435 = vunpack.c.h.b16 %v4187
          %v5436 = vunpack.c.l.b16 %v4188
          %v5437 = vunpack.c.h.b16 %v4188
          %v5438 = vunpack.c.l.b16 %v4189
          %v5439 = vunpack.c.h.b16 %v4189
          %v5440 = vunpack.c.l.b16 %v4190
          %v5441 = vunpack.c.h.b16 %v4190
          %v5442 = vunpack.c.l.b16 %v4191
          %v5443 = vunpack.c.h.b16 %v4191
          %v5444 = vunpack.c.l.b16 %v4192
          %v5445 = vunpack.c.h.b16 %v4192
          %v5446 = vunpack.c.l.b16 %v4193
          %v5447 = vunpack.c.h.b16 %v4193
          %v5448 = vunpack.c.l.b16 %v4194
          %v5449 = vunpack.c.h.b16 %v4194
          %v5450 = vunpack.c.l.b16 %v4195
          %v5451 = vunpack.c.h.b16 %v4195
          %v5452 = vunpack.c.l.b16 %v4196
          %v5453 = vunpack.c.h.b16 %v4196
          %v5454 = vunpack.c.l.b16 %v4197
          %v5455 = vunpack.c.h.b16 %v4197
          %v5456 = vunpack.c.l.b16 %v4198
          %v5457 = vunpack.c.h.b16 %v4198
          %v5458 = vunpack.c.l.b16 %v4199
          %v5459 = vunpack.c.h.b16 %v4199
          %v5460 = vunpack.c.l.b16 %v4200
          %v5461 = vunpack.c.h.b16 %v4200
          %v5462 = vunpack.c.l.b16 %v4201
          %v5463 = vunpack.c.h.b16 %v4201
          %v5464 = vunpack.c.l.b16 %v4202
          %v5465 = vunpack.c.h.b16 %v4202
          %v5466 = vunpack.c.l.b16 %v4203
          %v5467 = vunpack.c.h.b16 %v4203
          %v5468 = vunpack.c.l.b16 %v4204
          %v5469 = vunpack.c.h.b16 %v4204
          %v5470 = vunpack.c.l.b16 %v4205
          %v5471 = vunpack.c.h.b16 %v4205
          %v5472 = vunpack.c.l.b16 %v4206
          %v5473 = vunpack.c.h.b16 %v4206
          %v5474 = vunpack.c.l.b16 %v4207
          %v5475 = vunpack.c.h.b16 %v4207
          %v5476 = vunpack.c.l.b16 %v4208
          %v5477 = vunpack.c.h.b16 %v4208
          %v5478 = vunpack.c.l.b16 %v4209
          %v5479 = vunpack.c.h.b16 %v4209
          %v5480 = vunpack.c.l.b16 %v4210
          %v5481 = vunpack.c.h.b16 %v4210
          %v5482 = vunpack.c.l.b16 %v4211
          %v5483 = vunpack.c.h.b16 %v4211
          %v5484 = vunpack.c.l.b16 %v4212
          %v5485 = vunpack.c.h.b16 %v4212
          %v5486 = vunpack.c.l.b16 %v4213
          %v5487 = vunpack.c.h.b16 %v4213
          %v5488 = vunpack.c.l.b16 %v4214
          %v5489 = vunpack.c.h.b16 %v4214
          %v5490 = vunpack.c.l.b16 %v4215
          %v5491 = vunpack.c.h.b16 %v4215
          %v5492 = vunpack.c.l.b16 %v4216
          %v5493 = vunpack.c.h.b16 %v4216
          %v5494 = vunpack.c.l.b16 %v4217
          %v5495 = vunpack.c.h.b16 %v4217
          %v5496 = vunpack.c.l.b16 %v4218
          %v5497 = vunpack.c.h.b16 %v4218
          %v5498 = vunpack.c.l.b16 %v4219
          %v5499 = vunpack.c.h.b16 %v4219
          %v5500 = vunpack.c.l.b16 %v4220
          %v5501 = vunpack.c.h.b16 %v4220
          %v5502 = vunpack.c.l.b16 %v4221
          %v5503 = vunpack.c.h.b16 %v4221
          %v5504 = vunpack.c.l.b16 %v4222
          %v5505 = vunpack.c.h.b16 %v4222
          %v5506 = vunpack.c.l.b16 %v4223
          %v5507 = vunpack.c.h.b16 %v4223
          %v5508 = vunpack.c.l.b16 %v4224
          %v5509 = vunpack.c.h.b16 %v4224
          %v5510 = vunpack.c.l.b16 %v4225
          %v5511 = vunpack.c.h.b16 %v4225
          %v5512 = vunpack.c.l.b16 %v4226
          %v5513 = vunpack.c.h.b16 %v4226
          %v5514 = vunpack.c.l.b16 %v4227
          %v5515 = vunpack.c.h.b16 %v4227
          %v5516 = vunpack.c.l.b16 %v4228
          %v5517 = vunpack.c.h.b16 %v4228
          %v5518 = vunpack.c.l.b16 %v4229
          %v5519 = vunpack.c.h.b16 %v4229
          %v5520 = vunpack.c.l.b16 %v4230
          %v5521 = vunpack.c.h.b16 %v4230
          %v5522 = vunpack.c.l.b16 %v4231
          %v5523 = vunpack.c.h.b16 %v4231
          %v5524 = vunpack.c.l.b16 %v4232
          %v5525 = vunpack.c.h.b16 %v4232
          %v5526 = vunpack.c.l.b16 %v4233
          %v5527 = vunpack.c.h.b16 %v4233
          %v5528 = vunpack.c.l.b16 %v4234
          %v5529 = vunpack.c.h.b16 %v4234
          %v5530 = vunpack.c.l.b16 %v4235
          %v5531 = vunpack.c.h.b16 %v4235
          %v5532 = vunpack.c.l.b16 %v4236
          %v5533 = vunpack.c.h.b16 %v4236
          %v5534 = vunpack.c.l.b16 %v4237
          %v5535 = vunpack.c.h.b16 %v4237
          %v5536 = vunpack.c.l.b16 %v4238
          %v5537 = vunpack.c.h.b16 %v4238
          %v5538 = vunpack.c.l.b16 %v4239
          %v5539 = vunpack.c.h.b16 %v4239
          %v5540 = vunpack.c.l.b16 %v4240
          %v5541 = vunpack.c.h.b16 %v4240
          %v5542 = vunpack.c.l.b16 %v4241
          %v5543 = vunpack.c.h.b16 %v4241
          %v5544 = vunpack.c.l.b16 %v4242
          %v5545 = vunpack.c.h.b16 %v4242
          %v5546 = vunpack.c.l.b16 %v4243
          %v5547 = vunpack.c.h.b16 %v4243
          %v5548 = vunpack.c.l.b16 %v4244
          %v5549 = vunpack.c.h.b16 %v4244
          %v5550 = vunpack.c.l.b16 %v4245
          %v5551 = vunpack.c.h.b16 %v4245
          %v5552 = vunpack.c.l.b16 %v4246
          %v5553 = vunpack.c.h.b16 %v4246
          %v5554 = vunpack.c.l.b16 %v4247
          %v5555 = vunpack.c.h.b16 %v4247
          %v5556 = vunpack.c.l.b16 %v4248
          %v5557 = vunpack.c.h.b16 %v4248
          %v5558 = vunpack.c.l.b16 %v4249
          %v5559 = vunpack.c.h.b16 %v4249
          %v5560 = vunpack.c.l.b16 %v4250
          %v5561 = vunpack.c.h.b16 %v4250
          %v5562 = vunpack.c.l.b16 %v4251
          %v5563 = vunpack.c.h.b16 %v4251
          %v5564 = vunpack.c.l.b16 %v4252
          %v5565 = vunpack.c.h.b16 %v4252
          %v5566 = vunpack.c.l.b16 %v4253
          %v5567 = vunpack.c.h.b16 %v4253
          %v5568 = vunpack.c.l.b16 %v4254
          %v5569 = vunpack.c.h.b16 %v4254
          %v5570 = vunpack.c.l.b16 %v4255
          %v5571 = vunpack.c.h.b16 %v4255
          %v5572 = vunpack.c.l.b16 %v4256
          %v5573 = vunpack.c.h.b16 %v4256
          %v5574 = vunpack.c.l.b16 %v4257
          %v5575 = vunpack.c.h.b16 %v4257
          %v5576 = vunpack.c.l.b16 %v4258
          %v5577 = vunpack.c.h.b16 %v4258
          %v5578 = vunpack.c.l.b16 %v4259
          %v5579 = vunpack.c.h.b16 %v4259
          %v5580 = vpack.c.b16 %v5328, %v5324
          %v5581 = vpack.c.b16 %v5329, %v5325
          %v5582 = vpack.c.b16 %v5330, %v5326
          %v5583 = vpack.c.b16 %v5331, %v5327
          %v5584 = vpack.c.b16 %v5336, %v5332
          %v5585 = vpack.c.b16 %v5337, %v5333
          %v5586 = vpack.c.b16 %v5338, %v5334
          %v5587 = vpack.c.b16 %v5339, %v5335
          %v5588 = vpack.c.b16 %v5344, %v5340
          %v5589 = vpack.c.b16 %v5345, %v5341
          %v5590 = vpack.c.b16 %v5346, %v5342
          %v5591 = vpack.c.b16 %v5347, %v5343
          %v5592 = vpack.c.b16 %v5352, %v5348
          %v5593 = vpack.c.b16 %v5353, %v5349
          %v5594 = vpack.c.b16 %v5354, %v5350
          %v5595 = vpack.c.b16 %v5355, %v5351
          %v5596 = vpack.c.b16 %v5360, %v5356
          %v5597 = vpack.c.b16 %v5361, %v5357
          %v5598 = vpack.c.b16 %v5362, %v5358
          %v5599 = vpack.c.b16 %v5363, %v5359
          %v5600 = vpack.c.b16 %v5368, %v5364
          %v5601 = vpack.c.b16 %v5369, %v5365
          %v5602 = vpack.c.b16 %v5370, %v5366
          %v5603 = vpack.c.b16 %v5371, %v5367
          %v5604 = vpack.c.b16 %v5376, %v5372
          %v5605 = vpack.c.b16 %v5377, %v5373
          %v5606 = vpack.c.b16 %v5378, %v5374
          %v5607 = vpack.c.b16 %v5379, %v5375
          %v5608 = vpack.c.b16 %v5384, %v5380
          %v5609 = vpack.c.b16 %v5385, %v5381
          %v5610 = vpack.c.b16 %v5386, %v5382
          %v5611 = vpack.c.b16 %v5387, %v5383
          %v5612 = vpack.c.b16 %v5392, %v5388
          %v5613 = vpack.c.b16 %v5393, %v5389
          %v5614 = vpack.c.b16 %v5394, %v5390
          %v5615 = vpack.c.b16 %v5395, %v5391
          %v5616 = vpack.c.b16 %v5400, %v5396
          %v5617 = vpack.c.b16 %v5401, %v5397
          %v5618 = vpack.c.b16 %v5402, %v5398
          %v5619 = vpack.c.b16 %v5403, %v5399
          %v5620 = vpack.c.b16 %v5408, %v5404
          %v5621 = vpack.c.b16 %v5409, %v5405
          %v5622 = vpack.c.b16 %v5410, %v5406
          %v5623 = vpack.c.b16 %v5411, %v5407
          %v5624 = vpack.c.b16 %v5416, %v5412
          %v5625 = vpack.c.b16 %v5417, %v5413
          %v5626 = vpack.c.b16 %v5418, %v5414
          %v5627 = vpack.c.b16 %v5419, %v5415
          %v5628 = vpack.c.b16 %v5424, %v5420
          %v5629 = vpack.c.b16 %v5425, %v5421
          %v5630 = vpack.c.b16 %v5426, %v5422
          %v5631 = vpack.c.b16 %v5427, %v5423
          %v5632 = vpack.c.b16 %v5432, %v5428
          %v5633 = vpack.c.b16 %v5433, %v5429
          %v5634 = vpack.c.b16 %v5434, %v5430
          %v5635 = vpack.c.b16 %v5435, %v5431
          %v5636 = vpack.c.b16 %v5440, %v5436
          %v5637 = vpack.c.b16 %v5441, %v5437
          %v5638 = vpack.c.b16 %v5442, %v5438
          %v5639 = vpack.c.b16 %v5443, %v5439
          %v5640 = vpack.c.b16 %v5448, %v5444
          %v5641 = vpack.c.b16 %v5449, %v5445
          %v5642 = vpack.c.b16 %v5450, %v5446
          %v5643 = vpack.c.b16 %v5451, %v5447
          %v5644 = vpack.c.b16 %v5456, %v5452
          %v5645 = vpack.c.b16 %v5457, %v5453
          %v5646 = vpack.c.b16 %v5458, %v5454
          %v5647 = vpack.c.b16 %v5459, %v5455
          %v5648 = vpack.c.b16 %v5464, %v5460
          %v5649 = vpack.c.b16 %v5465, %v5461
          %v5650 = vpack.c.b16 %v5466, %v5462
          %v5651 = vpack.c.b16 %v5467, %v5463
          %v5652 = vpack.c.b16 %v5472, %v5468
          %v5653 = vpack.c.b16 %v5473, %v5469
          %v5654 = vpack.c.b16 %v5474, %v5470
          %v5655 = vpack.c.b16 %v5475, %v5471
          %v5656 = vpack.c.b16 %v5480, %v5476
          %v5657 = vpack.c.b16 %v5481, %v5477
          %v5658 = vpack.c.b16 %v5482, %v5478
          %v5659 = vpack.c.b16 %v5483, %v5479
          %v5660 = vpack.c.b16 %v5488, %v5484
          %v5661 = vpack.c.b16 %v5489, %v5485
          %v5662 = vpack.c.b16 %v5490, %v5486
          %v5663 = vpack.c.b16 %v5491, %v5487
          %v5664 = vpack.c.b16 %v5496, %v5492
          %v5665 = vpack.c.b16 %v5497, %v5493
          %v5666 = vpack.c.b16 %v5498, %v5494
          %v5667 = vpack.c.b16 %v5499, %v5495
          %v5668 = vpack.c.b16 %v5504, %v5500
          %v5669 = vpack.c.b16 %v5505, %v5501
          %v5670 = vpack.c.b16 %v5506, %v5502
          %v5671 = vpack.c.b16 %v5507, %v5503
          %v5672 = vpack.c.b16 %v5512, %v5508
          %v5673 = vpack.c.b16 %v5513, %v5509
          %v5674 = vpack.c.b16 %v5514, %v5510
          %v5675 = vpack.c.b16 %v5515, %v5511
          %v5676 = vpack.c.b16 %v5520, %v5516
          %v5677 = vpack.c.b16 %v5521, %v5517
          %v5678 = vpack.c.b16 %v5522, %v5518
          %v5679 = vpack.c.b16 %v5523, %v5519
          %v5680 = vpack.c.b16 %v5528, %v5524
          %v5681 = vpack.c.b16 %v5529, %v5525
          %v5682 = vpack.c.b16 %v5530, %v5526
          %v5683 = vpack.c.b16 %v5531, %v5527
          %v5684 = vpack.c.b16 %v5536, %v5532
          %v5685 = vpack.c.b16 %v5537, %v5533
          %v5686 = vpack.c.b16 %v5538, %v5534
          %v5687 = vpack.c.b16 %v5539, %v5535
          %v5688 = vpack.c.b16 %v5544, %v5540
          %v5689 = vpack.c.b16 %v5545, %v5541
          %v5690 = vpack.c.b16 %v5546, %v5542
          %v5691 = vpack.c.b16 %v5547, %v5543
          %v5692 = vpack.c.b16 %v5552, %v5548
          %v5693 = vpack.c.b16 %v5553, %v5549
          %v5694 = vpack.c.b16 %v5554, %v5550
          %v5695 = vpack.c.b16 %v5555, %v5551
          %v5696 = vpack.c.b16 %v5560, %v5556
          %v5697 = vpack.c.b16 %v5561, %v5557
          %v5698 = vpack.c.b16 %v5562, %v5558
          %v5699 = vpack.c.b16 %v5563, %v5559
          %v5700 = vpack.c.b16 %v5568, %v5564
          %v5701 = vpack.c.b16 %v5569, %v5565
          %v5702 = vpack.c.b16 %v5570, %v5566
          %v5703 = vpack.c.b16 %v5571, %v5567
          %v5704 = vpack.c.b16 %v5576, %v5572
          %v5705 = vpack.c.b16 %v5577, %v5573
          %v5706 = vpack.c.b16 %v5578, %v5574
          %v5707 = vpack.c.b16 %v5579, %v5575
          %5836 = vmatprep.subr.bf16.mxu0 %v5609
          %5837 = vmatpush1.bf16.msra.mxu0 %v5608
          %5838 = vmatprep.subr.bf16.mxu0 %v5605
          %5839 = vmatpush1.bf16.msra.mxu0 %v5604
          %5840 = vmatprep.subr.bf16.mxu0 %v5601
          %5841 = vmatpush1.bf16.msra.mxu0 %v5600
          %5842 = vmatprep.subr.bf16.mxu0 %v5597
          %5843 = vmatpush1.bf16.msra.mxu0 %v5596
          %5844 = vmatprep.subr.bf16.mxu0 %v5593
          %5845 = vmatpush1.bf16.msra.mxu0 %v5592
          %5846 = vmatprep.subr.bf16.mxu0 %v5589
          %5847 = vmatpush1.bf16.msra.mxu0 %v5588
          %5848 = vmatprep.subr.bf16.mxu0 %v5585
          %5849 = vmatpush1.bf16.msra.mxu0 %v5584
          %5850 = vmatprep.subr.bf16.mxu0 %v5581
          %5851 = vmatpush1.bf16.msra.mxu0 %v5580
          %5852 = vmatprep.subr.bf16.mxu0 %v5641
          %5853 = vmatpush2.bf16.msra.mxu0 %v5640
          %5854 = vmatprep.subr.bf16.mxu0 %v5637
          %5855 = vmatpush2.bf16.msra.mxu0 %v5636
          %5856 = vmatprep.subr.bf16.mxu0 %v5633
          %5857 = vmatpush2.bf16.msra.mxu0 %v5632
          %5858 = vmatprep.subr.bf16.mxu0 %v5629
          %5859 = vmatpush2.bf16.msra.mxu0 %v5628
          %5860 = vmatprep.subr.bf16.mxu0 %v5625
          %5861 = vmatpush2.bf16.msra.mxu0 %v5624
          %5862 = vmatprep.subr.bf16.mxu0 %v5621
          %5863 = vmatpush2.bf16.msra.mxu0 %v5620
          %5864 = vmatprep.subr.bf16.mxu0 %v5617
          %5865 = vmatpush2.bf16.msra.mxu0 %v5616
          %5866 = vmatprep.subr.bf16.mxu0 %v5613
          %5867 = vmatpush2.bf16.msra.mxu0 %v5612
          %5868 = vmatprep.mubr.bf16.mxu0 %v4129
          %5869 = vmatmul.mubr.bf16.gmra.mxu0 %v4128
          %v5870 = vpop.f32.mrf.mxu0
          %v5871 = vadd.f32 %v5108, %v5870
          %v5872 = vpop.f32.mrf.mxu0
          %v5873 = vadd.f32 %v5110, %v5872
          %v5874 = vpop.f32.mrf.mxu0
          %v5875 = vpop.f32.mrf.mxu0
          %5876 = vdwg.mxu0
          %5877 = vmatprep.subr.bf16.mxu0 %v5673
          %5878 = vmatpush1.bf16.msra.mxu0 %v5672
          %5879 = vmatprep.subr.bf16.mxu0 %v5669
          %5880 = vmatpush1.bf16.msra.mxu0 %v5668
          %5881 = vmatprep.subr.bf16.mxu0 %v5665
          %5882 = vmatpush1.bf16.msra.mxu0 %v5664
          %5883 = vmatprep.subr.bf16.mxu0 %v5661
          %5884 = vmatpush1.bf16.msra.mxu0 %v5660
          %5885 = vmatprep.subr.bf16.mxu0 %v5657
          %5886 = vmatpush1.bf16.msra.mxu0 %v5656
          %5887 = vmatprep.subr.bf16.mxu0 %v5653
          %5888 = vmatpush1.bf16.msra.mxu0 %v5652
          %5889 = vmatprep.subr.bf16.mxu0 %v5649
          %5890 = vmatpush1.bf16.msra.mxu0 %v5648
          %5891 = vmatprep.subr.bf16.mxu0 %v5645
          %5892 = vmatpush1.bf16.msra.mxu0 %v5644
          %5893 = vmatprep.subr.bf16.mxu0 %v5705
          %5894 = vmatpush2.bf16.msra.mxu0 %v5704
          %5895 = vmatprep.subr.bf16.mxu0 %v5701
          %5896 = vmatpush2.bf16.msra.mxu0 %v5700
          %5897 = vmatprep.subr.bf16.mxu0 %v5697
          %5898 = vmatpush2.bf16.msra.mxu0 %v5696
          %5899 = vmatprep.subr.bf16.mxu0 %v5693
          %5900 = vmatpush2.bf16.msra.mxu0 %v5692
          %5901 = vmatprep.subr.bf16.mxu0 %v5689
          %5902 = vmatpush2.bf16.msra.mxu0 %v5688
          %5903 = vmatprep.subr.bf16.mxu0 %v5685
          %5904 = vmatpush2.bf16.msra.mxu0 %v5684
          %5905 = vmatprep.subr.bf16.mxu0 %v5681
          %5906 = vmatpush2.bf16.msra.mxu0 %v5680
          %5907 = vmatprep.subr.bf16.mxu0 %v5677
          %5908 = vmatpush2.bf16.msra.mxu0 %v5676
          %5909 = vmatprep.mubr.bf16.mxu0 %v4131
          %5910 = vmatmul.mubr.bf16.gmra.mxu0 %v4130
          %v5911 = vpop.f32.mrf.mxu0
          %v5912 = vadd.f32 %v5871, %v5911
          %v5913 = vpop.f32.mrf.mxu0
          %v5914 = vadd.f32 %v5873, %v5913
          %v5915 = vpop.f32.mrf.mxu0
          %v5916 = vpop.f32.mrf.mxu0
          %5917 = vdwg.mxu0
          %5918 = vmatprep.subr.bf16.mxu0 %v5611
          %5919 = vmatpush1.bf16.msra.mxu0 %v5610
          %5920 = vmatprep.subr.bf16.mxu0 %v5607
          %5921 = vmatpush1.bf16.msra.mxu0 %v5606
          %5922 = vmatprep.subr.bf16.mxu0 %v5603
          %5923 = vmatpush1.bf16.msra.mxu0 %v5602
          %5924 = vmatprep.subr.bf16.mxu0 %v5599
          %5925 = vmatpush1.bf16.msra.mxu0 %v5598
          %5926 = vmatprep.subr.bf16.mxu0 %v5595
          %5927 = vmatpush1.bf16.msra.mxu0 %v5594
          %5928 = vmatprep.subr.bf16.mxu0 %v5591
          %5929 = vmatpush1.bf16.msra.mxu0 %v5590
          %5930 = vmatprep.subr.bf16.mxu0 %v5587
          %5931 = vmatpush1.bf16.msra.mxu0 %v5586
          %5932 = vmatprep.subr.bf16.mxu0 %v5583
          %5933 = vmatpush1.bf16.msra.mxu0 %v5582
          %5934 = vmatprep.subr.bf16.mxu0 %v5643
          %5935 = vmatpush2.bf16.msra.mxu0 %v5642
          %5936 = vmatprep.subr.bf16.mxu0 %v5639
          %5937 = vmatpush2.bf16.msra.mxu0 %v5638
          %5938 = vmatprep.subr.bf16.mxu0 %v5635
          %5939 = vmatpush2.bf16.msra.mxu0 %v5634
          %5940 = vmatprep.subr.bf16.mxu0 %v5631
          %5941 = vmatpush2.bf16.msra.mxu0 %v5630
          %5942 = vmatprep.subr.bf16.mxu0 %v5627
          %5943 = vmatpush2.bf16.msra.mxu0 %v5626
          %5944 = vmatprep.subr.bf16.mxu0 %v5623
          %5945 = vmatpush2.bf16.msra.mxu0 %v5622
          %5946 = vmatprep.subr.bf16.mxu0 %v5619
          %5947 = vmatpush2.bf16.msra.mxu0 %v5618
          %5948 = vmatprep.subr.bf16.mxu0 %v5615
          %5949 = vmatpush2.bf16.msra.mxu0 %v5614
          %5950 = vmatprep.mubr.bf16.mxu0 %v4129
          %5951 = vmatmul.mubr.bf16.gmra.mxu0 %v4128
          %v5952 = vpop.f32.mrf.mxu0
          %v5953 = vadd.f32 %v5190, %v5952
          %v5954 = vpop.f32.mrf.mxu0
          %v5955 = vadd.f32 %v5192, %v5954
          %v5956 = vpop.f32.mrf.mxu0
          %v5957 = vpop.f32.mrf.mxu0
          %5958 = vdwg.mxu0
          %5959 = vmatprep.subr.bf16.mxu0 %v5675
          %5960 = vmatpush1.bf16.msra.mxu0 %v5674
          %5961 = vmatprep.subr.bf16.mxu0 %v5671
          %5962 = vmatpush1.bf16.msra.mxu0 %v5670
          %5963 = vmatprep.subr.bf16.mxu0 %v5667
          %5964 = vmatpush1.bf16.msra.mxu0 %v5666
          %5965 = vmatprep.subr.bf16.mxu0 %v5663
          %5966 = vmatpush1.bf16.msra.mxu0 %v5662
          %5967 = vmatprep.subr.bf16.mxu0 %v5659
          %5968 = vmatpush1.bf16.msra.mxu0 %v5658
          %5969 = vmatprep.subr.bf16.mxu0 %v5655
          %5970 = vmatpush1.bf16.msra.mxu0 %v5654
          %5971 = vmatprep.subr.bf16.mxu0 %v5651
          %5972 = vmatpush1.bf16.msra.mxu0 %v5650
          %5973 = vmatprep.subr.bf16.mxu0 %v5647
          %5974 = vmatpush1.bf16.msra.mxu0 %v5646
          %5975 = vmatprep.subr.bf16.mxu0 %v5707
          %5976 = vmatpush2.bf16.msra.mxu0 %v5706
          %5977 = vmatprep.subr.bf16.mxu0 %v5703
          %5978 = vmatpush2.bf16.msra.mxu0 %v5702
          %5979 = vmatprep.subr.bf16.mxu0 %v5699
          %5980 = vmatpush2.bf16.msra.mxu0 %v5698
          %5981 = vmatprep.subr.bf16.mxu0 %v5695
          %5982 = vmatpush2.bf16.msra.mxu0 %v5694
          %5983 = vmatprep.subr.bf16.mxu0 %v5691
          %5984 = vmatpush2.bf16.msra.mxu0 %v5690
          %5985 = vmatprep.subr.bf16.mxu0 %v5687
          %5986 = vmatpush2.bf16.msra.mxu0 %v5686
          %5987 = vmatprep.subr.bf16.mxu0 %v5683
          %5988 = vmatpush2.bf16.msra.mxu0 %v5682
          %5989 = vmatprep.subr.bf16.mxu0 %v5679
          %5990 = vmatpush2.bf16.msra.mxu0 %v5678
          %5991 = vmatprep.mubr.bf16.mxu0 %v4131
          %5992 = vmatmul.mubr.bf16.gmra.mxu0 %v4130
          %v5993 = vpop.f32.mrf.mxu0
          %v5994 = vadd.f32 %v5953, %v5993
          %v5995 = vpop.f32.mrf.mxu0
          %v5996 = vadd.f32 %v5955, %v5995
          %v5997 = vpop.f32.mrf.mxu0
          %v5998 = vpop.f32.mrf.mxu0
          %5999 = vdwg.mxu0
          %v6000 = vld [vmem:[%s16] sm:$0xf]
          %v6002 = vlaneseq
          %v6003 = vshrl.u32 %v6002, 7
          %v6004 = vsub.s32 0, %v6003
          %v6005 = vrot.slane %v6000, %v6004
          %v6006 = vlaneseq
          %v6007 = vshrl.u32 %v6006, 7
          %v6008 = vsub.s32 1, %v6007
          %v6009 = vrot.slane %v6000, %v6008
          %v6010 = vlaneseq
          %v6011 = vshrl.u32 %v6010, 7
          %v6012 = vsub.s32 2, %v6011
          %v6013 = vrot.slane %v6000, %v6012
          %v6014 = vlaneseq
          %v6015 = vshrl.u32 %v6014, 7
          %v6016 = vsub.s32 3, %v6015
          %v6017 = vrot.slane %v6000, %v6016
          %v6022 = vadd.f32 %v5912, %v6005
          %v6023 = vadd.f32 %v5914, %v6009
          %v6024 = vadd.f32 %v5994, %v6013
          %v6025 = vadd.f32 %v5996, %v6017
          %v6026 = vmax.f32 %v6022, 0.0
          %v6027 = vmax.f32 %v6023, 0.0
          %v6028 = vmax.f32 %v6024, 0.0
          %v6029 = vmax.f32 %v6025, 0.0
          %v6030 = vpack.c.bf16 %v6026, %v6026
          %v6031 = vpack.c.bf16 %v6027, %v6027
          %v6032 = vpack.c.bf16 %v6028, %v6028
          %v6033 = vpack.c.bf16 %v6029, %v6029
          %v6034 = vld [vmem:[%s17] sm:$0xf]
          %v6035 = vld [vmem:[%s17 + $0x4] sm:$0xf]
          %v6036 = vld [vmem:[%s17 + $0x8] sm:$0xf]
          %v6037 = vld [vmem:[%s17 + $0xc] sm:$0xf]
          %v6038 = vld [vmem:[%s17 + $0x10] sm:$0xf]
          %v6039 = vld [vmem:[%s17 + $0x14] sm:$0xf]
          %v6040 = vld [vmem:[%s17 + $0x18] sm:$0xf]
          %v6041 = vld [vmem:[%s17 + $0x1c] sm:$0xf]
          %v6042 = vld [vmem:[%s17 + $0x20] sm:$0xf]
          %v6043 = vld [vmem:[%s17 + $0x24] sm:$0xf]
          %v6044 = vld [vmem:[%s17 + $0x28] sm:$0xf]
          %v6045 = vld [vmem:[%s17 + $0x2c] sm:$0xf]
          %v6046 = vld [vmem:[%s17 + $0x30] sm:$0xf]
          %v6047 = vld [vmem:[%s17 + $0x34] sm:$0xf]
          %v6048 = vld [vmem:[%s17 + $0x38] sm:$0xf]
          %v6049 = vld [vmem:[%s17 + $0x3c] sm:$0xf]
          %v6050 = vld [vmem:[%s17 + $0x40] sm:$0xf]
          %v6051 = vld [vmem:[%s17 + $0x44] sm:$0xf]
          %v6052 = vld [vmem:[%s17 + $0x48] sm:$0xf]
          %v6053 = vld [vmem:[%s17 + $0x4c] sm:$0xf]
          %v6054 = vld [vmem:[%s17 + $0x50] sm:$0xf]
          %v6055 = vld [vmem:[%s17 + $0x54] sm:$0xf]
          %v6056 = vld [vmem:[%s17 + $0x58] sm:$0xf]
          %v6057 = vld [vmem:[%s17 + $0x5c] sm:$0xf]
          %v6058 = vld [vmem:[%s17 + $0x60] sm:$0xf]
          %v6059 = vld [vmem:[%s17 + $0x64] sm:$0xf]
          %v6060 = vld [vmem:[%s17 + $0x68] sm:$0xf]
          %v6061 = vld [vmem:[%s17 + $0x6c] sm:$0xf]
          %v6062 = vld [vmem:[%s17 + $0x70] sm:$0xf]
          %v6063 = vld [vmem:[%s17 + $0x74] sm:$0xf]
          %v6064 = vld [vmem:[%s17 + $0x78] sm:$0xf]
          %v6065 = vld [vmem:[%s17 + $0x7c] sm:$0xf]
          %v6066 = vld [vmem:[%s17 + $0x80] sm:$0xf]
          %v6067 = vld [vmem:[%s17 + $0x84] sm:$0xf]
          %v6068 = vld [vmem:[%s17 + $0x88] sm:$0xf]
          %v6069 = vld [vmem:[%s17 + $0x8c] sm:$0xf]
          %v6070 = vld [vmem:[%s17 + $0x90] sm:$0xf]
          %v6071 = vld [vmem:[%s17 + $0x94] sm:$0xf]
          %v6072 = vld [vmem:[%s17 + $0x98] sm:$0xf]
          %v6073 = vld [vmem:[%s17 + $0x9c] sm:$0xf]
          %v6074 = vld [vmem:[%s17 + $0xa0] sm:$0xf]
          %v6075 = vld [vmem:[%s17 + $0xa4] sm:$0xf]
          %v6076 = vld [vmem:[%s17 + $0xa8] sm:$0xf]
          %v6077 = vld [vmem:[%s17 + $0xac] sm:$0xf]
          %v6078 = vld [vmem:[%s17 + $0xb0] sm:$0xf]
          %v6079 = vld [vmem:[%s17 + $0xb4] sm:$0xf]
          %v6080 = vld [vmem:[%s17 + $0xb8] sm:$0xf]
          %v6081 = vld [vmem:[%s17 + $0xbc] sm:$0xf]
          %v6082 = vld [vmem:[%s17 + $0xc0] sm:$0xf]
          %v6083 = vld [vmem:[%s17 + $0xc4] sm:$0xf]
          %v6084 = vld [vmem:[%s17 + $0xc8] sm:$0xf]
          %v6085 = vld [vmem:[%s17 + $0xcc] sm:$0xf]
          %v6086 = vld [vmem:[%s17 + $0xd0] sm:$0xf]
          %v6087 = vld [vmem:[%s17 + $0xd4] sm:$0xf]
          %v6088 = vld [vmem:[%s17 + $0xd8] sm:$0xf]
          %v6089 = vld [vmem:[%s17 + $0xdc] sm:$0xf]
          %v6090 = vld [vmem:[%s17 + $0xe0] sm:$0xf]
          %v6091 = vld [vmem:[%s17 + $0xe4] sm:$0xf]
          %v6092 = vld [vmem:[%s17 + $0xe8] sm:$0xf]
          %v6093 = vld [vmem:[%s17 + $0xec] sm:$0xf]
          %v6094 = vld [vmem:[%s17 + $0xf0] sm:$0xf]
          %v6095 = vld [vmem:[%s17 + $0xf4] sm:$0xf]
          %v6096 = vld [vmem:[%s17 + $0xf8] sm:$0xf]
          %v6097 = vld [vmem:[%s17 + $0xfc] sm:$0xf]
          %v6098 = vld [vmem:[%s18] sm:$0x1]
          %v6163 = vunpack.c.l.b16 %v6034
          %v6164 = vunpack.c.l.b16 %v6035
          %v6165 = vunpack.c.l.b16 %v6036
          %v6166 = vunpack.c.l.b16 %v6037
          %v6167 = vunpack.c.l.b16 %v6038
          %v6168 = vunpack.c.l.b16 %v6039
          %v6169 = vunpack.c.l.b16 %v6040
          %v6170 = vunpack.c.l.b16 %v6041
          %v6171 = vunpack.c.l.b16 %v6042
          %v6172 = vunpack.c.l.b16 %v6043
          %v6173 = vunpack.c.l.b16 %v6044
          %v6174 = vunpack.c.l.b16 %v6045
          %v6175 = vunpack.c.l.b16 %v6046
          %v6176 = vunpack.c.l.b16 %v6047
          %v6177 = vunpack.c.l.b16 %v6048
          %v6178 = vunpack.c.l.b16 %v6049
          %v6179 = vunpack.c.l.b16 %v6050
          %v6180 = vunpack.c.l.b16 %v6051
          %v6181 = vunpack.c.l.b16 %v6052
          %v6182 = vunpack.c.l.b16 %v6053
          %v6183 = vunpack.c.l.b16 %v6054
          %v6184 = vunpack.c.l.b16 %v6055
          %v6185 = vunpack.c.l.b16 %v6056
          %v6186 = vunpack.c.l.b16 %v6057
          %v6187 = vunpack.c.l.b16 %v6058
          %v6188 = vunpack.c.l.b16 %v6059
          %v6189 = vunpack.c.l.b16 %v6060
          %v6190 = vunpack.c.l.b16 %v6061
          %v6191 = vunpack.c.l.b16 %v6062
          %v6192 = vunpack.c.l.b16 %v6063
          %v6193 = vunpack.c.l.b16 %v6064
          %v6194 = vunpack.c.l.b16 %v6065
          %v6195 = vunpack.c.l.b16 %v6066
          %v6196 = vunpack.c.l.b16 %v6067
          %v6197 = vunpack.c.l.b16 %v6068
          %v6198 = vunpack.c.l.b16 %v6069
          %v6199 = vunpack.c.l.b16 %v6070
          %v6200 = vunpack.c.l.b16 %v6071
          %v6201 = vunpack.c.l.b16 %v6072
          %v6202 = vunpack.c.l.b16 %v6073
          %v6203 = vunpack.c.l.b16 %v6074
          %v6204 = vunpack.c.l.b16 %v6075
          %v6205 = vunpack.c.l.b16 %v6076
          %v6206 = vunpack.c.l.b16 %v6077
          %v6207 = vunpack.c.l.b16 %v6078
          %v6208 = vunpack.c.l.b16 %v6079
          %v6209 = vunpack.c.l.b16 %v6080
          %v6210 = vunpack.c.l.b16 %v6081
          %v6211 = vunpack.c.l.b16 %v6082
          %v6212 = vunpack.c.l.b16 %v6083
          %v6213 = vunpack.c.l.b16 %v6084
          %v6214 = vunpack.c.l.b16 %v6085
          %v6215 = vunpack.c.l.b16 %v6086
          %v6216 = vunpack.c.l.b16 %v6087
          %v6217 = vunpack.c.l.b16 %v6088
          %v6218 = vunpack.c.l.b16 %v6089
          %v6219 = vunpack.c.l.b16 %v6090
          %v6220 = vunpack.c.l.b16 %v6091
          %v6221 = vunpack.c.l.b16 %v6092
          %v6222 = vunpack.c.l.b16 %v6093
          %v6223 = vunpack.c.l.b16 %v6094
          %v6224 = vunpack.c.l.b16 %v6095
          %v6225 = vunpack.c.l.b16 %v6096
          %v6226 = vunpack.c.l.b16 %v6097
          %v6227 = vpack.c.b16 %v6164, %v6163
          %v6228 = vpack.c.b16 %v6166, %v6165
          %v6229 = vpack.c.b16 %v6168, %v6167
          %v6230 = vpack.c.b16 %v6170, %v6169
          %v6231 = vpack.c.b16 %v6172, %v6171
          %v6232 = vpack.c.b16 %v6174, %v6173
          %v6233 = vpack.c.b16 %v6176, %v6175
          %v6234 = vpack.c.b16 %v6178, %v6177
          %v6235 = vpack.c.b16 %v6180, %v6179
          %v6236 = vpack.c.b16 %v6182, %v6181
          %v6237 = vpack.c.b16 %v6184, %v6183
          %v6238 = vpack.c.b16 %v6186, %v6185
          %v6239 = vpack.c.b16 %v6188, %v6187
          %v6240 = vpack.c.b16 %v6190, %v6189
          %v6241 = vpack.c.b16 %v6192, %v6191
          %v6242 = vpack.c.b16 %v6194, %v6193
          %v6243 = vpack.c.b16 %v6196, %v6195
          %v6244 = vpack.c.b16 %v6198, %v6197
          %v6245 = vpack.c.b16 %v6200, %v6199
          %v6246 = vpack.c.b16 %v6202, %v6201
          %v6247 = vpack.c.b16 %v6204, %v6203
          %v6248 = vpack.c.b16 %v6206, %v6205
          %v6249 = vpack.c.b16 %v6208, %v6207
          %v6250 = vpack.c.b16 %v6210, %v6209
          %v6251 = vpack.c.b16 %v6212, %v6211
          %v6252 = vpack.c.b16 %v6214, %v6213
          %v6253 = vpack.c.b16 %v6216, %v6215
          %v6254 = vpack.c.b16 %v6218, %v6217
          %v6255 = vpack.c.b16 %v6220, %v6219
          %v6256 = vpack.c.b16 %v6222, %v6221
          %v6257 = vpack.c.b16 %v6224, %v6223
          %v6258 = vpack.c.b16 %v6226, %v6225
          %6291 = vmatprep.subr.bf16.mxu0 0
          %6292 = vmatpush1.bf16.msra.mxu0 %v6234
          %6293 = vmatprep.subr.bf16.mxu0 0
          %6294 = vmatpush1.bf16.msra.mxu0 %v6233
          %6295 = vmatprep.subr.bf16.mxu0 0
          %6296 = vmatpush1.bf16.msra.mxu0 %v6232
          %6297 = vmatprep.subr.bf16.mxu0 0
          %6298 = vmatpush1.bf16.msra.mxu0 %v6231
          %6299 = vmatprep.subr.bf16.mxu0 0
          %6300 = vmatpush1.bf16.msra.mxu0 %v6230
          %6301 = vmatprep.subr.bf16.mxu0 0
          %6302 = vmatpush1.bf16.msra.mxu0 %v6229
          %6303 = vmatprep.subr.bf16.mxu0 0
          %6304 = vmatpush1.bf16.msra.mxu0 %v6228
          %6305 = vmatprep.subr.bf16.mxu0 0
          %6306 = vmatpush1.bf16.msra.mxu0 %v6227
          %6307 = vmatprep.subr.bf16.mxu0 0
          %6308 = vmatpush2.bf16.msra.mxu0 %v6242
          %6309 = vmatprep.subr.bf16.mxu0 0
          %6310 = vmatpush2.bf16.msra.mxu0 %v6241
          %6311 = vmatprep.subr.bf16.mxu0 0
          %6312 = vmatpush2.bf16.msra.mxu0 %v6240
          %6313 = vmatprep.subr.bf16.mxu0 0
          %6314 = vmatpush2.bf16.msra.mxu0 %v6239
          %6315 = vmatprep.subr.bf16.mxu0 0
          %6316 = vmatpush2.bf16.msra.mxu0 %v6238
          %6317 = vmatprep.subr.bf16.mxu0 0
          %6318 = vmatpush2.bf16.msra.mxu0 %v6237
          %6319 = vmatprep.subr.bf16.mxu0 0
          %6320 = vmatpush2.bf16.msra.mxu0 %v6236
          %6321 = vmatprep.subr.bf16.mxu0 0
          %6322 = vmatpush2.bf16.msra.mxu0 %v6235
          %6323 = vmatprep.mubr.bf16.mxu0 %v6031
          %6324 = vmatmul.mubr.bf16.gmra.mxu0 %v6030
          %v6325 = vpop.f32.mrf.mxu0
          %v6326 = vadd.f32 %v6098, %v6325
          %v6327 = vpop.f32.mrf.mxu0
          %v6328 = vpop.f32.mrf.mxu0
          %v6329 = vpop.f32.mrf.mxu0
          %6330 = vdwg.mxu0
          %6331 = vmatprep.subr.bf16.mxu0 0
          %6332 = vmatpush1.bf16.msra.mxu0 %v6250
          %6333 = vmatprep.subr.bf16.mxu0 0
          %6334 = vmatpush1.bf16.msra.mxu0 %v6249
          %6335 = vmatprep.subr.bf16.mxu0 0
          %6336 = vmatpush1.bf16.msra.mxu0 %v6248
          %6337 = vmatprep.subr.bf16.mxu0 0
          %6338 = vmatpush1.bf16.msra.mxu0 %v6247
          %6339 = vmatprep.subr.bf16.mxu0 0
          %6340 = vmatpush1.bf16.msra.mxu0 %v6246
          %6341 = vmatprep.subr.bf16.mxu0 0
          %6342 = vmatpush1.bf16.msra.mxu0 %v6245
          %6343 = vmatprep.subr.bf16.mxu0 0
          %6344 = vmatpush1.bf16.msra.mxu0 %v6244
          %6345 = vmatprep.subr.bf16.mxu0 0
          %6346 = vmatpush1.bf16.msra.mxu0 %v6243
          %6347 = vmatprep.subr.bf16.mxu0 0
          %6348 = vmatpush2.bf16.msra.mxu0 %v6258
          %6349 = vmatprep.subr.bf16.mxu0 0
          %6350 = vmatpush2.bf16.msra.mxu0 %v6257
          %6351 = vmatprep.subr.bf16.mxu0 0
          %6352 = vmatpush2.bf16.msra.mxu0 %v6256
          %6353 = vmatprep.subr.bf16.mxu0 0
          %6354 = vmatpush2.bf16.msra.mxu0 %v6255
          %6355 = vmatprep.subr.bf16.mxu0 0
          %6356 = vmatpush2.bf16.msra.mxu0 %v6254
          %6357 = vmatprep.subr.bf16.mxu0 0
          %6358 = vmatpush2.bf16.msra.mxu0 %v6253
          %6359 = vmatprep.subr.bf16.mxu0 0
          %6360 = vmatpush2.bf16.msra.mxu0 %v6252
          %6361 = vmatprep.subr.bf16.mxu0 0
          %6362 = vmatpush2.bf16.msra.mxu0 %v6251
          %6363 = vmatprep.mubr.bf16.mxu0 %v6033
          %6364 = vmatmul.mubr.bf16.gmra.mxu0 %v6032
          %v6365 = vpop.f32.mrf.mxu0
          %v6366 = vadd.f32 %v6326, %v6365
          %v6367 = vpop.f32.mrf.mxu0
          %v6368 = vpop.f32.mrf.mxu0
          %v6369 = vpop.f32.mrf.mxu0
          %6370 = vdwg.mxu0
          %vm6371 = vcmask 8192
          %6372 = vst.msk [vmem:[#allocation18] sm:$0x1] %vm6371, %v6366
        $region128: #{ppmil_forward.1} parent=95 // pred_fallthru
          _
        // Predicated region
        $region129: #{ppmil_forward.1} parent=95 // pred_check
          %p6373 = pneg %p459
        $region130: #{ppmil_forward.1} parent=95 // pred_check_branch
          %6375 = sbr.rel (%p6373) target = $region132
        $region131: #{ppmil_forward.1} parent=95 // pred_region
          %s6377 = ssub.s32 16, 16
          %6378 = vsyncadd [#allocation9], %s6377
          %s6380 = sshll.u32 [#allocation18], 4
          %s6381 = int_to_ptr.vmem [resolvable:$true] %s6380
          %6383 = dma.vmem_to_hbm [thread:$0]  %s6381, 16, %s19, [#allocation9]
        $region132: #{ppmil_forward.1} parent=95 // pred_fallthru
          _
        // Predicated region
        $region133: #{ppmil_forward.1} parent=95 // pred_check
          %p6384 = pneg %p480
        $region134: #{ppmil_forward.1} parent=95 // pred_check_branch
          %6386 = sbr.rel (%p6384) target = $region136
        $region135: #{ppmil_forward.1} parent=95 // pred_region
          %s6388 = ssub.s32 128, 128
          %6389 = vsyncadd [#allocation20], %s6388
          %s6391 = sshll.u32 [#allocation19], 4
          %s6392 = int_to_ptr.vmem [resolvable:$true] %s6391
          %6394 = dma.vmem_to_hbm [thread:$0]  %s6392, 128, %s20, [#allocation20]
        $region136: #{ppmil_forward.1} parent=95 // pred_fallthru
          _
        // Predicated region
        $region137: #{ppmil_forward.1} parent=95 // pred_check
          %p6395 = pneg %p459
        $region138: #{ppmil_forward.1} parent=95 // pred_check_branch
          %6397 = sbr.rel (%p6395) target = $region140
        $region139: #{ppmil_forward.1} parent=95 // pred_region
          %6398 = dma.done [#allocation9], 16
        $region140: #{ppmil_forward.1} parent=95 // pred_fallthru
          _
        // Predicated region
        $region141: #{ppmil_forward.1} parent=95 // pred_check
          %p6399 = pneg %p480
        $region142: #{ppmil_forward.1} parent=95 // pred_check_branch
          %6401 = sbr.rel (%p6399) target = $region144
        $region143: #{ppmil_forward.1} parent=95 // pred_region
          %6402 = dma.done [#allocation20], 128
        $region144: #{ppmil_forward.1} parent=95 // pred_fallthru
          _
      $region96: #{ppmil_forward.1} parent=5 // pred_fallthru
        _
      %p6403 = scmp.le.s32.totalorder 2, %s37
      // Predicated region
      $region145: #{ppmil_forward.1} parent=5 // pred_check
        %p6404 = pneg %p6403
      $region146: #{ppmil_forward.1} parent=5 // pred_check_branch
        %6406 = sbr.rel (%p6404) target = $region148
      $region147: #{ppmil_forward.1} parent=5 // pred_region
        %s6407 = ssub.s32 %s37, 2
      $region148: #{ppmil_forward.1} parent=5 // pred_fallthru
        _
    $region6: #{ppmil_forward.1} parent=1 // loop_footer
      %s41 = sadd.s32 1, %s37
    $region7: #{ppmil_forward.1} parent=1 // loop_footer_branch
      %36 = sbr.rel target = $region3
    $region8: #{ppmil_forward.1} parent=1 // loop_exit
      _
    %6408 = vsyncpa [#allocation8], 1
    %s6409 = scalar_lea.sflag [#allocation8], 1
    %6410 = vsyncpa %s6409, 1
    %6411 = vsyncpa [#allocation11], 1
    %6412 = vsyncpa [#allocation14], 1
    %6413 = vsyncpa [#allocation17], 1
    %6414 = vsyncpa [#allocation9], 1
    %s6415 = scalar_lea.sflag [#allocation9], 1
    %6416 = vsyncpa %s6415, 1
    %6417 = vsyncpa [#allocation20], 1

</llo_original>
